<compile_context>
chip_gen: v6e
topology: v6e:2x2x1
jax: 0.10.0
libtpu: 0.0.40
codegen_flags: <defaults>
</compile_context>

<pallas_src>
import math

import jax
import jax.numpy as jnp
from jax.experimental import pallas as pl
from jax.experimental.pallas import tpu as pltpu

# ---------------- model dimensions (small, consistent with the module) -------
NUM_GRAPHS   = 2
NODES_PER_G  = 4
NUM_NODES    = NUM_GRAPHS * NODES_PER_G   # BERT "batch" = number of graph nodes
SEQ_LEN      = 8
HIDDEN       = 32                         # config.hidden_size -> conv_hidden_1
INTERMEDIATE = 64
NUM_HEADS    = 2
HEAD_DIM     = HIDDEN // NUM_HEADS
NUM_LAYERS   = 2
VOCAB        = 50
TYPE_VOCAB   = 2
CONV_H2      = 128                        # conv_hidden_2
CONV_OUT     = 64                         # conv_hidden_out
NUM_CLASSES  = 2
LN_EPS       = 1e-12
BN_EPS       = 1e-5


# ---------------- in-kernel math helpers -------------------------------------
def _gelu(x):
    c = math.sqrt(2.0 / math.pi)
    return 0.5 * x * (1.0 + jnp.tanh(c * (x + 0.044715 * x * x * x)))


def _layernorm(x, g, b, eps=LN_EPS):
    mu = jnp.mean(x, axis=-1, keepdims=True)
    var = jnp.mean((x - mu) ** 2, axis=-1, keepdims=True)
    return (x - mu) * jax.lax.rsqrt(var + eps) * g + b


# ---------------- the single fused Pallas kernel ------------------------------
def bert_bilayer_gcn_kernel(
        emb_ref, bias_ref,                      # (64,32) f32, (64,64) f32
        eln_g_ref, eln_b_ref,                   # (1,32) x2
        wqkv_ref, bqkv_ref,                     # (2,32,96) bf16, (2,1,96) f32
        wo_ref, bo_ref,                         # (2,32,32) bf16, (2,1,32) f32
        ln1_g_ref, ln1_b_ref,                   # (2,1,32) x2
        wi_ref, bi_ref,                         # (2,32,64) bf16, (2,1,64) f32
        wo2_ref, bo2_ref,                       # (2,64,32) bf16, (2,1,32) f32
        ln2_g_ref, ln2_b_ref,                   # (2,1,32) x2
        cls_sel_ref,                            # (8,64) f32 one-hot cls selector
        pool_w_ref, pool_b_ref,                 # (32,32) bf16, (1,32) f32
        adj_ref,                                # (8,8) f32 normalized A+I
        g1w_ref, bn1s_ref, bn1t_ref,            # (32,128) bf16, (1,128) x2 f32
        g2w_ref, bn2s_ref, bn2t_ref,            # (128,64) bf16, (1,64)  x2 f32
        gsrc_ref, gdst_ref,                     # (E,8) f32 one-hot edge gathers
        lin_w_ref, lin_b_ref,                   # (128,2) bf16, (1,2) f32
        y1h_ref,                                # (E,2) f32 one-hot labels
        loss_ref, preds_ref):                   # (1,1) f32, (E,1) i32
    f32 = jnp.float32
    bf16 = jnp.bfloat16
    inv_sqrt_d = 1.0 / math.sqrt(HEAD_DIM)

    # ---- BERT embeddings LayerNorm ------------------------------------------
    x = _layernorm(emb_ref[...], eln_g_ref[...], eln_b_ref[...])   # (64,32) f32
    attn_bias = bias_ref[...]                                      # (64,64) f32

    # ---- 2 BERT encoder layers, batched over all 64 token rows --------------
    for l in range(NUM_LAYERS):
        xb = x.astype(bf16)
        qkv = jnp.dot(xb, wqkv_ref[l],
                      preferred_element_type=f32) + bqkv_ref[l]    # (64,96)
        q = qkv[:, 0:HIDDEN] * inv_sqrt_d
        k = qkv[:, HIDDEN:2 * HIDDEN]
        v = qkv[:, 2 * HIDDEN:3 * HIDDEN]

        ctx_heads = []
        for h in range(NUM_HEADS):
            sl = slice(h * HEAD_DIM, (h + 1) * HEAD_DIM)
            qh = q[:, sl].astype(bf16)
            kh = k[:, sl].astype(bf16)
            vh = v[:, sl].astype(bf16)
            s = jnp.einsum('qd,kd->qk', qh, kh,
                           preferred_element_type=f32) + attn_bias  # (64,64)
            m = jnp.max(s, axis=-1, keepdims=True)
            e = jnp.exp(s - m)
            p = e * pl.reciprocal(jnp.sum(e, axis=-1, keepdims=True), approx=True)
            ctx_heads.append(jnp.dot(p.astype(bf16), vh,
                                     preferred_element_type=f32))   # (64,16)
        ctx = jnp.concatenate(ctx_heads, axis=-1)                    # (64,32)

        attn_out = jnp.dot(ctx.astype(bf16), wo_ref[l],
                           preferred_element_type=f32) + bo_ref[l]
        x1 = _layernorm(attn_out + x, ln1_g_ref[l], ln1_b_ref[l])

        hdn = _gelu(jnp.dot(x1.astype(bf16), wi_ref[l],
                            preferred_element_type=f32) + bi_ref[l])
        ffn = jnp.dot(hdn.astype(bf16), wo2_ref[l],
                      preferred_element_type=f32) + bo2_ref[l]
        x = _layernorm(ffn + x1, ln2_g_ref[l], ln2_b_ref[l])

    # ---- pooler: cls_tokens = tanh(Linear(x[:, 0, :])) -----------------------
    cls = jnp.dot(cls_sel_ref[...], x, preferred_element_type=f32)   # (8,32)
    pooled = jnp.tanh(jnp.dot(cls.astype(bf16), pool_w_ref[...],
                              preferred_element_type=f32) + pool_b_ref[...])

    # ---- GCNConv + BatchNorm(eval, folded) + GELU, twice ---------------------
    adj = adj_ref[...]                                               # (8,8) f32
    xw1 = jnp.dot(pooled.astype(bf16), g1w_ref[...],
                  preferred_element_type=f32)                        # (8,128)
    h1 = _gelu(jnp.dot(adj, xw1, preferred_element_type=f32)
               * bn1s_ref[...] + bn1t_ref[...])
    xw2 = jnp.dot(h1.astype(bf16), g2w_ref[...],
                  preferred_element_type=f32)                        # (8,64)
    h2 = _gelu(jnp.dot(adj, xw2, preferred_element_type=f32)
               * bn2s_ref[...] + bn2t_ref[...])

    # ---- edge representation via one-hot gather matmuls ----------------------
    r_src = jnp.dot(gsrc_ref[...], h2, preferred_element_type=f32)   # (E,64)
    r_dst = jnp.dot(gdst_ref[...], h2, preferred_element_type=f32)   # (E,64)
    edge_repr = jnp.concatenate([r_src, r_dst], axis=-1)             # (E,128)

    # ---- classifier: linear1 + argmax + mean CrossEntropyLoss ----------------
    logits = jnp.dot(edge_repr.astype(bf16), lin_w_ref[...],
                     preferred_element_type=f32) + lin_b_ref[...]    # (E,2)
    E, C = logits.shape
    col = jax.lax.broadcasted_iota(jnp.int32, (E, C), 1)

    maxv = jnp.max(logits, axis=-1, keepdims=True)
    idx = jnp.where(logits >= maxv, col, C)
    preds_ref[...] = jnp.min(idx, axis=-1, keepdims=True)            # first argmax

    shifted = logits - maxv
    lse = jnp.log(jnp.sum(jnp.exp(shifted), axis=-1, keepdims=True)) + maxv
    picked = jnp.sum(logits * y1h_ref[...], axis=-1, keepdims=True)
    loss_ref[...] = jnp.reshape(jnp.sum(lse - picked) * (1.0 / float(E)), (1, 1))


# ---------------- plain-JAX glue -----------------------------------------------
def gcn_norm_adj(edge_index, num_nodes):
    """Dense symmetric-normalized adjacency (A + I), PyG GCNConv convention."""
    row, col = edge_index[0], edge_index[1]          # source, target
    sl = jnp.arange(num_nodes, dtype=edge_index.dtype)
    row = jnp.concatenate([row, sl])
    col = jnp.concatenate([col, sl])
    deg = jnp.zeros((num_nodes,), jnp.float32).at[col].add(1.0)
    dis = jnp.where(deg > 0, jax.lax.rsqrt(deg), 0.0)
    norm = dis[row] * dis[col]
    # out[target] = sum_src norm * xW[src]  ->  A[target, source]
    return jnp.zeros((num_nodes, num_nodes), jnp.float32).at[col, row].add(norm)


def init_params(key):
    """PyTorch-module-like parameters (f32, unpacked)."""
    def nrm(k, shape):
        return 0.02 * jax.random.normal(k, shape, jnp.float32)

    keys = iter(jax.random.split(key, 64))
    ones = lambda s: jnp.ones(s, jnp.float32)
    zeros = lambda s: jnp.zeros(s, jnp.float32)

    p = {
        "word_emb": nrm(next(keys), (VOCAB, HIDDEN)),
        "pos_emb":  nrm(next(keys), (SEQ_LEN, HIDDEN)),
        "type_emb": nrm(next(keys), (TYPE_VOCAB, HIDDEN)),
        "emb_ln_g": ones((1, HIDDEN)), "emb_ln_b": zeros((1, HIDDEN)),
    }
    layers = []
    for _ in range(NUM_LAYERS):
        layers.append(dict(
            wq=nrm(next(keys), (HIDDEN, HIDDEN)), bq=zeros((1, HIDDEN)),
            wk=nrm(next(keys), (HIDDEN, HIDDEN)), bk=zeros((1, HIDDEN)),
            wv=nrm(next(keys), (HIDDEN, HIDDEN)), bv=zeros((1, HIDDEN)),
            wo=nrm(next(keys), (HIDDEN, HIDDEN)), bo=zeros((1, HIDDEN)),
            ln1_g=ones((1, HIDDEN)), ln1_b=zeros((1, HIDDEN)),
            wi=nrm(next(keys), (HIDDEN, INTERMEDIATE)), bi=zeros((1, INTERMEDIATE)),
            wo2=nrm(next(keys), (INTERMEDIATE, HIDDEN)), bo2=zeros((1, HIDDEN)),
            ln2_g=ones((1, HIDDEN)), ln2_b=zeros((1, HIDDEN)),
        ))
    p["layers"] = layers
    p["pool_w"] = nrm(next(keys), (HIDDEN, HIDDEN)); p["pool_b"] = zeros((1, HIDDEN))

    p["gcn1_w"] = nrm(next(keys), (HIDDEN, CONV_H2)); p["gcn1_b"] = zeros((1, CONV_H2))
    p["bn1_g"] = ones((1, CONV_H2)); p["bn1_b"] = zeros((1, CONV_H2))
    p["bn1_m"] = zeros((1, CONV_H2)); p["bn1_v"] = ones((1, CONV_H2))

    p["gcn2_w"] = nrm(next(keys), (CONV_H2, CONV_OUT)); p["gcn2_b"] = zeros((1, CONV_OUT))
    p["bn2_g"] = ones((1, CONV_OUT)); p["bn2_b"] = zeros((1, CONV_OUT))
    p["bn2_m"] = zeros((1, CONV_OUT)); p["bn2_v"] = ones((1, CONV_OUT))

    p["lin_w"] = nrm(next(keys), (2 * CONV_OUT, NUM_CLASSES))
    p["lin_b"] = zeros((1, NUM_CLASSES))
    return p


def pack_params(p):
    """Kernel layout: fused QKV, layer-stacked weights, bf16 MXU operands,
    BatchNorm(eval) + GCN bias folded into scale/shift. f32 everywhere else."""
    bf16 = jnp.bfloat16
    stack = lambda name: jnp.stack([lp[name] for lp in p["layers"]], axis=0)

    pp = {
        "word_emb": p["word_emb"], "pos_emb": p["pos_emb"], "type_emb": p["type_emb"],
        "emb_ln_g": p["emb_ln_g"], "emb_ln_b": p["emb_ln_b"],
        "wqkv": jnp.stack([jnp.concatenate([lp["wq"], lp["wk"], lp["wv"]], axis=1)
                           for lp in p["layers"]], axis=0).astype(bf16),     # (2,32,96)
        "bqkv": jnp.stack([jnp.concatenate([lp["bq"], lp["bk"], lp["bv"]], axis=1)
                           for lp in p["layers"]], axis=0),                  # (2,1,96)
        "wo": stack("wo").astype(bf16),   "bo": stack("bo"),
        "ln1_g": stack("ln1_g"),          "ln1_b": stack("ln1_b"),
        "wi": stack("wi").astype(bf16),   "bi": stack("bi"),
        "wo2": stack("wo2").astype(bf16), "bo2": stack("bo2"),
        "ln2_g": stack("ln2_g"),          "ln2_b": stack("ln2_b"),
        "pool_w": p["pool_w"].astype(bf16), "pool_b": p["pool_b"],
        "gcn1_w": p["gcn1_w"].astype(bf16),
        "gcn2_w": p["gcn2_w"].astype(bf16),
        "lin_w": p["lin_w"].astype(bf16),   "lin_b": p["lin_b"],
    }
    s1 = p["bn1_g"] * jax.lax.rsqrt(p["bn1_v"] + BN_EPS)
    pp["bn1_scale"] = s1
    pp["bn1_shift"] = (p["gcn1_b"] - p["bn1_m"]) * s1 + p["bn1_b"]
    s2 = p["bn2_g"] * jax.lax.rsqrt(p["bn2_v"] + BN_EPS)
    pp["bn2_scale"] = s2
    pp["bn2_shift"] = (p["gcn2_b"] - p["bn2_m"]) * s2 + p["bn2_b"]
    return pp


@jax.jit
def forward(pp, node_token_ids, input_masks, segment_ids,
            edge_index, edge_src, edge_dst, ylabels):
    N, S, H = NUM_NODES, SEQ_LEN, HIDDEN

    # --- BERT embedding sum (table gathers = XLA glue) ---
    emb = (jnp.take(pp["word_emb"], node_token_ids, axis=0)
           + pp["pos_emb"][None, :, :]
           + jnp.take(pp["type_emb"], segment_ids, axis=0)).reshape(N * S, H)

    # --- 64x64 additive attention bias: BERT padding mask within a node,
    #     -1e9 across nodes (block-diagonal attention over the token slab) ---
    node_of = jnp.arange(N * S, dtype=jnp.int32) // S
    same = node_of[:, None] == node_of[None, :]
    key_bias = (1.0 - input_masks.astype(jnp.float32).reshape(-1)) * -10000.0
    attn_bias = jnp.where(same, key_bias[None, :], -1e9).astype(jnp.float32)

    # --- selection / gather one-hots and normalized adjacency (glue) ---
    cls_sel = jnp.zeros((N, N * S), jnp.float32).at[
        jnp.arange(N), jnp.arange(N) * S].set(1.0)
    adj = gcn_norm_adj(edge_index, N)
    E = edge_src.shape[0]
    gsrc = jnp.zeros((E, N), jnp.float32).at[jnp.arange(E), edge_src].set(1.0)
    gdst = jnp.zeros((E, N), jnp.float32).at[jnp.arange(E), edge_dst].set(1.0)
    y1h = jax.nn.one_hot(ylabels, NUM_CLASSES, dtype=jnp.float32)

    inputs = (emb, attn_bias,
              pp["emb_ln_g"], pp["emb_ln_b"],
              pp["wqkv"], pp["bqkv"], pp["wo"], pp["bo"], pp["ln1_g"], pp["ln1_b"],
              pp["wi"], pp["bi"], pp["wo2"], pp["bo2"], pp["ln2_g"], pp["ln2_b"],
              cls_sel, pp["pool_w"], pp["pool_b"],
              adj, pp["gcn1_w"], pp["bn1_scale"], pp["bn1_shift"],
              pp["gcn2_w"], pp["bn2_scale"], pp["bn2_shift"],
              gsrc, gdst, pp["lin_w"], pp["lin_b"], y1h)

    loss, preds = pl.pallas_call(
        bert_bilayer_gcn_kernel,
        out_shape=(jax.ShapeDtypeStruct((1, 1), jnp.float32),
                   jax.ShapeDtypeStruct((E, 1), jnp.int32)),
        in_specs=[pl.BlockSpec(memory_space=pltpu.MemorySpace.VMEM)] * len(inputs),
        out_specs=(pl.BlockSpec(memory_space=pltpu.MemorySpace.VMEM),
                   pl.BlockSpec(memory_space=pltpu.MemorySpace.VMEM)),
    )(*inputs)

    return loss[0, 0], preds[:, 0], ylabels


# ---------------- main -----------------------------------------------------------
if __name__ == "__main__":
    key = jax.random.PRNGKey(0)
    pkey, tkey, lkey = jax.random.split(key, 3)
    params = pack_params(init_params(pkey))

    node_token_ids = jax.random.randint(tkey, (NUM_NODES, SEQ_LEN), 0, VOCAB, dtype=jnp.int32)
    input_masks = jnp.array([[1 if t < 5 + (i % 3) else 0 for t in range(SEQ_LEN)]
                             for i in range(NUM_NODES)], dtype=jnp.int32)
    segment_ids = jnp.array([[0 if t < SEQ_LEN // 2 else 1 for t in range(SEQ_LEN)]
                             for _ in range(NUM_NODES)], dtype=jnp.int32)

    # message-passing edge_index: bidirectional ring inside each graph
    ei_src, ei_dst = [], []
    for g in range(NUM_GRAPHS):
        off = g * NODES_PER_G
        for (a, b) in [(0, 1), (1, 2), (2, 3), (3, 0)]:
            ei_src += [off + a, off + b]
            ei_dst += [off + b, off + a]
    edge_index = jnp.array([ei_src, ei_dst], dtype=jnp.int32)

    # candidate edges ("all_edges") per graph: all unordered node pairs
    all_edges = [[(a, b) for a in range(NODES_PER_G) for b in range(a + 1, NODES_PER_G)]
                 for _ in range(NUM_GRAPHS)]
    edge_src, edge_dst = [], []
    last_node = 0
    for g_edges in all_edges:
        max_node_id = 0
        for (a, b) in g_edges:
            edge_src.append(a + last_node)
            edge_dst.append(b + last_node)
            max_node_id = max(max_node_id, a + last_node, b + last_node)
        last_node = max_node_id + 1
    assert last_node == NUM_NODES
    edge_src = jnp.array(edge_src, dtype=jnp.int32)
    edge_dst = jnp.array(edge_dst, dtype=jnp.int32)
    num_cand_edges = int(edge_src.shape[0])
    ylabels = jax.random.randint(lkey, (num_cand_edges,), 0, NUM_CLASSES, dtype=jnp.int32)

    loss, preds, labels = forward(params, node_token_ids, input_masks, segment_ids,
                                  edge_index, edge_src, edge_dst, ylabels)
    jax.block_until_ready((loss, preds, labels))
    print("KERNEL_OK")
</pallas_src>

<mosaic_0001>
module attributes {stable_mosaic.version = 11 : i64} {
  func.func private @main(%arg0: i32) attributes {dimension_semantics = [#tpu.dimension_semantics<core_parallel>], iteration_bounds = array<i64: 2>, tpu.core_type = #tpu.core_type<sc_scalar_subcore>, window_params = []} {
    return
  }
}

module attributes {stable_mosaic.version = 11 : i64} {
  func.func private @main(%arg0: i32) attributes {dimension_semantics = [#tpu.dimension_semantics<core_parallel>], iteration_bounds = array<i64: 2>, tpu.core_type = #tpu.core_type<sc_scalar_subcore>, window_params = []} {
    return
  }
}

module attributes {stable_mosaic.version = 11 : i64} {
  func.func @bert_bilayer_gcn_kernel(%arg0: memref<64x32xf32, #tpu.memory_space<vmem>>, %arg1: memref<64x64xf32, #tpu.memory_space<vmem>>, %arg2: memref<1x32xf32, #tpu.memory_space<vmem>>, %arg3: memref<1x32xf32, #tpu.memory_space<vmem>>, %arg4: memref<2x32x96xbf16, #tpu.memory_space<vmem>>, %arg5: memref<2x1x96xf32, #tpu.memory_space<vmem>>, %arg6: memref<2x32x32xbf16, #tpu.memory_space<vmem>>, %arg7: memref<2x1x32xf32, #tpu.memory_space<vmem>>, %arg8: memref<2x1x32xf32, #tpu.memory_space<vmem>>, %arg9: memref<2x1x32xf32, #tpu.memory_space<vmem>>, %arg10: memref<2x32x64xbf16, #tpu.memory_space<vmem>>, %arg11: memref<2x1x64xf32, #tpu.memory_space<vmem>>, %arg12: memref<2x64x32xbf16, #tpu.memory_space<vmem>>, %arg13: memref<2x1x32xf32, #tpu.memory_space<vmem>>, %arg14: memref<2x1x32xf32, #tpu.memory_space<vmem>>, %arg15: memref<2x1x32xf32, #tpu.memory_space<vmem>>, %arg16: memref<8x64xf32, #tpu.memory_space<vmem>>, %arg17: memref<32x32xbf16, #tpu.memory_space<vmem>>, %arg18: memref<1x32xf32, #tpu.memory_space<vmem>>, %arg19: memref<8x8xf32, #tpu.memory_space<vmem>>, %arg20: memref<32x128xbf16, #tpu.memory_space<vmem>>, %arg21: memref<1x128xf32, #tpu.memory_space<vmem>>, %arg22: memref<1x128xf32, #tpu.memory_space<vmem>>, %arg23: memref<128x64xbf16, #tpu.memory_space<vmem>>, %arg24: memref<1x64xf32, #tpu.memory_space<vmem>>, %arg25: memref<1x64xf32, #tpu.memory_space<vmem>>, %arg26: memref<12x8xf32, #tpu.memory_space<vmem>>, %arg27: memref<12x8xf32, #tpu.memory_space<vmem>>, %arg28: memref<128x2xbf16, #tpu.memory_space<vmem>>, %arg29: memref<1x2xf32, #tpu.memory_space<vmem>>, %arg30: memref<12x2xf32, #tpu.memory_space<vmem>>, %arg31: memref<1x1xf32, #tpu.memory_space<vmem>>, %arg32: memref<12x1xi32, #tpu.memory_space<vmem>>) attributes {dimension_semantics = [], scalar_prefetch = 0 : i64, scratch_operands = 0 : i64, tpu.core_type = #tpu.core_type<tc>} {
    %c0 = arith.constant 0 : index
    %c0_0 = arith.constant 0 : index
    %0 = vector.load %arg0[%c0, %c0_0] : memref<64x32xf32, #tpu.memory_space<vmem>>, vector<64x32xf32>
    %c0_1 = arith.constant 0 : index
    %c0_2 = arith.constant 0 : index
    %1 = vector.load %arg2[%c0_1, %c0_2] : memref<1x32xf32, #tpu.memory_space<vmem>>, vector<1x32xf32>
    %c0_3 = arith.constant 0 : index
    %c0_4 = arith.constant 0 : index
    %2 = vector.load %arg3[%c0_3, %c0_4] : memref<1x32xf32, #tpu.memory_space<vmem>>, vector<1x32xf32>
    %cst = arith.constant dense<0.000000e+00> : vector<64xf32>
    %3 = vector.multi_reduction <add>, %0, %cst [1] : vector<64x32xf32> to vector<64xf32>
    %4 = vector.shape_cast %3 : vector<64xf32> to vector<64x1xf32>
    %cst_5 = arith.constant 3.200000e+01 : f32
    %5 = vector.broadcast %cst_5 : f32 to vector<64x1xf32>
    %6 = arith.divf %4, %5 : vector<64x1xf32>
    %7 = vector.broadcast %6 : vector<64x1xf32> to vector<64x32xf32>
    %8 = arith.subf %0, %7 : vector<64x32xf32>
    %9 = arith.mulf %8, %8 : vector<64x32xf32>
    %cst_6 = arith.constant dense<0.000000e+00> : vector<64xf32>
    %10 = vector.multi_reduction <add>, %9, %cst_6 [1] : vector<64x32xf32> to vector<64xf32>
    %11 = vector.shape_cast %10 : vector<64xf32> to vector<64x1xf32>
    %cst_7 = arith.constant 3.200000e+01 : f32
    %12 = vector.broadcast %cst_7 : f32 to vector<64x1xf32>
    %13 = arith.divf %11, %12 : vector<64x1xf32>
    %14 = vector.broadcast %6 : vector<64x1xf32> to vector<64x32xf32>
    %15 = arith.subf %0, %14 : vector<64x32xf32>
    %cst_8 = arith.constant 9.99999996E-13 : f32
    %16 = vector.broadcast %cst_8 : f32 to vector<64x1xf32>
    %17 = arith.addf %13, %16 : vector<64x1xf32>
    %18 = math.rsqrt %17 : vector<64x1xf32>
    %19 = vector.broadcast %18 : vector<64x1xf32> to vector<64x32xf32>
    %20 = arith.mulf %15, %19 : vector<64x32xf32>
    %21 = vector.broadcast %1 : vector<1x32xf32> to vector<64x32xf32>
    %22 = arith.mulf %20, %21 : vector<64x32xf32>
    %23 = vector.broadcast %2 : vector<1x32xf32> to vector<64x32xf32>
    %24 = arith.addf %22, %23 : vector<64x32xf32>
    %c0_9 = arith.constant 0 : index
    %c0_10 = arith.constant 0 : index
    %25 = vector.load %arg1[%c0_9, %c0_10] : memref<64x64xf32, #tpu.memory_space<vmem>>, vector<64x64xf32>
    %26 = arith.truncf %24 : vector<64x32xf32> to vector<64x32xbf16>
    %c0_11 = arith.constant 0 : index
    %c0_12 = arith.constant 0 : index
    %c0_13 = arith.constant 0 : index
    %27 = vector.load %arg4[%c0_11, %c0_12, %c0_13] : memref<2x32x96xbf16, #tpu.memory_space<vmem>>, vector<1x32x96xbf16>
    %28 = vector.shape_cast %27 : vector<1x32x96xbf16> to vector<32x96xbf16>
    %cst_14 = arith.constant dense<0.000000e+00> : vector<64x96xf32>
    %29 = tpu.matmul %26, %28, %cst_14 {dimension_numbers = #tpu.dot_dimension_numbers<[1], [0], [0], [1], [0, 0, 1, 1], [], []>} : vector<64x32xbf16>, vector<32x96xbf16>, vector<64x96xf32> -> vector<64x96xf32>
    %c0_15 = arith.constant 0 : index
    %c0_16 = arith.constant 0 : index
    %c0_17 = arith.constant 0 : index
    %30 = vector.load %arg5[%c0_15, %c0_16, %c0_17] : memref<2x1x96xf32, #tpu.memory_space<vmem>>, vector<1x1x96xf32>
    %31 = vector.shape_cast %30 : vector<1x1x96xf32> to vector<1x96xf32>
    %32 = vector.broadcast %31 : vector<1x96xf32> to vector<64x96xf32>
    %33 = arith.addf %29, %32 : vector<64x96xf32>
    %34 = vector.extract_strided_slice %33 {offsets = [0, 0], sizes = [64, 32], strides = [1, 1]} : vector<64x96xf32> to vector<64x32xf32>
    %cst_18 = arith.constant 2.500000e-01 : f32
    %35 = vector.broadcast %cst_18 : f32 to vector<64x32xf32>
    %36 = arith.mulf %34, %35 : vector<64x32xf32>
    %37 = vector.extract_strided_slice %33 {offsets = [0, 32], sizes = [64, 32], strides = [1, 1]} : vector<64x96xf32> to vector<64x32xf32>
    %38 = vector.extract_strided_slice %33 {offsets = [0, 64], sizes = [64, 32], strides = [1, 1]} : vector<64x96xf32> to vector<64x32xf32>
    %39 = vector.extract_strided_slice %36 {offsets = [0, 0], sizes = [64, 16], strides = [1, 1]} : vector<64x32xf32> to vector<64x16xf32>
    %40 = arith.truncf %39 : vector<64x16xf32> to vector<64x16xbf16>
    %41 = vector.extract_strided_slice %37 {offsets = [0, 0], sizes = [64, 16], strides = [1, 1]} : vector<64x32xf32> to vector<64x16xf32>
    %42 = arith.truncf %41 : vector<64x16xf32> to vector<64x16xbf16>
    %43 = vector.extract_strided_slice %38 {offsets = [0, 0], sizes = [64, 16], strides = [1, 1]} : vector<64x32xf32> to vector<64x16xf32>
    %44 = arith.truncf %43 : vector<64x16xf32> to vector<64x16xbf16>
    "tpu.trace_start"() <{level = 10 : i32, message = "qd,kd->qk"}> : () -> ()
    %cst_19 = arith.constant dense<0.000000e+00> : vector<64x64xf32>
    %45 = tpu.matmul %40, %42, %cst_19 {dimension_numbers = #tpu.dot_dimension_numbers<[1], [1], [0], [0], [0, 0, 1, 0], [], []>} : vector<64x16xbf16>, vector<64x16xbf16>, vector<64x64xf32> -> vector<64x64xf32>
    "tpu.trace_stop"() : () -> ()
    %46 = arith.addf %45, %25 : vector<64x64xf32>
    %cst_20 = arith.constant dense<0xFF800000> : vector<64xf32>
    %47 = vector.multi_reduction <maximumf>, %46, %cst_20 [1] : vector<64x64xf32> to vector<64xf32>
    %48 = vector.shape_cast %47 : vector<64xf32> to vector<64x1xf32>
    %49 = vector.broadcast %48 : vector<64x1xf32> to vector<64x64xf32>
    %50 = arith.subf %46, %49 : vector<64x64xf32>
    %51 = math.exp %50 : vector<64x64xf32>
    %cst_21 = arith.constant dense<0.000000e+00> : vector<64xf32>
    %52 = vector.multi_reduction <add>, %51, %cst_21 [1] : vector<64x64xf32> to vector<64xf32>
    %53 = vector.shape_cast %52 : vector<64xf32> to vector<64x1xf32>
    %54 = tpu.reciprocal %53 {approx = true} : vector<64x1xf32> -> vector<64x1xf32>
    %55 = vector.broadcast %54 : vector<64x1xf32> to vector<64x64xf32>
    %56 = arith.mulf %51, %55 : vector<64x64xf32>
    %57 = arith.truncf %56 : vector<64x64xf32> to vector<64x64xbf16>
    %cst_22 = arith.constant dense<0.000000e+00> : vector<64x16xf32>
    %58 = tpu.matmul %57, %44, %cst_22 {dimension_numbers = #tpu.dot_dimension_numbers<[1], [0], [0], [1], [0, 0, 1, 1], [], []>} : vector<64x64xbf16>, vector<64x16xbf16>, vector<64x16xf32> -> vector<64x16xf32>
    %59 = vector.extract_strided_slice %36 {offsets = [0, 16], sizes = [64, 16], strides = [1, 1]} : vector<64x32xf32> to vector<64x16xf32>
    %60 = arith.truncf %59 : vector<64x16xf32> to vector<64x16xbf16>
    %61 = vector.extract_strided_slice %37 {offsets = [0, 16], sizes = [64, 16], strides = [1, 1]} : vector<64x32xf32> to vector<64x16xf32>
    %62 = arith.truncf %61 : vector<64x16xf32> to vector<64x16xbf16>
    %63 = vector.extract_strided_slice %38 {offsets = [0, 16], sizes = [64, 16], strides = [1, 1]} : vector<64x32xf32> to vector<64x16xf32>
    %64 = arith.truncf %63 : vector<64x16xf32> to vector<64x16xbf16>
    "tpu.trace_start"() <{level = 10 : i32, message = "qd,kd->qk"}> : () -> ()
    %cst_23 = arith.constant dense<0.000000e+00> : vector<64x64xf32>
    %65 = tpu.matmul %60, %62, %cst_23 {dimension_numbers = #tpu.dot_dimension_numbers<[1], [1], [0], [0], [0, 0, 1, 0], [], []>} : vector<64x16xbf16>, vector<64x16xbf16>, vector<64x64xf32> -> vector<64x64xf32>
    "tpu.trace_stop"() : () -> ()
    %66 = arith.addf %65, %25 : vector<64x64xf32>
    %cst_24 = arith.constant dense<0xFF800000> : vector<64xf32>
    %67 = vector.multi_reduction <maximumf>, %66, %cst_24 [1] : vector<64x64xf32> to vector<64xf32>
    %68 = vector.shape_cast %67 : vector<64xf32> to vector<64x1xf32>
    %69 = vector.broadcast %68 : vector<64x1xf32> to vector<64x64xf32>
    %70 = arith.subf %66, %69 : vector<64x64xf32>
    %71 = math.exp %70 : vector<64x64xf32>
    %cst_25 = arith.constant dense<0.000000e+00> : vector<64xf32>
    %72 = vector.multi_reduction <add>, %71, %cst_25 [1] : vector<64x64xf32> to vector<64xf32>
    %73 = vector.shape_cast %72 : vector<64xf32> to vector<64x1xf32>
    %74 = tpu.reciprocal %73 {approx = true} : vector<64x1xf32> -> vector<64x1xf32>
    %75 = vector.broadcast %74 : vector<64x1xf32> to vector<64x64xf32>
    %76 = arith.mulf %71, %75 : vector<64x64xf32>
    %77 = arith.truncf %76 : vector<64x64xf32> to vector<64x64xbf16>
    %cst_26 = arith.constant dense<0.000000e+00> : vector<64x16xf32>
    %78 = tpu.matmul %77, %64, %cst_26 {dimension_numbers = #tpu.dot_dimension_numbers<[1], [0], [0], [1], [0, 0, 1, 1], [], []>} : vector<64x64xbf16>, vector<64x16xbf16>, vector<64x16xf32> -> vector<64x16xf32>
    %79 = tpu.concatenate %58, %78 in 1 : vector<64x16xf32>, vector<64x16xf32> -> vector<64x32xf32>
    %80 = arith.truncf %79 : vector<64x32xf32> to vector<64x32xbf16>
    %c0_27 = arith.constant 0 : index
    %c0_28 = arith.constant 0 : index
    %c0_29 = arith.constant 0 : index
    %81 = vector.load %arg6[%c0_27, %c0_28, %c0_29] : memref<2x32x32xbf16, #tpu.memory_space<vmem>>, vector<1x32x32xbf16>
    %82 = vector.shape_cast %81 : vector<1x32x32xbf16> to vector<32x32xbf16>
    %cst_30 = arith.constant dense<0.000000e+00> : vector<64x32xf32>
    %83 = tpu.matmul %80, %82, %cst_30 {dimension_numbers = #tpu.dot_dimension_numbers<[1], [0], [0], [1], [0, 0, 1, 1], [], []>} : vector<64x32xbf16>, vector<32x32xbf16>, vector<64x32xf32> -> vector<64x32xf32>
    %c0_31 = arith.constant 0 : index
    %c0_32 = arith.constant 0 : index
    %c0_33 = arith.constant 0 : index
    %84 = vector.load %arg7[%c0_31, %c0_32, %c0_33] : memref<2x1x32xf32, #tpu.memory_space<vmem>>, vector<1x1x32xf32>
    %85 = vector.shape_cast %84 : vector<1x1x32xf32> to vector<1x32xf32>
    %86 = vector.broadcast %85 : vector<1x32xf32> to vector<64x32xf32>
    %87 = arith.addf %83, %86 : vector<64x32xf32>
    %88 = arith.addf %87, %24 : vector<64x32xf32>
    %c0_34 = arith.constant 0 : index
    %c0_35 = arith.constant 0 : index
    %c0_36 = arith.constant 0 : index
    %89 = vector.load %arg8[%c0_34, %c0_35, %c0_36] : memref<2x1x32xf32, #tpu.memory_space<vmem>>, vector<1x1x32xf32>
    %90 = vector.shape_cast %89 : vector<1x1x32xf32> to vector<1x32xf32>
    %c0_37 = arith.constant 0 : index
    %c0_38 = arith.constant 0 : index
    %c0_39 = arith.constant 0 : index
    %91 = vector.load %arg9[%c0_37, %c0_38, %c0_39] : memref<2x1x32xf32, #tpu.memory_space<vmem>>, vector<1x1x32xf32>
    %92 = vector.shape_cast %91 : vector<1x1x32xf32> to vector<1x32xf32>
    %cst_40 = arith.constant dense<0.000000e+00> : vector<64xf32>
    %93 = vector.multi_reduction <add>, %88, %cst_40 [1] : vector<64x32xf32> to vector<64xf32>
    %94 = vector.shape_cast %93 : vector<64xf32> to vector<64x1xf32>
    %cst_41 = arith.constant 3.200000e+01 : f32
    %95 = vector.broadcast %cst_41 : f32 to vector<64x1xf32>
    %96 = arith.divf %94, %95 : vector<64x1xf32>
    %97 = vector.broadcast %96 : vector<64x1xf32> to vector<64x32xf32>
    %98 = arith.subf %88, %97 : vector<64x32xf32>
    %99 = arith.mulf %98, %98 : vector<64x32xf32>
    %cst_42 = arith.constant dense<0.000000e+00> : vector<64xf32>
    %100 = vector.multi_reduction <add>, %99, %cst_42 [1] : vector<64x32xf32> to vector<64xf32>
    %101 = vector.shape_cast %100 : vector<64xf32> to vector<64x1xf32>
    %cst_43 = arith.constant 3.200000e+01 : f32
    %102 = vector.broadcast %cst_43 : f32 to vector<64x1xf32>
    %103 = arith.divf %101, %102 : vector<64x1xf32>
    %104 = vector.broadcast %96 : vector<64x1xf32> to vector<64x32xf32>
    %105 = arith.subf %88, %104 : vector<64x32xf32>
    %cst_44 = arith.constant 9.99999996E-13 : f32
    %106 = vector.broadcast %cst_44 : f32 to vector<64x1xf32>
    %107 = arith.addf %103, %106 : vector<64x1xf32>
    %108 = math.rsqrt %107 : vector<64x1xf32>
    %109 = vector.broadcast %108 : vector<64x1xf32> to vector<64x32xf32>
    %110 = arith.mulf %105, %109 : vector<64x32xf32>
    %111 = vector.broadcast %90 : vector<1x32xf32> to vector<64x32xf32>
    %112 = arith.mulf %110, %111 : vector<64x32xf32>
    %113 = vector.broadcast %92 : vector<1x32xf32> to vector<64x32xf32>
    %114 = arith.addf %112, %113 : vector<64x32xf32>
    %115 = arith.truncf %114 : vector<64x32xf32> to vector<64x32xbf16>
    %c0_45 = arith.constant 0 : index
    %c0_46 = arith.constant 0 : index
    %c0_47 = arith.constant 0 : index
    %116 = vector.load %arg10[%c0_45, %c0_46, %c0_47] : memref<2x32x64xbf16, #tpu.memory_space<vmem>>, vector<1x32x64xbf16>
    %117 = vector.shape_cast %116 : vector<1x32x64xbf16> to vector<32x64xbf16>
    %cst_48 = arith.constant dense<0.000000e+00> : vector<64x64xf32>
    %118 = tpu.matmul %115, %117, %cst_48 {dimension_numbers = #tpu.dot_dimension_numbers<[1], [0], [0], [1], [0, 0, 1, 1], [], []>} : vector<64x32xbf16>, vector<32x64xbf16>, vector<64x64xf32> -> vector<64x64xf32>
    %c0_49 = arith.constant 0 : index
    %c0_50 = arith.constant 0 : index
    %c0_51 = arith.constant 0 : index
    %119 = vector.load %arg11[%c0_49, %c0_50, %c0_51] : memref<2x1x64xf32, #tpu.memory_space<vmem>>, vector<1x1x64xf32>
    %120 = vector.shape_cast %119 : vector<1x1x64xf32> to vector<1x64xf32>
    %121 = vector.broadcast %120 : vector<1x64xf32> to vector<64x64xf32>
    %122 = arith.addf %118, %121 : vector<64x64xf32>
    %cst_52 = arith.constant 5.000000e-01 : f32
    %123 = vector.broadcast %cst_52 : f32 to vector<64x64xf32>
    %124 = arith.mulf %123, %122 : vector<64x64xf32>
    %cst_53 = arith.constant 4.471500e-02 : f32
    %125 = vector.broadcast %cst_53 : f32 to vector<64x64xf32>
    %126 = arith.mulf %125, %122 : vector<64x64xf32>
    %127 = arith.mulf %126, %122 : vector<64x64xf32>
    %128 = arith.mulf %127, %122 : vector<64x64xf32>
    %129 = arith.addf %122, %128 : vector<64x64xf32>
    %cst_54 = arith.constant 0.797884583 : f32
    %130 = vector.broadcast %cst_54 : f32 to vector<64x64xf32>
    %131 = arith.mulf %130, %129 : vector<64x64xf32>
    %132 = math.tanh %131 : vector<64x64xf32>
    %cst_55 = arith.constant 1.000000e+00 : f32
    %133 = vector.broadcast %cst_55 : f32 to vector<64x64xf32>
    %134 = arith.addf %133, %132 : vector<64x64xf32>
    %135 = arith.mulf %124, %134 : vector<64x64xf32>
    %136 = arith.truncf %135 : vector<64x64xf32> to vector<64x64xbf16>
    %c0_56 = arith.constant 0 : index
    %c0_57 = arith.constant 0 : index
    %c0_58 = arith.constant 0 : index
    %137 = vector.load %arg12[%c0_56, %c0_57, %c0_58] : memref<2x64x32xbf16, #tpu.memory_space<vmem>>, vector<1x64x32xbf16>
    %138 = vector.shape_cast %137 : vector<1x64x32xbf16> to vector<64x32xbf16>
    %cst_59 = arith.constant dense<0.000000e+00> : vector<64x32xf32>
    %139 = tpu.matmul %136, %138, %cst_59 {dimension_numbers = #tpu.dot_dimension_numbers<[1], [0], [0], [1], [0, 0, 1, 1], [], []>} : vector<64x64xbf16>, vector<64x32xbf16>, vector<64x32xf32> -> vector<64x32xf32>
    %c0_60 = arith.constant 0 : index
    %c0_61 = arith.constant 0 : index
    %c0_62 = arith.constant 0 : index
    %140 = vector.load %arg13[%c0_60, %c0_61, %c0_62] : memref<2x1x32xf32, #tpu.memory_space<vmem>>, vector<1x1x32xf32>
    %141 = vector.shape_cast %140 : vector<1x1x32xf32> to vector<1x32xf32>
    %142 = vector.broadcast %141 : vector<1x32xf32> to vector<64x32xf32>
    %143 = arith.addf %139, %142 : vector<64x32xf32>
    %144 = arith.addf %143, %114 : vector<64x32xf32>
    %c0_63 = arith.constant 0 : index
    %c0_64 = arith.constant 0 : index
    %c0_65 = arith.constant 0 : index
    %145 = vector.load %arg14[%c0_63, %c0_64, %c0_65] : memref<2x1x32xf32, #tpu.memory_space<vmem>>, vector<1x1x32xf32>
    %146 = vector.shape_cast %145 : vector<1x1x32xf32> to vector<1x32xf32>
    %c0_66 = arith.constant 0 : index
    %c0_67 = arith.constant 0 : index
    %c0_68 = arith.constant 0 : index
    %147 = vector.load %arg15[%c0_66, %c0_67, %c0_68] : memref<2x1x32xf32, #tpu.memory_space<vmem>>, vector<1x1x32xf32>
    %148 = vector.shape_cast %147 : vector<1x1x32xf32> to vector<1x32xf32>
    %cst_69 = arith.constant dense<0.000000e+00> : vector<64xf32>
    %149 = vector.multi_reduction <add>, %144, %cst_69 [1] : vector<64x32xf32> to vector<64xf32>
    %150 = vector.shape_cast %149 : vector<64xf32> to vector<64x1xf32>
    %cst_70 = arith.constant 3.200000e+01 : f32
    %151 = vector.broadcast %cst_70 : f32 to vector<64x1xf32>
    %152 = arith.divf %150, %151 : vector<64x1xf32>
    %153 = vector.broadcast %152 : vector<64x1xf32> to vector<64x32xf32>
    %154 = arith.subf %144, %153 : vector<64x32xf32>
    %155 = arith.mulf %154, %154 : vector<64x32xf32>
    %cst_71 = arith.constant dense<0.000000e+00> : vector<64xf32>
    %156 = vector.multi_reduction <add>, %155, %cst_71 [1] : vector<64x32xf32> to vector<64xf32>
    %157 = vector.shape_cast %156 : vector<64xf32> to vector<64x1xf32>
    %cst_72 = arith.constant 3.200000e+01 : f32
    %158 = vector.broadcast %cst_72 : f32 to vector<64x1xf32>
    %159 = arith.divf %157, %158 : vector<64x1xf32>
    %160 = vector.broadcast %152 : vector<64x1xf32> to vector<64x32xf32>
    %161 = arith.subf %144, %160 : vector<64x32xf32>
    %cst_73 = arith.constant 9.99999996E-13 : f32
    %162 = vector.broadcast %cst_73 : f32 to vector<64x1xf32>
    %163 = arith.addf %159, %162 : vector<64x1xf32>
    %164 = math.rsqrt %163 : vector<64x1xf32>
    %165 = vector.broadcast %164 : vector<64x1xf32> to vector<64x32xf32>
    %166 = arith.mulf %161, %165 : vector<64x32xf32>
    %167 = vector.broadcast %146 : vector<1x32xf32> to vector<64x32xf32>
    %168 = arith.mulf %166, %167 : vector<64x32xf32>
    %169 = vector.broadcast %148 : vector<1x32xf32> to vector<64x32xf32>
    %170 = arith.addf %168, %169 : vector<64x32xf32>
    %171 = arith.truncf %170 : vector<64x32xf32> to vector<64x32xbf16>
    %c1 = arith.constant 1 : index
    %c0_74 = arith.constant 0 : index
    %c0_75 = arith.constant 0 : index
    %172 = vector.load %arg4[%c1, %c0_74, %c0_75] : memref<2x32x96xbf16, #tpu.memory_space<vmem>>, vector<1x32x96xbf16>
    %173 = vector.shape_cast %172 : vector<1x32x96xbf16> to vector<32x96xbf16>
    %cst_76 = arith.constant dense<0.000000e+00> : vector<64x96xf32>
    %174 = tpu.matmul %171, %173, %cst_76 {dimension_numbers = #tpu.dot_dimension_numbers<[1], [0], [0], [1], [0, 0, 1, 1], [], []>} : vector<64x32xbf16>, vector<32x96xbf16>, vector<64x96xf32> -> vector<64x96xf32>
    %c1_77 = arith.constant 1 : index
    %c0_78 = arith.constant 0 : index
    %c0_79 = arith.constant 0 : index
    %175 = vector.load %arg5[%c1_77, %c0_78, %c0_79] : memref<2x1x96xf32, #tpu.memory_space<vmem>>, vector<1x1x96xf32>
    %176 = vector.shape_cast %175 : vector<1x1x96xf32> to vector<1x96xf32>
    %177 = vector.broadcast %176 : vector<1x96xf32> to vector<64x96xf32>
    %178 = arith.addf %174, %177 : vector<64x96xf32>
    %179 = vector.extract_strided_slice %178 {offsets = [0, 0], sizes = [64, 32], strides = [1, 1]} : vector<64x96xf32> to vector<64x32xf32>
    %cst_80 = arith.constant 2.500000e-01 : f32
    %180 = vector.broadcast %cst_80 : f32 to vector<64x32xf32>
    %181 = arith.mulf %179, %180 : vector<64x32xf32>
    %182 = vector.extract_strided_slice %178 {offsets = [0, 32], sizes = [64, 32], strides = [1, 1]} : vector<64x96xf32> to vector<64x32xf32>
    %183 = vector.extract_strided_slice %178 {offsets = [0, 64], sizes = [64, 32], strides = [1, 1]} : vector<64x96xf32> to vector<64x32xf32>
    %184 = vector.extract_strided_slice %181 {offsets = [0, 0], sizes = [64, 16], strides = [1, 1]} : vector<64x32xf32> to vector<64x16xf32>
    %185 = arith.truncf %184 : vector<64x16xf32> to vector<64x16xbf16>
    %186 = vector.extract_strided_slice %182 {offsets = [0, 0], sizes = [64, 16], strides = [1, 1]} : vector<64x32xf32> to vector<64x16xf32>
    %187 = arith.truncf %186 : vector<64x16xf32> to vector<64x16xbf16>
    %188 = vector.extract_strided_slice %183 {offsets = [0, 0], sizes = [64, 16], strides = [1, 1]} : vector<64x32xf32> to vector<64x16xf32>
    %189 = arith.truncf %188 : vector<64x16xf32> to vector<64x16xbf16>
    "tpu.trace_start"() <{level = 10 : i32, message = "qd,kd->qk"}> : () -> ()
    %cst_81 = arith.constant dense<0.000000e+00> : vector<64x64xf32>
    %190 = tpu.matmul %185, %187, %cst_81 {dimension_numbers = #tpu.dot_dimension_numbers<[1], [1], [0], [0], [0, 0, 1, 0], [], []>} : vector<64x16xbf16>, vector<64x16xbf16>, vector<64x64xf32> -> vector<64x64xf32>
    "tpu.trace_stop"() : () -> ()
    %191 = arith.addf %190, %25 : vector<64x64xf32>
    %cst_82 = arith.constant dense<0xFF800000> : vector<64xf32>
    %192 = vector.multi_reduction <maximumf>, %191, %cst_82 [1] : vector<64x64xf32> to vector<64xf32>
    %193 = vector.shape_cast %192 : vector<64xf32> to vector<64x1xf32>
    %194 = vector.broadcast %193 : vector<64x1xf32> to vector<64x64xf32>
    %195 = arith.subf %191, %194 : vector<64x64xf32>
    %196 = math.exp %195 : vector<64x64xf32>
    %cst_83 = arith.constant dense<0.000000e+00> : vector<64xf32>
    %197 = vector.multi_reduction <add>, %196, %cst_83 [1] : vector<64x64xf32> to vector<64xf32>
    %198 = vector.shape_cast %197 : vector<64xf32> to vector<64x1xf32>
    %199 = tpu.reciprocal %198 {approx = true} : vector<64x1xf32> -> vector<64x1xf32>
    %200 = vector.broadcast %199 : vector<64x1xf32> to vector<64x64xf32>
    %201 = arith.mulf %196, %200 : vector<64x64xf32>
    %202 = arith.truncf %201 : vector<64x64xf32> to vector<64x64xbf16>
    %cst_84 = arith.constant dense<0.000000e+00> : vector<64x16xf32>
    %203 = tpu.matmul %202, %189, %cst_84 {dimension_numbers = #tpu.dot_dimension_numbers<[1], [0], [0], [1], [0, 0, 1, 1], [], []>} : vector<64x64xbf16>, vector<64x16xbf16>, vector<64x16xf32> -> vector<64x16xf32>
    %204 = vector.extract_strided_slice %181 {offsets = [0, 16], sizes = [64, 16], strides = [1, 1]} : vector<64x32xf32> to vector<64x16xf32>
    %205 = arith.truncf %204 : vector<64x16xf32> to vector<64x16xbf16>
    %206 = vector.extract_strided_slice %182 {offsets = [0, 16], sizes = [64, 16], strides = [1, 1]} : vector<64x32xf32> to vector<64x16xf32>
    %207 = arith.truncf %206 : vector<64x16xf32> to vector<64x16xbf16>
    %208 = vector.extract_strided_slice %183 {offsets = [0, 16], sizes = [64, 16], strides = [1, 1]} : vector<64x32xf32> to vector<64x16xf32>
    %209 = arith.truncf %208 : vector<64x16xf32> to vector<64x16xbf16>
    "tpu.trace_start"() <{level = 10 : i32, message = "qd,kd->qk"}> : () -> ()
    %cst_85 = arith.constant dense<0.000000e+00> : vector<64x64xf32>
    %210 = tpu.matmul %205, %207, %cst_85 {dimension_numbers = #tpu.dot_dimension_numbers<[1], [1], [0], [0], [0, 0, 1, 0], [], []>} : vector<64x16xbf16>, vector<64x16xbf16>, vector<64x64xf32> -> vector<64x64xf32>
    "tpu.trace_stop"() : () -> ()
    %211 = arith.addf %210, %25 : vector<64x64xf32>
    %cst_86 = arith.constant dense<0xFF800000> : vector<64xf32>
    %212 = vector.multi_reduction <maximumf>, %211, %cst_86 [1] : vector<64x64xf32> to vector<64xf32>
    %213 = vector.shape_cast %212 : vector<64xf32> to vector<64x1xf32>
    %214 = vector.broadcast %213 : vector<64x1xf32> to vector<64x64xf32>
    %215 = arith.subf %211, %214 : vector<64x64xf32>
    %216 = math.exp %215 : vector<64x64xf32>
    %cst_87 = arith.constant dense<0.000000e+00> : vector<64xf32>
    %217 = vector.multi_reduction <add>, %216, %cst_87 [1] : vector<64x64xf32> to vector<64xf32>
    %218 = vector.shape_cast %217 : vector<64xf32> to vector<64x1xf32>
    %219 = tpu.reciprocal %218 {approx = true} : vector<64x1xf32> -> vector<64x1xf32>
    %220 = vector.broadcast %219 : vector<64x1xf32> to vector<64x64xf32>
    %221 = arith.mulf %216, %220 : vector<64x64xf32>
    %222 = arith.truncf %221 : vector<64x64xf32> to vector<64x64xbf16>
    %cst_88 = arith.constant dense<0.000000e+00> : vector<64x16xf32>
    %223 = tpu.matmul %222, %209, %cst_88 {dimension_numbers = #tpu.dot_dimension_numbers<[1], [0], [0], [1], [0, 0, 1, 1], [], []>} : vector<64x64xbf16>, vector<64x16xbf16>, vector<64x16xf32> -> vector<64x16xf32>
    %224 = tpu.concatenate %203, %223 in 1 : vector<64x16xf32>, vector<64x16xf32> -> vector<64x32xf32>
    %225 = arith.truncf %224 : vector<64x32xf32> to vector<64x32xbf16>
    %c1_89 = arith.constant 1 : index
    %c0_90 = arith.constant 0 : index
    %c0_91 = arith.constant 0 : index
    %226 = vector.load %arg6[%c1_89, %c0_90, %c0_91] : memref<2x32x32xbf16, #tpu.memory_space<vmem>>, vector<1x32x32xbf16>
    %227 = vector.shape_cast %226 : vector<1x32x32xbf16> to vector<32x32xbf16>
    %cst_92 = arith.constant dense<0.000000e+00> : vector<64x32xf32>
    %228 = tpu.matmul %225, %227, %cst_92 {dimension_numbers = #tpu.dot_dimension_numbers<[1], [0], [0], [1], [0, 0, 1, 1], [], []>} : vector<64x32xbf16>, vector<32x32xbf16>, vector<64x32xf32> -> vector<64x32xf32>
    %c1_93 = arith.constant 1 : index
    %c0_94 = arith.constant 0 : index
    %c0_95 = arith.constant 0 : index
    %229 = vector.load %arg7[%c1_93, %c0_94, %c0_95] : memref<2x1x32xf32, #tpu.memory_space<vmem>>, vector<1x1x32xf32>
    %230 = vector.shape_cast %229 : vector<1x1x32xf32> to vector<1x32xf32>
    %231 = vector.broadcast %230 : vector<1x32xf32> to vector<64x32xf32>
    %232 = arith.addf %228, %231 : vector<64x32xf32>
    %233 = arith.addf %232, %170 : vector<64x32xf32>
    %c1_96 = arith.constant 1 : index
    %c0_97 = arith.constant 0 : index
    %c0_98 = arith.constant 0 : index
    %234 = vector.load %arg8[%c1_96, %c0_97, %c0_98] : memref<2x1x32xf32, #tpu.memory_space<vmem>>, vector<1x1x32xf32>
    %235 = vector.shape_cast %234 : vector<1x1x32xf32> to vector<1x32xf32>
    %c1_99 = arith.constant 1 : index
    %c0_100 = arith.constant 0 : index
    %c0_101 = arith.constant 0 : index
    %236 = vector.load %arg9[%c1_99, %c0_100, %c0_101] : memref<2x1x32xf32, #tpu.memory_space<vmem>>, vector<1x1x32xf32>
    %237 = vector.shape_cast %236 : vector<1x1x32xf32> to vector<1x32xf32>
    %cst_102 = arith.constant dense<0.000000e+00> : vector<64xf32>
    %238 = vector.multi_reduction <add>, %233, %cst_102 [1] : vector<64x32xf32> to vector<64xf32>
    %239 = vector.shape_cast %238 : vector<64xf32> to vector<64x1xf32>
    %cst_103 = arith.constant 3.200000e+01 : f32
    %240 = vector.broadcast %cst_103 : f32 to vector<64x1xf32>
    %241 = arith.divf %239, %240 : vector<64x1xf32>
    %242 = vector.broadcast %241 : vector<64x1xf32> to vector<64x32xf32>
    %243 = arith.subf %233, %242 : vector<64x32xf32>
    %244 = arith.mulf %243, %243 : vector<64x32xf32>
    %cst_104 = arith.constant dense<0.000000e+00> : vector<64xf32>
    %245 = vector.multi_reduction <add>, %244, %cst_104 [1] : vector<64x32xf32> to vector<64xf32>
    %246 = vector.shape_cast %245 : vector<64xf32> to vector<64x1xf32>
    %cst_105 = arith.constant 3.200000e+01 : f32
    %247 = vector.broadcast %cst_105 : f32 to vector<64x1xf32>
    %248 = arith.divf %246, %247 : vector<64x1xf32>
    %249 = vector.broadcast %241 : vector<64x1xf32> to vector<64x32xf32>
    %250 = arith.subf %233, %249 : vector<64x32xf32>
    %cst_106 = arith.constant 9.99999996E-13 : f32
    %251 = vector.broadcast %cst_106 : f32 to vector<64x1xf32>
    %252 = arith.addf %248, %251 : vector<64x1xf32>
    %253 = math.rsqrt %252 : vector<64x1xf32>
    %254 = vector.broadcast %253 : vector<64x1xf32> to vector<64x32xf32>
    %255 = arith.mulf %250, %254 : vector<64x32xf32>
    %256 = vector.broadcast %235 : vector<1x32xf32> to vector<64x32xf32>
    %257 = arith.mulf %255, %256 : vector<64x32xf32>
    %258 = vector.broadcast %237 : vector<1x32xf32> to vector<64x32xf32>
    %259 = arith.addf %257, %258 : vector<64x32xf32>
    %260 = arith.truncf %259 : vector<64x32xf32> to vector<64x32xbf16>
    %c1_107 = arith.constant 1 : index
    %c0_108 = arith.constant 0 : index
    %c0_109 = arith.constant 0 : index
    %261 = vector.load %arg10[%c1_107, %c0_108, %c0_109] : memref<2x32x64xbf16, #tpu.memory_space<vmem>>, vector<1x32x64xbf16>
    %262 = vector.shape_cast %261 : vector<1x32x64xbf16> to vector<32x64xbf16>
    %cst_110 = arith.constant dense<0.000000e+00> : vector<64x64xf32>
    %263 = tpu.matmul %260, %262, %cst_110 {dimension_numbers = #tpu.dot_dimension_numbers<[1], [0], [0], [1], [0, 0, 1, 1], [], []>} : vector<64x32xbf16>, vector<32x64xbf16>, vector<64x64xf32> -> vector<64x64xf32>
    %c1_111 = arith.constant 1 : index
    %c0_112 = arith.constant 0 : index
    %c0_113 = arith.constant 0 : index
    %264 = vector.load %arg11[%c1_111, %c0_112, %c0_113] : memref<2x1x64xf32, #tpu.memory_space<vmem>>, vector<1x1x64xf32>
    %265 = vector.shape_cast %264 : vector<1x1x64xf32> to vector<1x64xf32>
    %266 = vector.broadcast %265 : vector<1x64xf32> to vector<64x64xf32>
    %267 = arith.addf %263, %266 : vector<64x64xf32>
    %cst_114 = arith.constant 5.000000e-01 : f32
    %268 = vector.broadcast %cst_114 : f32 to vector<64x64xf32>
    %269 = arith.mulf %268, %267 : vector<64x64xf32>
    %cst_115 = arith.constant 4.471500e-02 : f32
    %270 = vector.broadcast %cst_115 : f32 to vector<64x64xf32>
    %271 = arith.mulf %270, %267 : vector<64x64xf32>
    %272 = arith.mulf %271, %267 : vector<64x64xf32>
    %273 = arith.mulf %272, %267 : vector<64x64xf32>
    %274 = arith.addf %267, %273 : vector<64x64xf32>
    %cst_116 = arith.constant 0.797884583 : f32
    %275 = vector.broadcast %cst_116 : f32 to vector<64x64xf32>
    %276 = arith.mulf %275, %274 : vector<64x64xf32>
    %277 = math.tanh %276 : vector<64x64xf32>
    %cst_117 = arith.constant 1.000000e+00 : f32
    %278 = vector.broadcast %cst_117 : f32 to vector<64x64xf32>
    %279 = arith.addf %278, %277 : vector<64x64xf32>
    %280 = arith.mulf %269, %279 : vector<64x64xf32>
    %281 = arith.truncf %280 : vector<64x64xf32> to vector<64x64xbf16>
    %c1_118 = arith.constant 1 : index
    %c0_119 = arith.constant 0 : index
    %c0_120 = arith.constant 0 : index
    %282 = vector.load %arg12[%c1_118, %c0_119, %c0_120] : memref<2x64x32xbf16, #tpu.memory_space<vmem>>, vector<1x64x32xbf16>
    %283 = vector.shape_cast %282 : vector<1x64x32xbf16> to vector<64x32xbf16>
    %cst_121 = arith.constant dense<0.000000e+00> : vector<64x32xf32>
    %284 = tpu.matmul %281, %283, %cst_121 {dimension_numbers = #tpu.dot_dimension_numbers<[1], [0], [0], [1], [0, 0, 1, 1], [], []>} : vector<64x64xbf16>, vector<64x32xbf16>, vector<64x32xf32> -> vector<64x32xf32>
    %c1_122 = arith.constant 1 : index
    %c0_123 = arith.constant 0 : index
    %c0_124 = arith.constant 0 : index
    %285 = vector.load %arg13[%c1_122, %c0_123, %c0_124] : memref<2x1x32xf32, #tpu.memory_space<vmem>>, vector<1x1x32xf32>
    %286 = vector.shape_cast %285 : vector<1x1x32xf32> to vector<1x32xf32>
    %287 = vector.broadcast %286 : vector<1x32xf32> to vector<64x32xf32>
    %288 = arith.addf %284, %287 : vector<64x32xf32>
    %289 = arith.addf %288, %259 : vector<64x32xf32>
    %c1_125 = arith.constant 1 : index
    %c0_126 = arith.constant 0 : index
    %c0_127 = arith.constant 0 : index
    %290 = vector.load %arg14[%c1_125, %c0_126, %c0_127] : memref<2x1x32xf32, #tpu.memory_space<vmem>>, vector<1x1x32xf32>
    %291 = vector.shape_cast %290 : vector<1x1x32xf32> to vector<1x32xf32>
    %c1_128 = arith.constant 1 : index
    %c0_129 = arith.constant 0 : index
    %c0_130 = arith.constant 0 : index
    %292 = vector.load %arg15[%c1_128, %c0_129, %c0_130] : memref<2x1x32xf32, #tpu.memory_space<vmem>>, vector<1x1x32xf32>
    %293 = vector.shape_cast %292 : vector<1x1x32xf32> to vector<1x32xf32>
    %cst_131 = arith.constant dense<0.000000e+00> : vector<64xf32>
    %294 = vector.multi_reduction <add>, %289, %cst_131 [1] : vector<64x32xf32> to vector<64xf32>
    %295 = vector.shape_cast %294 : vector<64xf32> to vector<64x1xf32>
    %cst_132 = arith.constant 3.200000e+01 : f32
    %296 = vector.broadcast %cst_132 : f32 to vector<64x1xf32>
    %297 = arith.divf %295, %296 : vector<64x1xf32>
    %298 = vector.broadcast %297 : vector<64x1xf32> to vector<64x32xf32>
    %299 = arith.subf %289, %298 : vector<64x32xf32>
    %300 = arith.mulf %299, %299 : vector<64x32xf32>
    %cst_133 = arith.constant dense<0.000000e+00> : vector<64xf32>
    %301 = vector.multi_reduction <add>, %300, %cst_133 [1] : vector<64x32xf32> to vector<64xf32>
    %302 = vector.shape_cast %301 : vector<64xf32> to vector<64x1xf32>
    %cst_134 = arith.constant 3.200000e+01 : f32
    %303 = vector.broadcast %cst_134 : f32 to vector<64x1xf32>
    %304 = arith.divf %302, %303 : vector<64x1xf32>
    %305 = vector.broadcast %297 : vector<64x1xf32> to vector<64x32xf32>
    %306 = arith.subf %289, %305 : vector<64x32xf32>
    %cst_135 = arith.constant 9.99999996E-13 : f32
    %307 = vector.broadcast %cst_135 : f32 to vector<64x1xf32>
    %308 = arith.addf %304, %307 : vector<64x1xf32>
    %309 = math.rsqrt %308 : vector<64x1xf32>
    %310 = vector.broadcast %309 : vector<64x1xf32> to vector<64x32xf32>
    %311 = arith.mulf %306, %310 : vector<64x32xf32>
    %312 = vector.broadcast %291 : vector<1x32xf32> to vector<64x32xf32>
    %313 = arith.mulf %311, %312 : vector<64x32xf32>
    %314 = vector.broadcast %293 : vector<1x32xf32> to vector<64x32xf32>
    %315 = arith.addf %313, %314 : vector<64x32xf32>
    %c0_136 = arith.constant 0 : index
    %c0_137 = arith.constant 0 : index
    %316 = vector.load %arg16[%c0_136, %c0_137] : memref<8x64xf32, #tpu.memory_space<vmem>>, vector<8x64xf32>
    %cst_138 = arith.constant dense<0.000000e+00> : vector<8x32xf32>
    %317 = tpu.matmul %316, %315, %cst_138 {dimension_numbers = #tpu.dot_dimension_numbers<[1], [0], [0], [1], [0, 0, 1, 1], [], []>} : vector<8x64xf32>, vector<64x32xf32>, vector<8x32xf32> -> vector<8x32xf32>
    %318 = arith.truncf %317 : vector<8x32xf32> to vector<8x32xbf16>
    %c0_139 = arith.constant 0 : index
    %c0_140 = arith.constant 0 : index
    %319 = vector.load %arg17[%c0_139, %c0_140] : memref<32x32xbf16, #tpu.memory_space<vmem>>, vector<32x32xbf16>
    %cst_141 = arith.constant dense<0.000000e+00> : vector<8x32xf32>
    %320 = tpu.matmul %318, %319, %cst_141 {dimension_numbers = #tpu.dot_dimension_numbers<[1], [0], [0], [1], [0, 0, 1, 1], [], []>} : vector<8x32xbf16>, vector<32x32xbf16>, vector<8x32xf32> -> vector<8x32xf32>
    %c0_142 = arith.constant 0 : index
    %c0_143 = arith.constant 0 : index
    %321 = vector.load %arg18[%c0_142, %c0_143] : memref<1x32xf32, #tpu.memory_space<vmem>>, vector<1x32xf32>
    %322 = vector.broadcast %321 : vector<1x32xf32> to vector<8x32xf32>
    %323 = arith.addf %320, %322 : vector<8x32xf32>
    %324 = math.tanh %323 : vector<8x32xf32>
    %c0_144 = arith.constant 0 : index
    %c0_145 = arith.constant 0 : index
    %325 = vector.load %arg19[%c0_144, %c0_145] : memref<8x8xf32, #tpu.memory_space<vmem>>, vector<8x8xf32>
    %326 = arith.truncf %324 : vector<8x32xf32> to vector<8x32xbf16>
    %c0_146 = arith.constant 0 : index
    %c0_147 = arith.constant 0 : index
    %327 = vector.load %arg20[%c0_146, %c0_147] : memref<32x128xbf16, #tpu.memory_space<vmem>>, vector<32x128xbf16>
    %cst_148 = arith.constant dense<0.000000e+00> : vector<8x128xf32>
    %328 = tpu.matmul %326, %327, %cst_148 {dimension_numbers = #tpu.dot_dimension_numbers<[1], [0], [0], [1], [0, 0, 1, 1], [], []>} : vector<8x32xbf16>, vector<32x128xbf16>, vector<8x128xf32> -> vector<8x128xf32>
    %cst_149 = arith.constant dense<0.000000e+00> : vector<8x128xf32>
    %329 = tpu.matmul %325, %328, %cst_149 {dimension_numbers = #tpu.dot_dimension_numbers<[1], [0], [0], [1], [0, 0, 1, 1], [], []>} : vector<8x8xf32>, vector<8x128xf32>, vector<8x128xf32> -> vector<8x128xf32>
    %c0_150 = arith.constant 0 : index
    %c0_151 = arith.constant 0 : index
    %330 = vector.load %arg21[%c0_150, %c0_151] : memref<1x128xf32, #tpu.memory_space<vmem>>, vector<1x128xf32>
    %331 = vector.broadcast %330 : vector<1x128xf32> to vector<8x128xf32>
    %332 = arith.mulf %329, %331 : vector<8x128xf32>
    %c0_152 = arith.constant 0 : index
    %c0_153 = arith.constant 0 : index
    %333 = vector.load %arg22[%c0_152, %c0_153] : memref<1x128xf32, #tpu.memory_space<vmem>>, vector<1x128xf32>
    %334 = vector.broadcast %333 : vector<1x128xf32> to vector<8x128xf32>
    %335 = arith.addf %332, %334 : vector<8x128xf32>
    %cst_154 = arith.constant 5.000000e-01 : f32
    %336 = vector.broadcast %cst_154 : f32 to vector<8x128xf32>
    %337 = arith.mulf %336, %335 : vector<8x128xf32>
    %cst_155 = arith.constant 4.471500e-02 : f32
    %338 = vector.broadcast %cst_155 : f32 to vector<8x128xf32>
    %339 = arith.mulf %338, %335 : vector<8x128xf32>
    %340 = arith.mulf %339, %335 : vector<8x128xf32>
    %341 = arith.mulf %340, %335 : vector<8x128xf32>
    %342 = arith.addf %335, %341 : vector<8x128xf32>
    %cst_156 = arith.constant 0.797884583 : f32
    %343 = vector.broadcast %cst_156 : f32 to vector<8x128xf32>
    %344 = arith.mulf %343, %342 : vector<8x128xf32>
    %345 = math.tanh %344 : vector<8x128xf32>
    %cst_157 = arith.constant 1.000000e+00 : f32
    %346 = vector.broadcast %cst_157 : f32 to vector<8x128xf32>
    %347 = arith.addf %346, %345 : vector<8x128xf32>
    %348 = arith.mulf %337, %347 : vector<8x128xf32>
    %349 = arith.truncf %348 : vector<8x128xf32> to vector<8x128xbf16>
    %c0_158 = arith.constant 0 : index
    %c0_159 = arith.constant 0 : index
    %350 = vector.load %arg23[%c0_158, %c0_159] : memref<128x64xbf16, #tpu.memory_space<vmem>>, vector<128x64xbf16>
    %cst_160 = arith.constant dense<0.000000e+00> : vector<8x64xf32>
    %351 = tpu.matmul %349, %350, %cst_160 {dimension_numbers = #tpu.dot_dimension_numbers<[1], [0], [0], [1], [0, 0, 1, 1], [], []>} : vector<8x128xbf16>, vector<128x64xbf16>, vector<8x64xf32> -> vector<8x64xf32>
    %cst_161 = arith.constant dense<0.000000e+00> : vector<8x64xf32>
    %352 = tpu.matmul %325, %351, %cst_161 {dimension_numbers = #tpu.dot_dimension_numbers<[1], [0], [0], [1], [0, 0, 1, 1], [], []>} : vector<8x8xf32>, vector<8x64xf32>, vector<8x64xf32> -> vector<8x64xf32>
    %c0_162 = arith.constant 0 : index
    %c0_163 = arith.constant 0 : index
    %353 = vector.load %arg24[%c0_162, %c0_163] : memref<1x64xf32, #tpu.memory_space<vmem>>, vector<1x64xf32>
    %354 = vector.broadcast %353 : vector<1x64xf32> to vector<8x64xf32>
    %355 = arith.mulf %352, %354 : vector<8x64xf32>
    %c0_164 = arith.constant 0 : index
    %c0_165 = arith.constant 0 : index
    %356 = vector.load %arg25[%c0_164, %c0_165] : memref<1x64xf32, #tpu.memory_space<vmem>>, vector<1x64xf32>
    %357 = vector.broadcast %356 : vector<1x64xf32> to vector<8x64xf32>
    %358 = arith.addf %355, %357 : vector<8x64xf32>
    %cst_166 = arith.constant 5.000000e-01 : f32
    %359 = vector.broadcast %cst_166 : f32 to vector<8x64xf32>
    %360 = arith.mulf %359, %358 : vector<8x64xf32>
    %cst_167 = arith.constant 4.471500e-02 : f32
    %361 = vector.broadcast %cst_167 : f32 to vector<8x64xf32>
    %362 = arith.mulf %361, %358 : vector<8x64xf32>
    %363 = arith.mulf %362, %358 : vector<8x64xf32>
    %364 = arith.mulf %363, %358 : vector<8x64xf32>
    %365 = arith.addf %358, %364 : vector<8x64xf32>
    %cst_168 = arith.constant 0.797884583 : f32
    %366 = vector.broadcast %cst_168 : f32 to vector<8x64xf32>
    %367 = arith.mulf %366, %365 : vector<8x64xf32>
    %368 = math.tanh %367 : vector<8x64xf32>
    %cst_169 = arith.constant 1.000000e+00 : f32
    %369 = vector.broadcast %cst_169 : f32 to vector<8x64xf32>
    %370 = arith.addf %369, %368 : vector<8x64xf32>
    %371 = arith.mulf %360, %370 : vector<8x64xf32>
    %c0_170 = arith.constant 0 : index
    %c0_171 = arith.constant 0 : index
    %372 = vector.load %arg26[%c0_170, %c0_171] : memref<12x8xf32, #tpu.memory_space<vmem>>, vector<12x8xf32>
    %cst_172 = arith.constant dense<0.000000e+00> : vector<12x64xf32>
    %373 = tpu.matmul %372, %371, %cst_172 {dimension_numbers = #tpu.dot_dimension_numbers<[1], [0], [0], [1], [0, 0, 1, 1], [], []>} : vector<12x8xf32>, vector<8x64xf32>, vector<12x64xf32> -> vector<12x64xf32>
    %c0_173 = arith.constant 0 : index
    %c0_174 = arith.constant 0 : index
    %374 = vector.load %arg27[%c0_173, %c0_174] : memref<12x8xf32, #tpu.memory_space<vmem>>, vector<12x8xf32>
    %cst_175 = arith.constant dense<0.000000e+00> : vector<12x64xf32>
    %375 = tpu.matmul %374, %371, %cst_175 {dimension_numbers = #tpu.dot_dimension_numbers<[1], [0], [0], [1], [0, 0, 1, 1], [], []>} : vector<12x8xf32>, vector<8x64xf32>, vector<12x64xf32> -> vector<12x64xf32>
    %376 = tpu.concatenate %373, %375 in 1 : vector<12x64xf32>, vector<12x64xf32> -> vector<12x128xf32>
    %377 = arith.truncf %376 : vector<12x128xf32> to vector<12x128xbf16>
    %c0_176 = arith.constant 0 : index
    %c0_177 = arith.constant 0 : index
    %378 = vector.load %arg28[%c0_176, %c0_177] : memref<128x2xbf16, #tpu.memory_space<vmem>>, vector<128x2xbf16>
    %cst_178 = arith.constant dense<0.000000e+00> : vector<12x2xf32>
    %379 = tpu.matmul %377, %378, %cst_178 {dimension_numbers = #tpu.dot_dimension_numbers<[1], [0], [0], [1], [0, 0, 1, 1], [], []>} : vector<12x128xbf16>, vector<128x2xbf16>, vector<12x2xf32> -> vector<12x2xf32>
    %c0_179 = arith.constant 0 : index
    %c0_180 = arith.constant 0 : index
    %380 = vector.load %arg29[%c0_179, %c0_180] : memref<1x2xf32, #tpu.memory_space<vmem>>, vector<1x2xf32>
    %381 = vector.broadcast %380 : vector<1x2xf32> to vector<12x2xf32>
    %382 = arith.addf %379, %381 : vector<12x2xf32>
    %383 = tpu.iota {dimensions = array<i32: 1>} : vector<12x2xi32>
    %cst_181 = arith.constant dense<0xFF800000> : vector<12xf32>
    %384 = vector.multi_reduction <maximumf>, %382, %cst_181 [1] : vector<12x2xf32> to vector<12xf32>
    %385 = vector.shape_cast %384 : vector<12xf32> to vector<12x1xf32>
    %386 = vector.broadcast %385 : vector<12x1xf32> to vector<12x2xf32>
    %387 = arith.cmpf oge, %382, %386 : vector<12x2xf32>
    %c2_i32 = arith.constant 2 : i32
    %388 = vector.broadcast %c2_i32 : i32 to vector<12x2xi32>
    %389 = arith.select %387, %383, %388 : vector<12x2xi1>, vector<12x2xi32>
    %cst_182 = arith.constant dense<2147483647> : vector<12xi32>
    %390 = vector.multi_reduction <minsi>, %389, %cst_182 [1] : vector<12x2xi32> to vector<12xi32>
    %391 = vector.shape_cast %390 : vector<12xi32> to vector<12x1xi32>
    %c0_183 = arith.constant 0 : index
    %c0_184 = arith.constant 0 : index
    %392 = vector.load %arg32[%c0_183, %c0_184] : memref<12x1xi32, #tpu.memory_space<vmem>>, vector<12x1xi32>
    tpu.vector_store %arg32[%c0_183, %c0_184], %391 {strides = array<i32>} : memref<12x1xi32, #tpu.memory_space<vmem>>, vector<12x1xi32>,
    %393 = vector.broadcast %385 : vector<12x1xf32> to vector<12x2xf32>
    %394 = arith.subf %382, %393 : vector<12x2xf32>
    %395 = math.exp %394 : vector<12x2xf32>
    %cst_185 = arith.constant dense<0.000000e+00> : vector<12xf32>
    %396 = vector.multi_reduction <add>, %395, %cst_185 [1] : vector<12x2xf32> to vector<12xf32>
    %397 = vector.shape_cast %396 : vector<12xf32> to vector<12x1xf32>
    %398 = math.log %397 : vector<12x1xf32>
    %399 = arith.addf %398, %385 : vector<12x1xf32>
    %c0_186 = arith.constant 0 : index
    %c0_187 = arith.constant 0 : index
    %400 = vector.load %arg30[%c0_186, %c0_187] : memref<12x2xf32, #tpu.memory_space<vmem>>, vector<12x2xf32>
    %401 = arith.mulf %382, %400 : vector<12x2xf32>
    %cst_188 = arith.constant dense<0.000000e+00> : vector<12xf32>
    %402 = vector.multi_reduction <add>, %401, %cst_188 [1] : vector<12x2xf32> to vector<12xf32>
    %403 = vector.shape_cast %402 : vector<12xf32> to vector<12x1xf32>
    %404 = arith.subf %399, %403 : vector<12x1xf32>
    %405 = vector.shape_cast %404 : vector<12x1xf32> to vector<1x12x1xf32>
    %cst_189 = arith.constant dense<0.000000e+00> : vector<1xf32>
    %406 = vector.multi_reduction <add>, %405, %cst_189 [1, 2] : vector<1x12x1xf32> to vector<1xf32>
    %407 = vector.shape_cast %406 : vector<1xf32> to vector<1x1x1xf32>
    %408 = vector.extract %407[0, 0, 0] : f32 from vector<1x1x1xf32>
    %cst_190 = arith.constant 0.0833333358 : f32
    %409 = arith.mulf %408, %cst_190 : f32
    %410 = vector.broadcast %409 : f32 to vector<1x1xf32>
    %c0_191 = arith.constant 0 : index
    %c0_192 = arith.constant 0 : index
    %411 = vector.load %arg31[%c0_191, %c0_192] : memref<1x1xf32, #tpu.memory_space<vmem>>, vector<1x1xf32>
    tpu.vector_store %arg31[%c0_191, %c0_192], %410 {strides = array<i32>} : memref<1x1xf32, #tpu.memory_space<vmem>>, vector<1x1xf32>,
    return
  }
}

</mosaic_0001>

<llo_original>
// kernel: mul.7
$region0: #{mul.7}
  #allocation0 [shape = 's32[1]{0}', space=sflag, size = 0x4, scoped, tag = 'scoped memory for mul.7']
  %s0 = inlined_call_operand.vmem [shape: f32[24], index: 0, kind: input, shape index: {}]
  %s1 = inlined_call_operand.vmem [shape: f32[24], index: 1, kind: input, shape index: {}]
  %s2 = inlined_call_operand.vmem [shape: f32[24], index: 2, kind: output, shape index: {}]
  %v3 = vld [vmem:[%s0] sm:$0x1]
  %v4 = vld [vmem:[%s1] sm:$0x1]
  %5 = xla_tuple %v3, %v4
  %6 = xla_tuple %5
  %v7 = vmul.f32 %v3, %v4
  %8 = xla_tuple %v7
  %9 = vst [vmem:[%s2] sm:$0x1] %v7

// kernel: forward.1
$region0: #{forward.1}
  #allocation0 [shape = 'u32[]', space=smem, size = 0x4, offset = 0x4, fixed_abs, tag = 'smem constant byte address 0x4 - core index']
  #allocation1 [shape = 'u32[144,128]{1,0:T(1,128)}', space=vmem, size = 0x12000, scoped, tag = 'internal scratch']
  %s0 = inlined_call_operand.smem [shape: u32[33], index: -1, kind: input, shape index: {}]
  %s1 = sld [smem:[%s0]]
  %s2 = scalar_lea.smem %s0, 1
  %s3 = sld [smem:[%s2]]
  %s4 = scalar_lea.smem %s0, 2
  %s5 = sld [smem:[%s4]]
  %s6 = scalar_lea.smem %s0, 3
  %s7 = sld [smem:[%s6]]
  %s8 = scalar_lea.smem %s0, 4
  %s9 = sld [smem:[%s8]]
  %s10 = scalar_lea.smem %s0, 5
  %s11 = sld [smem:[%s10]]
  %s12 = scalar_lea.smem %s0, 6
  %s13 = sld [smem:[%s12]]
  %s14 = scalar_lea.smem %s0, 7
  %s15 = sld [smem:[%s14]]
  %s16 = scalar_lea.smem %s0, 8
  %s17 = sld [smem:[%s16]]
  %s18 = scalar_lea.smem %s0, 9
  %s19 = sld [smem:[%s18]]
  %s20 = scalar_lea.smem %s0, 10
  %s21 = sld [smem:[%s20]]
  %s22 = scalar_lea.smem %s0, 11
  %s23 = sld [smem:[%s22]]
  %s24 = scalar_lea.smem %s0, 12
  %s25 = sld [smem:[%s24]]
  %s26 = scalar_lea.smem %s0, 13
  %s27 = sld [smem:[%s26]]
  %s28 = scalar_lea.smem %s0, 14
  %s29 = sld [smem:[%s28]]
  %s30 = scalar_lea.smem %s0, 15
  %s31 = sld [smem:[%s30]]
  %s32 = scalar_lea.smem %s0, 16
  %s33 = sld [smem:[%s32]]
  %s34 = scalar_lea.smem %s0, 17
  %s35 = sld [smem:[%s34]]
  %s36 = scalar_lea.smem %s0, 18
  %s37 = sld [smem:[%s36]]
  %s38 = scalar_lea.smem %s0, 19
  %s39 = sld [smem:[%s38]]
  %s40 = scalar_lea.smem %s0, 20
  %s41 = sld [smem:[%s40]]
  %s42 = scalar_lea.smem %s0, 21
  %s43 = sld [smem:[%s42]]
  %s44 = scalar_lea.smem %s0, 22
  %s45 = sld [smem:[%s44]]
  %s46 = scalar_lea.smem %s0, 23
  %s47 = sld [smem:[%s46]]
  %s48 = scalar_lea.smem %s0, 24
  %s49 = sld [smem:[%s48]]
  %s50 = scalar_lea.smem %s0, 25
  %s51 = sld [smem:[%s50]]
  %s52 = scalar_lea.smem %s0, 26
  %s53 = sld [smem:[%s52]]
  %s54 = scalar_lea.smem %s0, 27
  %s55 = sld [smem:[%s54]]
  %s56 = scalar_lea.smem %s0, 28
  %s57 = sld [smem:[%s56]]
  %s58 = scalar_lea.smem %s0, 29
  %s59 = sld [smem:[%s58]]
  %s60 = scalar_lea.smem %s0, 30
  %s61 = sld [smem:[%s60]]
  %s62 = scalar_lea.smem %s0, 31
  %s63 = sld [smem:[%s62]]
  %s64 = scalar_lea.smem %s0, 32
  %s65 = sld [smem:[%s64]]
  %66 = xla_tuple %s63, %s65
  %s67 = sld [smem:[#allocation0]]
  $region146: #{forward.1} parent=0
    _
  %s69 = ssub.s32 1, %s67
  %s70 = scalar_select 0, %s69, %s67
  $region1: #{forward.1} parent=0
    #allocation2 [shape = 'u8[4096]{0}', space=vmem, size = 0x1000, scoped, tag = 'input window, operand 19, single buffered']
    #allocation3 [shape = 's32[1]{0}', space=sflag, size = 0x4, scoped, tag = 'scoped memory for forward.1']
    #allocation4 [shape = 's32[1]{0}', space=sflag, size = 0x4, scoped, tag = 'scoped memory for forward.1']
    #allocation5 [shape = 'u8[512]{0}', space=vmem, size = 0x400, scoped, tag = 'output window, operand 0, single buffered']
    %71 = vsyncpa [#allocation3], 0
    %72 = vsyncpa [#allocation4], 0
    // Predicated region
    $region2: #{forward.1} parent=1 // pred_check
      _
    $region3: #{forward.1} parent=1 // pred_check_branch
      %74 = sbr.rel (0) target = $region5
    $region4: #{forward.1} parent=1 // pred_region
      _
    $region5: #{forward.1} parent=1 // pred_fallthru
      _
    // Predicated region
    $region6: #{forward.1} parent=1 // pred_check
      _
    $region7: #{forward.1} parent=1 // pred_check_branch
      %76 = sbr.rel (0) target = $region9
    $region8: #{forward.1} parent=1 // pred_region
      _
    $region9: #{forward.1} parent=1 // pred_fallthru
      _
    // Predicated region
    $region10: #{forward.1} parent=1 // pred_check
      _
    $region11: #{forward.1} parent=1 // pred_check_branch
      %78 = sbr.rel (0) target = $region13
    $region12: #{forward.1} parent=1 // pred_region
      _
    $region13: #{forward.1} parent=1 // pred_fallthru
      _
    // Predicated region
    $region14: #{forward.1} parent=1 // pred_check
      _
    $region15: #{forward.1} parent=1 // pred_check_branch
      %80 = sbr.rel (0) target = $region17
    $region16: #{forward.1} parent=1 // pred_region
      _
    $region17: #{forward.1} parent=1 // pred_fallthru
      _
    // Predicated region
    $region18: #{forward.1} parent=1 // pred_check
      _
    $region19: #{forward.1} parent=1 // pred_check_branch
      %82 = sbr.rel (0) target = $region21
    $region20: #{forward.1} parent=1 // pred_region
      _
    $region21: #{forward.1} parent=1 // pred_fallthru
      _
    // Predicated region
    $region22: #{forward.1} parent=1 // pred_check
      _
    $region23: #{forward.1} parent=1 // pred_check_branch
      %84 = sbr.rel (0) target = $region25
    $region24: #{forward.1} parent=1 // pred_region
      _
    $region25: #{forward.1} parent=1 // pred_fallthru
      _
    // Predicated region
    $region26: #{forward.1} parent=1 // pred_check
      _
    $region27: #{forward.1} parent=1 // pred_check_branch
      %86 = sbr.rel (0) target = $region29
    $region28: #{forward.1} parent=1 // pred_region
      _
    $region29: #{forward.1} parent=1 // pred_fallthru
      _
    // Predicated region
    $region30: #{forward.1} parent=1 // pred_check
      _
    $region31: #{forward.1} parent=1 // pred_check_branch
      %88 = sbr.rel (0) target = $region33
    $region32: #{forward.1} parent=1 // pred_region
      _
    $region33: #{forward.1} parent=1 // pred_fallthru
      _
    // Predicated region
    $region34: #{forward.1} parent=1 // pred_check
      _
    $region35: #{forward.1} parent=1 // pred_check_branch
      %90 = sbr.rel (0) target = $region37
    $region36: #{forward.1} parent=1 // pred_region
      _
    $region37: #{forward.1} parent=1 // pred_fallthru
      _
    // Predicated region
    $region38: #{forward.1} parent=1 // pred_check
      _
    $region39: #{forward.1} parent=1 // pred_check_branch
      %92 = sbr.rel (0) target = $region41
    $region40: #{forward.1} parent=1 // pred_region
      _
    $region41: #{forward.1} parent=1 // pred_fallthru
      _
    // Predicated region
    $region42: #{forward.1} parent=1 // pred_check
      _
    $region43: #{forward.1} parent=1 // pred_check_branch
      %94 = sbr.rel (0) target = $region45
    $region44: #{forward.1} parent=1 // pred_region
      _
    $region45: #{forward.1} parent=1 // pred_fallthru
      _
    // Predicated region
    $region46: #{forward.1} parent=1 // pred_check
      _
    $region47: #{forward.1} parent=1 // pred_check_branch
      %96 = sbr.rel (0) target = $region49
    $region48: #{forward.1} parent=1 // pred_region
      _
    $region49: #{forward.1} parent=1 // pred_fallthru
      _
    // Predicated region
    $region50: #{forward.1} parent=1 // pred_check
      _
    $region51: #{forward.1} parent=1 // pred_check_branch
      %98 = sbr.rel (0) target = $region53
    $region52: #{forward.1} parent=1 // pred_region
      _
    $region53: #{forward.1} parent=1 // pred_fallthru
      _
    // Predicated region
    $region54: #{forward.1} parent=1 // pred_check
      _
    $region55: #{forward.1} parent=1 // pred_check_branch
      %100 = sbr.rel (0) target = $region57
    $region56: #{forward.1} parent=1 // pred_region
      _
    $region57: #{forward.1} parent=1 // pred_fallthru
      _
    // Predicated region
    $region58: #{forward.1} parent=1 // pred_check
      _
    $region59: #{forward.1} parent=1 // pred_check_branch
      %102 = sbr.rel (0) target = $region61
    $region60: #{forward.1} parent=1 // pred_region
      _
    $region61: #{forward.1} parent=1 // pred_fallthru
      _
    // Predicated region
    $region62: #{forward.1} parent=1 // pred_check
      _
    $region63: #{forward.1} parent=1 // pred_check_branch
      %104 = sbr.rel (0) target = $region65
    $region64: #{forward.1} parent=1 // pred_region
      _
    $region65: #{forward.1} parent=1 // pred_fallthru
      _
    // Predicated region
    $region66: #{forward.1} parent=1 // pred_check
      _
    $region67: #{forward.1} parent=1 // pred_check_branch
      %106 = sbr.rel (0) target = $region69
    $region68: #{forward.1} parent=1 // pred_region
      _
    $region69: #{forward.1} parent=1 // pred_fallthru
      _
    // Predicated region
    $region70: #{forward.1} parent=1 // pred_check
      _
    $region71: #{forward.1} parent=1 // pred_check_branch
      %108 = sbr.rel (0) target = $region73
    $region72: #{forward.1} parent=1 // pred_region
      _
    $region73: #{forward.1} parent=1 // pred_fallthru
      _
    // Predicated region
    $region74: #{forward.1} parent=1 // pred_check
      _
    $region75: #{forward.1} parent=1 // pred_check_branch
      %110 = sbr.rel (0) target = $region77
    $region76: #{forward.1} parent=1 // pred_region
      _
    $region77: #{forward.1} parent=1 // pred_fallthru
      _
    // Predicated region
    $region78: #{forward.1} parent=1 // pred_check
      _
    $region79: #{forward.1} parent=1 // pred_check_branch
      %112 = sbr.rel (0) target = $region81
    $region80: #{forward.1} parent=1 // pred_region
      %s114 = ssub.s32 128, 128
      %115 = vsyncadd [#allocation3], %s114
      %s117 = sshll.u32 [#allocation2], 4
      %s118 = int_to_ptr.vmem [resolvable:$true] %s117
      %120 = dma.hbm_to_vmem [thread:$0]  %s39, 128, %s118, [#allocation3]
    $region81: #{forward.1} parent=1 // pred_fallthru
      _
    // Predicated region
    $region82: #{forward.1} parent=1 // pred_check
      _
    $region83: #{forward.1} parent=1 // pred_check_branch
      %122 = sbr.rel (0) target = $region85
    $region84: #{forward.1} parent=1 // pred_region
      _
    $region85: #{forward.1} parent=1 // pred_fallthru
      _
    // Predicated region
    $region86: #{forward.1} parent=1 // pred_check
      _
    $region87: #{forward.1} parent=1 // pred_check_branch
      %124 = sbr.rel (0) target = $region89
    $region88: #{forward.1} parent=1 // pred_region
      _
    $region89: #{forward.1} parent=1 // pred_fallthru
      _
    // Predicated region
    $region90: #{forward.1} parent=1 // pred_check
      _
    $region91: #{forward.1} parent=1 // pred_check_branch
      %126 = sbr.rel (0) target = $region93
    $region92: #{forward.1} parent=1 // pred_region
      _
    $region93: #{forward.1} parent=1 // pred_fallthru
      _
    // Predicated region
    $region94: #{forward.1} parent=1 // pred_check
      _
    $region95: #{forward.1} parent=1 // pred_check_branch
      %128 = sbr.rel (0) target = $region97
    $region96: #{forward.1} parent=1 // pred_region
      _
    $region97: #{forward.1} parent=1 // pred_fallthru
      _
    // Predicated region
    $region98: #{forward.1} parent=1 // pred_check
      _
    $region99: #{forward.1} parent=1 // pred_check_branch
      %130 = sbr.rel (0) target = $region101
    $region100: #{forward.1} parent=1 // pred_region
      _
    $region101: #{forward.1} parent=1 // pred_fallthru
      _
    // Predicated region
    $region102: #{forward.1} parent=1 // pred_check
      _
    $region103: #{forward.1} parent=1 // pred_check_branch
      %132 = sbr.rel (0) target = $region105
    $region104: #{forward.1} parent=1 // pred_region
      _
    $region105: #{forward.1} parent=1 // pred_fallthru
      _
    // Predicated region
    $region106: #{forward.1} parent=1 // pred_check
      _
    $region107: #{forward.1} parent=1 // pred_check_branch
      %134 = sbr.rel (0) target = $region109
    $region108: #{forward.1} parent=1 // pred_region
      _
    $region109: #{forward.1} parent=1 // pred_fallthru
      _
    // Predicated region
    $region110: #{forward.1} parent=1 // pred_check
      _
    $region111: #{forward.1} parent=1 // pred_check_branch
      %136 = sbr.rel (0) target = $region113
    $region112: #{forward.1} parent=1 // pred_region
      _
    $region113: #{forward.1} parent=1 // pred_fallthru
      _
    // Predicated region
    $region114: #{forward.1} parent=1 // pred_check
      _
    $region115: #{forward.1} parent=1 // pred_check_branch
      %138 = sbr.rel (0) target = $region117
    $region116: #{forward.1} parent=1 // pred_region
      _
    $region117: #{forward.1} parent=1 // pred_fallthru
      _
    // Predicated region
    $region118: #{forward.1} parent=1 // pred_check
      _
    $region119: #{forward.1} parent=1 // pred_check_branch
      %140 = sbr.rel (0) target = $region121
    $region120: #{forward.1} parent=1 // pred_region
      _
    $region121: #{forward.1} parent=1 // pred_fallthru
      _
    // Predicated region
    $region122: #{forward.1} parent=1 // pred_check
      _
    $region123: #{forward.1} parent=1 // pred_check_branch
      %142 = sbr.rel (0) target = $region125
    $region124: #{forward.1} parent=1 // pred_region
      _
    $region125: #{forward.1} parent=1 // pred_fallthru
      _
    // Predicated region
    $region126: #{forward.1} parent=1 // pred_check
      _
    $region127: #{forward.1} parent=1 // pred_check_branch
      %144 = sbr.rel (0) target = $region129
    $region128: #{forward.1} parent=1 // pred_region
      %145 = dma.done [#allocation3], 128
    $region129: #{forward.1} parent=1 // pred_fallthru
      _
    %v147 = vld [vmem:[%s1] sm:$0xff]
    %v148 = vld [vmem:[%s1 + $0x8] sm:$0xff]
    %v149 = vld [vmem:[%s1 + $0x10] sm:$0xff]
    %v150 = vld [vmem:[%s1 + $0x18] sm:$0xff]
    %v151 = vld [vmem:[%s1 + $0x20] sm:$0xff]
    %v152 = vld [vmem:[%s1 + $0x28] sm:$0xff]
    %v153 = vld [vmem:[%s1 + $0x30] sm:$0xff]
    %v154 = vld [vmem:[%s1 + $0x38] sm:$0xff]
    %v155 = vld [vmem:[%s5] sm:$0x1]
    %v156 = vld [vmem:[%s7] sm:$0x1]
    %vm157 = vcmask 261120
    %v158 = vsel %vm157, %v147, 0.0
    %159 = vadd.xlane.f32.xlu0 %v158
    %v160 = vpop.xlane.xlu0 %159
    %v161 = vsel %vm157, %v148, 0.0
    %162 = vadd.xlane.f32.xlu0 %v161
    %v163 = vpop.xlane.xlu0 %162
    %v164 = vsel %vm157, %v149, 0.0
    %165 = vadd.xlane.f32.xlu0 %v164
    %v166 = vpop.xlane.xlu0 %165
    %v167 = vsel %vm157, %v150, 0.0
    %168 = vadd.xlane.f32.xlu0 %v167
    %v169 = vpop.xlane.xlu0 %168
    %v170 = vsel %vm157, %v151, 0.0
    %171 = vadd.xlane.f32.xlu0 %v170
    %v172 = vpop.xlane.xlu0 %171
    %v173 = vsel %vm157, %v152, 0.0
    %174 = vadd.xlane.f32.xlu0 %v173
    %v175 = vpop.xlane.xlu0 %174
    %v176 = vsel %vm157, %v153, 0.0
    %177 = vadd.xlane.f32.xlu0 %v176
    %v178 = vpop.xlane.xlu0 %177
    %v179 = vsel %vm157, %v154, 0.0
    %180 = vadd.xlane.f32.xlu0 %v179
    %v181 = vpop.xlane.xlu0 %180
    %v182 = vrcp.pop 32.0
    %v183 = vmul.f32 %v160, %v182
    %v184 = vmul.f32 %v163, %v182
    %v185 = vmul.f32 %v166, %v182
    %v186 = vmul.f32 %v169, %v182
    %v187 = vmul.f32 %v172, %v182
    %v188 = vmul.f32 %v175, %v182
    %v189 = vmul.f32 %v178, %v182
    %v190 = vmul.f32 %v181, %v182
    %v191 = vsub.f32 %v147, %v183
    %v192 = vsub.f32 %v148, %v184
    %v193 = vsub.f32 %v149, %v185
    %v194 = vsub.f32 %v150, %v186
    %v195 = vsub.f32 %v151, %v187
    %v196 = vsub.f32 %v152, %v188
    %v197 = vsub.f32 %v153, %v189
    %v198 = vsub.f32 %v154, %v190
    %v199 = vmul.f32 %v191, %v191
    %v200 = vmul.f32 %v192, %v192
    %v201 = vmul.f32 %v193, %v193
    %v202 = vmul.f32 %v194, %v194
    %v203 = vmul.f32 %v195, %v195
    %v204 = vmul.f32 %v196, %v196
    %v205 = vmul.f32 %v197, %v197
    %v206 = vmul.f32 %v198, %v198
    %v207 = vsel %vm157, %v199, 0.0
    %208 = vadd.xlane.f32.xlu0 %v207
    %v209 = vpop.xlane.xlu0 %208
    %v210 = vsel %vm157, %v200, 0.0
    %211 = vadd.xlane.f32.xlu0 %v210
    %v212 = vpop.xlane.xlu0 %211
    %v213 = vsel %vm157, %v201, 0.0
    %214 = vadd.xlane.f32.xlu0 %v213
    %v215 = vpop.xlane.xlu0 %214
    %v216 = vsel %vm157, %v202, 0.0
    %217 = vadd.xlane.f32.xlu0 %v216
    %v218 = vpop.xlane.xlu0 %217
    %v219 = vsel %vm157, %v203, 0.0
    %220 = vadd.xlane.f32.xlu0 %v219
    %v221 = vpop.xlane.xlu0 %220
    %v222 = vsel %vm157, %v204, 0.0
    %223 = vadd.xlane.f32.xlu0 %v222
    %v224 = vpop.xlane.xlu0 %223
    %v225 = vsel %vm157, %v205, 0.0
    %226 = vadd.xlane.f32.xlu0 %v225
    %v227 = vpop.xlane.xlu0 %226
    %v228 = vsel %vm157, %v206, 0.0
    %229 = vadd.xlane.f32.xlu0 %v228
    %v230 = vpop.xlane.xlu0 %229
    %v231 = vmul.f32 %v209, %v182
    %v232 = vmul.f32 %v212, %v182
    %v233 = vmul.f32 %v215, %v182
    %v234 = vmul.f32 %v218, %v182
    %v235 = vmul.f32 %v221, %v182
    %v236 = vmul.f32 %v224, %v182
    %v237 = vmul.f32 %v227, %v182
    %v238 = vmul.f32 %v230, %v182
    %v239 = vadd.f32 %v231, 1e-12
    %v240 = vadd.f32 %v232, 1e-12
    %v241 = vadd.f32 %v233, 1e-12
    %v242 = vadd.f32 %v234, 1e-12
    %v243 = vadd.f32 %v235, 1e-12
    %v244 = vadd.f32 %v236, 1e-12
    %v245 = vadd.f32 %v237, 1e-12
    %v246 = vadd.f32 %v238, 1e-12
    %v247 = vrsqrt.pop %v239
    %v248 = vrsqrt.pop %v240
    %v249 = vrsqrt.pop %v241
    %v250 = vrsqrt.pop %v242
    %v251 = vrsqrt.pop %v243
    %v252 = vrsqrt.pop %v244
    %v253 = vrsqrt.pop %v245
    %v254 = vrsqrt.pop %v246
    %v255 = vmul.f32 %v191, %v247
    %v256 = vmul.f32 %v192, %v248
    %v257 = vmul.f32 %v193, %v249
    %v258 = vmul.f32 %v194, %v250
    %v259 = vmul.f32 %v195, %v251
    %v260 = vmul.f32 %v196, %v252
    %v261 = vmul.f32 %v197, %v253
    %v262 = vmul.f32 %v198, %v254
    %v264 = vlaneseq
    %v265 = vshrl.u32 %v264, 7
    %v266 = vsub.s32 0, %v265
    %v267 = vrot.slane %v155, %v266
    %v269 = vmul.f32 %v255, %v267
    %v270 = vmul.f32 %v256, %v267
    %v271 = vmul.f32 %v257, %v267
    %v272 = vmul.f32 %v258, %v267
    %v273 = vmul.f32 %v259, %v267
    %v274 = vmul.f32 %v260, %v267
    %v275 = vmul.f32 %v261, %v267
    %v276 = vmul.f32 %v262, %v267
    %v278 = vlaneseq
    %v279 = vshrl.u32 %v278, 7
    %v280 = vsub.s32 0, %v279
    %v281 = vrot.slane %v156, %v280
    %v283 = vadd.f32 %v269, %v281
    %v284 = vadd.f32 %v270, %v281
    %v285 = vadd.f32 %v271, %v281
    %v286 = vadd.f32 %v272, %v281
    %v287 = vadd.f32 %v273, %v281
    %v288 = vadd.f32 %v274, %v281
    %v289 = vadd.f32 %v275, %v281
    %v290 = vadd.f32 %v276, %v281
    %v291 = vld [vmem:[%s3] sm:$0xff]
    %v292 = vld [vmem:[%s3 + $0x8] sm:$0xff]
    %v293 = vld [vmem:[%s3 + $0x10] sm:$0xff]
    %v294 = vld [vmem:[%s3 + $0x18] sm:$0xff]
    %v295 = vld [vmem:[%s3 + $0x20] sm:$0xff]
    %v296 = vld [vmem:[%s3 + $0x28] sm:$0xff]
    %v297 = vld [vmem:[%s3 + $0x30] sm:$0xff]
    %v298 = vld [vmem:[%s3 + $0x38] sm:$0xff]
    %v299 = vpack.c.bf16 %v284, %v283
    %v300 = vpack.c.bf16 %v286, %v285
    %v301 = vpack.c.bf16 %v288, %v287
    %v302 = vpack.c.bf16 %v290, %v289
    %v303 = vld [vmem:[%s9] sm:$0xf]
    %v304 = vld [vmem:[%s9 + $0x4] sm:$0xf]
    %v305 = vld [vmem:[%s9 + $0x8] sm:$0xf]
    %v306 = vld [vmem:[%s9 + $0xc] sm:$0xf]
    %v307 = vld [vmem:[%s11] sm:$0x1]
    %v309 = vlaneseq
    %v310 = vshrl.u32 %v309, 7
    %v311 = vsub.s32 0, %v310
    %v312 = vrot.slane %v307, %v311
    %v318 = vunpack.c.l.b16 %v303
    %v319 = vunpack.c.l.b16 %v304
    %v320 = vunpack.c.l.b16 %v305
    %v321 = vunpack.c.l.b16 %v306
    %v322 = vpack.c.b16 %v319, %v318
    %v323 = vpack.c.b16 %v321, %v320
    %v327 = vsel %vm157, %v299, 0
    %v330 = vsel %vm157, %v300, 0
    %v333 = vsel %vm157, %v301, 0
    %v336 = vsel %vm157, %v302, 0
    %338 = vmatprep.subr.bf16.mxu0 0
    %339 = vmatpush1.bf16.msra.mxu0 0
    %340 = vmatprep.subr.bf16.mxu0 0
    %341 = vmatpush1.bf16.msra.mxu0 0
    %342 = vmatprep.subr.bf16.mxu0 0
    %343 = vmatpush1.bf16.msra.mxu0 0
    %344 = vmatprep.subr.bf16.mxu0 0
    %345 = vmatpush1.bf16.msra.mxu0 0
    %346 = vmatprep.subr.bf16.mxu0 0
    %347 = vmatpush1.bf16.msra.mxu0 0
    %348 = vmatprep.subr.bf16.mxu0 0
    %349 = vmatpush1.bf16.msra.mxu0 0
    %350 = vmatprep.subr.bf16.mxu0 0
    %351 = vmatpush1.bf16.msra.mxu0 %v323
    %352 = vmatprep.subr.bf16.mxu0 0
    %353 = vmatpush1.bf16.msra.mxu0 %v322
    %354 = vmatprep.subr.bf16.mxu0 0
    %355 = vmatpush2.bf16.msra.mxu0 0
    %356 = vmatprep.subr.bf16.mxu0 0
    %357 = vmatpush2.bf16.msra.mxu0 0
    %358 = vmatprep.subr.bf16.mxu0 0
    %359 = vmatpush2.bf16.msra.mxu0 0
    %360 = vmatprep.subr.bf16.mxu0 0
    %361 = vmatpush2.bf16.msra.mxu0 0
    %362 = vmatprep.subr.bf16.mxu0 0
    %363 = vmatpush2.bf16.msra.mxu0 0
    %364 = vmatprep.subr.bf16.mxu0 0
    %365 = vmatpush2.bf16.msra.mxu0 0
    %366 = vmatprep.subr.bf16.mxu0 0
    %367 = vmatpush2.bf16.msra.mxu0 0
    %368 = vmatprep.subr.bf16.mxu0 0
    %369 = vmatpush2.bf16.msra.mxu0 0
    %370 = vmatprep.mubr.bf16.mxu0 0
    %371 = vmatmul.mubr.bf16.gmra.mxu0 %v327
    %v372 = vpop.f32.mrf.mxu0
    %v373 = vadd.f32 %v312, %v372
    %v374 = vpop.f32.mrf.mxu0
    %v375 = vpop.f32.mrf.mxu0
    %v376 = vadd.f32 %v312, %v375
    %v377 = vpop.f32.mrf.mxu0
    %378 = vmatprep.mubr.bf16.mxu0 0
    %379 = vmatmul.mubr.bf16.gmra.mxu0 %v330
    %v380 = vpop.f32.mrf.mxu0
    %v381 = vadd.f32 %v312, %v380
    %v382 = vpop.f32.mrf.mxu0
    %v383 = vpop.f32.mrf.mxu0
    %v384 = vadd.f32 %v312, %v383
    %v385 = vpop.f32.mrf.mxu0
    %386 = vmatprep.mubr.bf16.mxu0 0
    %387 = vmatmul.mubr.bf16.gmra.mxu0 %v333
    %v388 = vpop.f32.mrf.mxu0
    %v389 = vadd.f32 %v312, %v388
    %v390 = vpop.f32.mrf.mxu0
    %v391 = vpop.f32.mrf.mxu0
    %v392 = vadd.f32 %v312, %v391
    %v393 = vpop.f32.mrf.mxu0
    %394 = vmatprep.mubr.bf16.mxu0 0
    %395 = vmatmul.mubr.bf16.gmra.mxu0 %v336
    %v396 = vpop.f32.mrf.mxu0
    %v397 = vadd.f32 %v312, %v396
    %v398 = vpop.f32.mrf.mxu0
    %v399 = vpop.f32.mrf.mxu0
    %v400 = vadd.f32 %v312, %v399
    %v401 = vpop.f32.mrf.mxu0
    %402 = vdwg.mxu0
    %v403 = vmul.f32 %v373, 0.25
    %v404 = vmul.f32 %v376, 0.25
    %v405 = vmul.f32 %v381, 0.25
    %v406 = vmul.f32 %v384, 0.25
    %v407 = vmul.f32 %v389, 0.25
    %v408 = vmul.f32 %v392, 0.25
    %v409 = vmul.f32 %v397, 0.25
    %v410 = vmul.f32 %v400, 0.25
    %v411 = vpack.c.bf16 %v404, %v403
    %v412 = vpack.c.bf16 %v406, %v405
    %v413 = vpack.c.bf16 %v408, %v407
    %v414 = vpack.c.bf16 %v410, %v409
    %v415 = vpack.c.bf16 %v376, %v373
    %v416 = vpack.c.bf16 %v384, %v381
    %v417 = vpack.c.bf16 %v392, %v389
    %v418 = vpack.c.bf16 %v400, %v397
    %423 = vrot.lane.b32.xlu0 %v415, 96
    %v424 = vpop.permute.xlu0 %423
    %425 = vrot.lane.b32.xlu0 %v416, 96
    %v426 = vpop.permute.xlu0 %425
    %427 = vrot.lane.b32.xlu0 %v417, 96
    %v428 = vpop.permute.xlu0 %427
    %429 = vrot.lane.b32.xlu0 %v418, 96
    %v430 = vpop.permute.xlu0 %429
    %vm431 = vcmask 130048
    %v433 = vsel %vm431, %v411, 0
    %v436 = vsel %vm431, %v412, 0
    %v439 = vsel %vm431, %v413, 0
    %v442 = vsel %vm431, %v414, 0
    %v445 = vsel %vm431, %v424, 0
    %v448 = vsel %vm431, %v426, 0
    %v451 = vsel %vm431, %v428, 0
    %v454 = vsel %vm431, %v430, 0
    %456 = vmatprep.subr.bf16.mxu0 0
    %457 = vmatpush1.bf16.xpose.msra.mxu0 0
    %458 = vmatprep.subr.bf16.mxu0 0
    %459 = vmatpush1.bf16.xpose.msra.mxu0 0
    %460 = vmatprep.subr.bf16.mxu0 0
    %461 = vmatpush1.bf16.xpose.msra.mxu0 0
    %462 = vmatprep.subr.bf16.mxu0 0
    %463 = vmatpush1.bf16.xpose.msra.mxu0 0
    %464 = vmatprep.subr.bf16.mxu0 0
    %465 = vmatpush1.bf16.xpose.msra.mxu0 %v454
    %466 = vmatprep.subr.bf16.mxu0 0
    %467 = vmatpush1.bf16.xpose.msra.mxu0 %v451
    %468 = vmatprep.subr.bf16.mxu0 0
    %469 = vmatpush1.bf16.xpose.msra.mxu0 %v448
    %470 = vmatprep.subr.bf16.mxu0 0
    %471 = vmatpush1.bf16.xpose.msra.mxu0 %v445
    %472 = vmatprep.subr.bf16.mxu0 0
    %473 = vmatpush2.bf16.xpose.msra.mxu0 0
    %474 = vmatprep.subr.bf16.mxu0 0
    %475 = vmatpush2.bf16.xpose.msra.mxu0 0
    %476 = vmatprep.subr.bf16.mxu0 0
    %477 = vmatpush2.bf16.xpose.msra.mxu0 0
    %478 = vmatprep.subr.bf16.mxu0 0
    %479 = vmatpush2.bf16.xpose.msra.mxu0 0
    %480 = vmatprep.subr.bf16.mxu0 0
    %481 = vmatpush2.bf16.xpose.msra.mxu0 0
    %482 = vmatprep.subr.bf16.mxu0 0
    %483 = vmatpush2.bf16.xpose.msra.mxu0 0
    %484 = vmatprep.subr.bf16.mxu0 0
    %485 = vmatpush2.bf16.xpose.msra.mxu0 0
    %486 = vmatprep.subr.bf16.mxu0 0
    %487 = vmatpush2.bf16.xpose.msra.mxu0 0
    %488 = vmatprep.mubr.bf16.mxu0 0
    %489 = vmatmul.mubr.bf16.gmra.mxu0 %v433
    %v490 = vpop.f32.mrf.mxu0
    %v491 = vadd.f32 %v291, %v490
    %v492 = vpop.f32.mrf.mxu0
    %v493 = vpop.f32.mrf.mxu0
    %v494 = vadd.f32 %v292, %v493
    %v495 = vpop.f32.mrf.mxu0
    %496 = vmatprep.mubr.bf16.mxu0 0
    %497 = vmatmul.mubr.bf16.gmra.mxu0 %v436
    %v498 = vpop.f32.mrf.mxu0
    %v499 = vadd.f32 %v293, %v498
    %v500 = vpop.f32.mrf.mxu0
    %v501 = vpop.f32.mrf.mxu0
    %v502 = vadd.f32 %v294, %v501
    %v503 = vpop.f32.mrf.mxu0
    %504 = vmatprep.mubr.bf16.mxu0 0
    %505 = vmatmul.mubr.bf16.gmra.mxu0 %v439
    %v506 = vpop.f32.mrf.mxu0
    %v507 = vadd.f32 %v295, %v506
    %v508 = vpop.f32.mrf.mxu0
    %v509 = vpop.f32.mrf.mxu0
    %v510 = vadd.f32 %v296, %v509
    %v511 = vpop.f32.mrf.mxu0
    %512 = vmatprep.mubr.bf16.mxu0 0
    %513 = vmatmul.mubr.bf16.gmra.mxu0 %v442
    %v514 = vpop.f32.mrf.mxu0
    %v515 = vadd.f32 %v297, %v514
    %v516 = vpop.f32.mrf.mxu0
    %v517 = vpop.f32.mrf.mxu0
    %v518 = vadd.f32 %v298, %v517
    %v519 = vpop.f32.mrf.mxu0
    %520 = vdwg.mxu0
    %vm521 = vcmask 523264
    %v522 = vsel %vm521, %v491, -inf
    %523 = vmax.xlane.f32.xlu0 %v522
    %v524 = vpop.xlane.xlu0 %523
    %v525 = vsel %vm521, %v494, -inf
    %526 = vmax.xlane.f32.xlu0 %v525
    %v527 = vpop.xlane.xlu0 %526
    %v528 = vsel %vm521, %v499, -inf
    %529 = vmax.xlane.f32.xlu0 %v528
    %v530 = vpop.xlane.xlu0 %529
    %v531 = vsel %vm521, %v502, -inf
    %532 = vmax.xlane.f32.xlu0 %v531
    %v533 = vpop.xlane.xlu0 %532
    %v534 = vsel %vm521, %v507, -inf
    %535 = vmax.xlane.f32.xlu0 %v534
    %v536 = vpop.xlane.xlu0 %535
    %v537 = vsel %vm521, %v510, -inf
    %538 = vmax.xlane.f32.xlu0 %v537
    %v539 = vpop.xlane.xlu0 %538
    %v540 = vsel %vm521, %v515, -inf
    %541 = vmax.xlane.f32.xlu0 %v540
    %v542 = vpop.xlane.xlu0 %541
    %v543 = vsel %vm521, %v518, -inf
    %544 = vmax.xlane.f32.xlu0 %v543
    %v545 = vpop.xlane.xlu0 %544
    %v546 = vsub.f32 %v491, %v524
    %v547 = vsub.f32 %v494, %v527
    %v548 = vsub.f32 %v499, %v530
    %v549 = vsub.f32 %v502, %v533
    %v550 = vsub.f32 %v507, %v536
    %v551 = vsub.f32 %v510, %v539
    %v552 = vsub.f32 %v515, %v542
    %v553 = vsub.f32 %v518, %v545
    %v554 = vmul.f32 %v546, 1.442695
    %v555 = vpow.pop %v554
    %v556 = vmul.f32 %v547, 1.442695
    %v557 = vpow.pop %v556
    %v558 = vmul.f32 %v548, 1.442695
    %v559 = vpow.pop %v558
    %v560 = vmul.f32 %v549, 1.442695
    %v561 = vpow.pop %v560
    %v562 = vmul.f32 %v550, 1.442695
    %v563 = vpow.pop %v562
    %v564 = vmul.f32 %v551, 1.442695
    %v565 = vpow.pop %v564
    %v566 = vmul.f32 %v552, 1.442695
    %v567 = vpow.pop %v566
    %v568 = vmul.f32 %v553, 1.442695
    %v569 = vpow.pop %v568
    %v570 = vsel %vm521, %v555, 0.0
    %571 = vadd.xlane.f32.xlu0 %v570
    %v572 = vpop.xlane.xlu0 %571
    %v573 = vsel %vm521, %v557, 0.0
    %574 = vadd.xlane.f32.xlu0 %v573
    %v575 = vpop.xlane.xlu0 %574
    %v576 = vsel %vm521, %v559, 0.0
    %577 = vadd.xlane.f32.xlu0 %v576
    %v578 = vpop.xlane.xlu0 %577
    %v579 = vsel %vm521, %v561, 0.0
    %580 = vadd.xlane.f32.xlu0 %v579
    %v581 = vpop.xlane.xlu0 %580
    %v582 = vsel %vm521, %v563, 0.0
    %583 = vadd.xlane.f32.xlu0 %v582
    %v584 = vpop.xlane.xlu0 %583
    %v585 = vsel %vm521, %v565, 0.0
    %586 = vadd.xlane.f32.xlu0 %v585
    %v587 = vpop.xlane.xlu0 %586
    %v588 = vsel %vm521, %v567, 0.0
    %589 = vadd.xlane.f32.xlu0 %v588
    %v590 = vpop.xlane.xlu0 %589
    %v591 = vsel %vm521, %v569, 0.0
    %592 = vadd.xlane.f32.xlu0 %v591
    %v593 = vpop.xlane.xlu0 %592
    %v594 = vrcp.pop %v572
    %v595 = vrcp.pop %v575
    %v596 = vrcp.pop %v578
    %v597 = vrcp.pop %v581
    %v598 = vrcp.pop %v584
    %v599 = vrcp.pop %v587
    %v600 = vrcp.pop %v590
    %v601 = vrcp.pop %v593
    %v602 = vmul.f32 %v555, %v594
    %v603 = vmul.f32 %v557, %v595
    %v604 = vmul.f32 %v559, %v596
    %v605 = vmul.f32 %v561, %v597
    %v606 = vmul.f32 %v563, %v598
    %v607 = vmul.f32 %v565, %v599
    %v608 = vmul.f32 %v567, %v600
    %v609 = vmul.f32 %v569, %v601
    %v610 = vpack.c.bf16 %v603, %v602
    %v611 = vpack.c.bf16 %v605, %v604
    %v612 = vpack.c.bf16 %v607, %v606
    %v613 = vpack.c.bf16 %v609, %v608
    %614 = vrot.lane.b32.xlu0 %v415, 64
    %v615 = vpop.permute.xlu0 %614
    %616 = vrot.lane.b32.xlu0 %v416, 64
    %v617 = vpop.permute.xlu0 %616
    %618 = vrot.lane.b32.xlu0 %v417, 64
    %v619 = vpop.permute.xlu0 %618
    %620 = vrot.lane.b32.xlu0 %v418, 64
    %v621 = vpop.permute.xlu0 %620
    %v627 = vsel %vm521, %v610, 0
    %v630 = vsel %vm521, %v611, 0
    %v633 = vsel %vm521, %v612, 0
    %v636 = vsel %vm521, %v613, 0
    %638 = vmatprep.subr.bf16.mxu0 0
    %639 = vmatpush1.bf16.msra.mxu0 0
    %640 = vmatprep.subr.bf16.mxu0 0
    %641 = vmatpush1.bf16.msra.mxu0 0
    %642 = vmatprep.subr.bf16.mxu0 0
    %643 = vmatpush1.bf16.msra.mxu0 0
    %644 = vmatprep.subr.bf16.mxu0 0
    %645 = vmatpush1.bf16.msra.mxu0 0
    %646 = vmatprep.subr.bf16.mxu0 0
    %647 = vmatpush1.bf16.msra.mxu0 %v621
    %648 = vmatprep.subr.bf16.mxu0 0
    %649 = vmatpush1.bf16.msra.mxu0 %v619
    %650 = vmatprep.subr.bf16.mxu0 0
    %651 = vmatpush1.bf16.msra.mxu0 %v617
    %652 = vmatprep.subr.bf16.mxu0 0
    %653 = vmatpush1.bf16.msra.mxu0 %v615
    %654 = vmatprep.subr.bf16.mxu0 0
    %655 = vmatpush2.bf16.msra.mxu0 0
    %656 = vmatprep.subr.bf16.mxu0 0
    %657 = vmatpush2.bf16.msra.mxu0 0
    %658 = vmatprep.subr.bf16.mxu0 0
    %659 = vmatpush2.bf16.msra.mxu0 0
    %660 = vmatprep.subr.bf16.mxu0 0
    %661 = vmatpush2.bf16.msra.mxu0 0
    %662 = vmatprep.subr.bf16.mxu0 0
    %663 = vmatpush2.bf16.msra.mxu0 0
    %664 = vmatprep.subr.bf16.mxu0 0
    %665 = vmatpush2.bf16.msra.mxu0 0
    %666 = vmatprep.subr.bf16.mxu0 0
    %667 = vmatpush2.bf16.msra.mxu0 0
    %668 = vmatprep.subr.bf16.mxu0 0
    %669 = vmatpush2.bf16.msra.mxu0 0
    %670 = vmatprep.mubr.bf16.mxu0 0
    %671 = vmatmul.mubr.bf16.gmra.mxu0 %v627
    %v672 = vpop.f32.mrf.mxu0
    %v673 = vadd.f32 0.0, %v672
    %v674 = vpop.f32.mrf.mxu0
    %v675 = vpop.f32.mrf.mxu0
    %v676 = vadd.f32 0.0, %v675
    %v677 = vpop.f32.mrf.mxu0
    %678 = vmatprep.mubr.bf16.mxu0 0
    %679 = vmatmul.mubr.bf16.gmra.mxu0 %v630
    %v680 = vpop.f32.mrf.mxu0
    %v681 = vadd.f32 0.0, %v680
    %v682 = vpop.f32.mrf.mxu0
    %v683 = vpop.f32.mrf.mxu0
    %v684 = vadd.f32 0.0, %v683
    %v685 = vpop.f32.mrf.mxu0
    %686 = vmatprep.mubr.bf16.mxu0 0
    %687 = vmatmul.mubr.bf16.gmra.mxu0 %v633
    %v688 = vpop.f32.mrf.mxu0
    %v689 = vadd.f32 0.0, %v688
    %v690 = vpop.f32.mrf.mxu0
    %v691 = vpop.f32.mrf.mxu0
    %v692 = vadd.f32 0.0, %v691
    %v693 = vpop.f32.mrf.mxu0
    %694 = vmatprep.mubr.bf16.mxu0 0
    %695 = vmatmul.mubr.bf16.gmra.mxu0 %v636
    %v696 = vpop.f32.mrf.mxu0
    %v697 = vadd.f32 0.0, %v696
    %v698 = vpop.f32.mrf.mxu0
    %v699 = vpop.f32.mrf.mxu0
    %v700 = vadd.f32 0.0, %v699
    %v701 = vpop.f32.mrf.mxu0
    %702 = vdwg.mxu0
    %707 = vrot.lane.b32.xlu0 %v411, 112
    %v708 = vpop.permute.xlu0 %707
    %709 = vrot.lane.b32.xlu0 %v412, 112
    %v710 = vpop.permute.xlu0 %709
    %711 = vrot.lane.b32.xlu0 %v413, 112
    %v712 = vpop.permute.xlu0 %711
    %713 = vrot.lane.b32.xlu0 %v414, 112
    %v714 = vpop.permute.xlu0 %713
    %715 = vrot.lane.b32.xlu0 %v415, 80
    %v716 = vpop.permute.xlu0 %715
    %717 = vrot.lane.b32.xlu0 %v416, 80
    %v718 = vpop.permute.xlu0 %717
    %719 = vrot.lane.b32.xlu0 %v417, 80
    %v720 = vpop.permute.xlu0 %719
    %721 = vrot.lane.b32.xlu0 %v418, 80
    %v722 = vpop.permute.xlu0 %721
    %v724 = vsel %vm431, %v708, 0
    %v727 = vsel %vm431, %v710, 0
    %v730 = vsel %vm431, %v712, 0
    %v733 = vsel %vm431, %v714, 0
    %v736 = vsel %vm431, %v716, 0
    %v739 = vsel %vm431, %v718, 0
    %v742 = vsel %vm431, %v720, 0
    %v745 = vsel %vm431, %v722, 0
    %747 = vmatprep.subr.bf16.mxu0 0
    %748 = vmatpush1.bf16.xpose.msra.mxu0 0
    %749 = vmatprep.subr.bf16.mxu0 0
    %750 = vmatpush1.bf16.xpose.msra.mxu0 0
    %751 = vmatprep.subr.bf16.mxu0 0
    %752 = vmatpush1.bf16.xpose.msra.mxu0 0
    %753 = vmatprep.subr.bf16.mxu0 0
    %754 = vmatpush1.bf16.xpose.msra.mxu0 0
    %755 = vmatprep.subr.bf16.mxu0 0
    %756 = vmatpush1.bf16.xpose.msra.mxu0 %v745
    %757 = vmatprep.subr.bf16.mxu0 0
    %758 = vmatpush1.bf16.xpose.msra.mxu0 %v742
    %759 = vmatprep.subr.bf16.mxu0 0
    %760 = vmatpush1.bf16.xpose.msra.mxu0 %v739
    %761 = vmatprep.subr.bf16.mxu0 0
    %762 = vmatpush1.bf16.xpose.msra.mxu0 %v736
    %763 = vmatprep.subr.bf16.mxu0 0
    %764 = vmatpush2.bf16.xpose.msra.mxu0 0
    %765 = vmatprep.subr.bf16.mxu0 0
    %766 = vmatpush2.bf16.xpose.msra.mxu0 0
    %767 = vmatprep.subr.bf16.mxu0 0
    %768 = vmatpush2.bf16.xpose.msra.mxu0 0
    %769 = vmatprep.subr.bf16.mxu0 0
    %770 = vmatpush2.bf16.xpose.msra.mxu0 0
    %771 = vmatprep.subr.bf16.mxu0 0
    %772 = vmatpush2.bf16.xpose.msra.mxu0 0
    %773 = vmatprep.subr.bf16.mxu0 0
    %774 = vmatpush2.bf16.xpose.msra.mxu0 0
    %775 = vmatprep.subr.bf16.mxu0 0
    %776 = vmatpush2.bf16.xpose.msra.mxu0 0
    %777 = vmatprep.subr.bf16.mxu0 0
    %778 = vmatpush2.bf16.xpose.msra.mxu0 0
    %779 = vmatprep.mubr.bf16.mxu0 0
    %780 = vmatmul.mubr.bf16.gmra.mxu0 %v724
    %v781 = vpop.f32.mrf.mxu0
    %v782 = vadd.f32 %v291, %v781
    %v783 = vpop.f32.mrf.mxu0
    %v784 = vpop.f32.mrf.mxu0
    %v785 = vadd.f32 %v292, %v784
    %v786 = vpop.f32.mrf.mxu0
    %787 = vmatprep.mubr.bf16.mxu0 0
    %788 = vmatmul.mubr.bf16.gmra.mxu0 %v727
    %v789 = vpop.f32.mrf.mxu0
    %v790 = vadd.f32 %v293, %v789
    %v791 = vpop.f32.mrf.mxu0
    %v792 = vpop.f32.mrf.mxu0
    %v793 = vadd.f32 %v294, %v792
    %v794 = vpop.f32.mrf.mxu0
    %795 = vmatprep.mubr.bf16.mxu0 0
    %796 = vmatmul.mubr.bf16.gmra.mxu0 %v730
    %v797 = vpop.f32.mrf.mxu0
    %v798 = vadd.f32 %v295, %v797
    %v799 = vpop.f32.mrf.mxu0
    %v800 = vpop.f32.mrf.mxu0
    %v801 = vadd.f32 %v296, %v800
    %v802 = vpop.f32.mrf.mxu0
    %803 = vmatprep.mubr.bf16.mxu0 0
    %804 = vmatmul.mubr.bf16.gmra.mxu0 %v733
    %v805 = vpop.f32.mrf.mxu0
    %v806 = vadd.f32 %v297, %v805
    %v807 = vpop.f32.mrf.mxu0
    %v808 = vpop.f32.mrf.mxu0
    %v809 = vadd.f32 %v298, %v808
    %v810 = vpop.f32.mrf.mxu0
    %811 = vdwg.mxu0
    %v812 = vsel %vm521, %v782, -inf
    %813 = vmax.xlane.f32.xlu0 %v812
    %v814 = vpop.xlane.xlu0 %813
    %v815 = vsel %vm521, %v785, -inf
    %816 = vmax.xlane.f32.xlu0 %v815
    %v817 = vpop.xlane.xlu0 %816
    %v818 = vsel %vm521, %v790, -inf
    %819 = vmax.xlane.f32.xlu0 %v818
    %v820 = vpop.xlane.xlu0 %819
    %v821 = vsel %vm521, %v793, -inf
    %822 = vmax.xlane.f32.xlu0 %v821
    %v823 = vpop.xlane.xlu0 %822
    %v824 = vsel %vm521, %v798, -inf
    %825 = vmax.xlane.f32.xlu0 %v824
    %v826 = vpop.xlane.xlu0 %825
    %v827 = vsel %vm521, %v801, -inf
    %828 = vmax.xlane.f32.xlu0 %v827
    %v829 = vpop.xlane.xlu0 %828
    %v830 = vsel %vm521, %v806, -inf
    %831 = vmax.xlane.f32.xlu0 %v830
    %v832 = vpop.xlane.xlu0 %831
    %v833 = vsel %vm521, %v809, -inf
    %834 = vmax.xlane.f32.xlu0 %v833
    %v835 = vpop.xlane.xlu0 %834
    %v836 = vsub.f32 %v782, %v814
    %v837 = vsub.f32 %v785, %v817
    %v838 = vsub.f32 %v790, %v820
    %v839 = vsub.f32 %v793, %v823
    %v840 = vsub.f32 %v798, %v826
    %v841 = vsub.f32 %v801, %v829
    %v842 = vsub.f32 %v806, %v832
    %v843 = vsub.f32 %v809, %v835
    %v844 = vmul.f32 %v836, 1.442695
    %v845 = vpow.pop %v844
    %v846 = vmul.f32 %v837, 1.442695
    %v847 = vpow.pop %v846
    %v848 = vmul.f32 %v838, 1.442695
    %v849 = vpow.pop %v848
    %v850 = vmul.f32 %v839, 1.442695
    %v851 = vpow.pop %v850
    %v852 = vmul.f32 %v840, 1.442695
    %v853 = vpow.pop %v852
    %v854 = vmul.f32 %v841, 1.442695
    %v855 = vpow.pop %v854
    %v856 = vmul.f32 %v842, 1.442695
    %v857 = vpow.pop %v856
    %v858 = vmul.f32 %v843, 1.442695
    %v859 = vpow.pop %v858
    %v860 = vsel %vm521, %v845, 0.0
    %861 = vadd.xlane.f32.xlu0 %v860
    %v862 = vpop.xlane.xlu0 %861
    %v863 = vsel %vm521, %v847, 0.0
    %864 = vadd.xlane.f32.xlu0 %v863
    %v865 = vpop.xlane.xlu0 %864
    %v866 = vsel %vm521, %v849, 0.0
    %867 = vadd.xlane.f32.xlu0 %v866
    %v868 = vpop.xlane.xlu0 %867
    %v869 = vsel %vm521, %v851, 0.0
    %870 = vadd.xlane.f32.xlu0 %v869
    %v871 = vpop.xlane.xlu0 %870
    %v872 = vsel %vm521, %v853, 0.0
    %873 = vadd.xlane.f32.xlu0 %v872
    %v874 = vpop.xlane.xlu0 %873
    %v875 = vsel %vm521, %v855, 0.0
    %876 = vadd.xlane.f32.xlu0 %v875
    %v877 = vpop.xlane.xlu0 %876
    %v878 = vsel %vm521, %v857, 0.0
    %879 = vadd.xlane.f32.xlu0 %v878
    %v880 = vpop.xlane.xlu0 %879
    %v881 = vsel %vm521, %v859, 0.0
    %882 = vadd.xlane.f32.xlu0 %v881
    %v883 = vpop.xlane.xlu0 %882
    %v884 = vrcp.pop %v862
    %v885 = vrcp.pop %v865
    %v886 = vrcp.pop %v868
    %v887 = vrcp.pop %v871
    %v888 = vrcp.pop %v874
    %v889 = vrcp.pop %v877
    %v890 = vrcp.pop %v880
    %v891 = vrcp.pop %v883
    %v892 = vmul.f32 %v845, %v884
    %v893 = vmul.f32 %v847, %v885
    %v894 = vmul.f32 %v849, %v886
    %v895 = vmul.f32 %v851, %v887
    %v896 = vmul.f32 %v853, %v888
    %v897 = vmul.f32 %v855, %v889
    %v898 = vmul.f32 %v857, %v890
    %v899 = vmul.f32 %v859, %v891
    %v900 = vpack.c.bf16 %v893, %v892
    %v901 = vpack.c.bf16 %v895, %v894
    %v902 = vpack.c.bf16 %v897, %v896
    %v903 = vpack.c.bf16 %v899, %v898
    %904 = vrot.lane.b32.xlu0 %v415, 48
    %v905 = vpop.permute.xlu0 %904
    %906 = vrot.lane.b32.xlu0 %v416, 48
    %v907 = vpop.permute.xlu0 %906
    %908 = vrot.lane.b32.xlu0 %v417, 48
    %v909 = vpop.permute.xlu0 %908
    %910 = vrot.lane.b32.xlu0 %v418, 48
    %v911 = vpop.permute.xlu0 %910
    %v917 = vsel %vm521, %v900, 0
    %v920 = vsel %vm521, %v901, 0
    %v923 = vsel %vm521, %v902, 0
    %v926 = vsel %vm521, %v903, 0
    %928 = vmatprep.subr.bf16.mxu0 0
    %929 = vmatpush1.bf16.msra.mxu0 0
    %930 = vmatprep.subr.bf16.mxu0 0
    %931 = vmatpush1.bf16.msra.mxu0 0
    %932 = vmatprep.subr.bf16.mxu0 0
    %933 = vmatpush1.bf16.msra.mxu0 0
    %934 = vmatprep.subr.bf16.mxu0 0
    %935 = vmatpush1.bf16.msra.mxu0 0
    %936 = vmatprep.subr.bf16.mxu0 0
    %937 = vmatpush1.bf16.msra.mxu0 %v911
    %938 = vmatprep.subr.bf16.mxu0 0
    %939 = vmatpush1.bf16.msra.mxu0 %v909
    %940 = vmatprep.subr.bf16.mxu0 0
    %941 = vmatpush1.bf16.msra.mxu0 %v907
    %942 = vmatprep.subr.bf16.mxu0 0
    %943 = vmatpush1.bf16.msra.mxu0 %v905
    %944 = vmatprep.subr.bf16.mxu0 0
    %945 = vmatpush2.bf16.msra.mxu0 0
    %946 = vmatprep.subr.bf16.mxu0 0
    %947 = vmatpush2.bf16.msra.mxu0 0
    %948 = vmatprep.subr.bf16.mxu0 0
    %949 = vmatpush2.bf16.msra.mxu0 0
    %950 = vmatprep.subr.bf16.mxu0 0
    %951 = vmatpush2.bf16.msra.mxu0 0
    %952 = vmatprep.subr.bf16.mxu0 0
    %953 = vmatpush2.bf16.msra.mxu0 0
    %954 = vmatprep.subr.bf16.mxu0 0
    %955 = vmatpush2.bf16.msra.mxu0 0
    %956 = vmatprep.subr.bf16.mxu0 0
    %957 = vmatpush2.bf16.msra.mxu0 0
    %958 = vmatprep.subr.bf16.mxu0 0
    %959 = vmatpush2.bf16.msra.mxu0 0
    %960 = vmatprep.mubr.bf16.mxu0 0
    %961 = vmatmul.mubr.bf16.gmra.mxu0 %v917
    %v962 = vpop.f32.mrf.mxu0
    %v963 = vadd.f32 0.0, %v962
    %v964 = vpop.f32.mrf.mxu0
    %v965 = vpop.f32.mrf.mxu0
    %v966 = vadd.f32 0.0, %v965
    %v967 = vpop.f32.mrf.mxu0
    %968 = vmatprep.mubr.bf16.mxu0 0
    %969 = vmatmul.mubr.bf16.gmra.mxu0 %v920
    %v970 = vpop.f32.mrf.mxu0
    %v971 = vadd.f32 0.0, %v970
    %v972 = vpop.f32.mrf.mxu0
    %v973 = vpop.f32.mrf.mxu0
    %v974 = vadd.f32 0.0, %v973
    %v975 = vpop.f32.mrf.mxu0
    %976 = vmatprep.mubr.bf16.mxu0 0
    %977 = vmatmul.mubr.bf16.gmra.mxu0 %v923
    %v978 = vpop.f32.mrf.mxu0
    %v979 = vadd.f32 0.0, %v978
    %v980 = vpop.f32.mrf.mxu0
    %v981 = vpop.f32.mrf.mxu0
    %v982 = vadd.f32 0.0, %v981
    %v983 = vpop.f32.mrf.mxu0
    %984 = vmatprep.mubr.bf16.mxu0 0
    %985 = vmatmul.mubr.bf16.gmra.mxu0 %v926
    %v986 = vpop.f32.mrf.mxu0
    %v987 = vadd.f32 0.0, %v986
    %v988 = vpop.f32.mrf.mxu0
    %v989 = vpop.f32.mrf.mxu0
    %v990 = vadd.f32 0.0, %v989
    %v991 = vpop.f32.mrf.mxu0
    %992 = vdwg.mxu0
    %1001 = vrot.lane.b32.xlu0 %v963, 16
    %v1002 = vpop.permute.xlu0 %1001
    %1003 = vrot.lane.b32.xlu0 %v966, 16
    %v1004 = vpop.permute.xlu0 %1003
    %1005 = vrot.lane.b32.xlu0 %v971, 16
    %v1006 = vpop.permute.xlu0 %1005
    %1007 = vrot.lane.b32.xlu0 %v974, 16
    %v1008 = vpop.permute.xlu0 %1007
    %1009 = vrot.lane.b32.xlu0 %v979, 16
    %v1010 = vpop.permute.xlu0 %1009
    %1011 = vrot.lane.b32.xlu0 %v982, 16
    %v1012 = vpop.permute.xlu0 %1011
    %1013 = vrot.lane.b32.xlu0 %v987, 16
    %v1014 = vpop.permute.xlu0 %1013
    %1015 = vrot.lane.b32.xlu0 %v990, 16
    %v1016 = vpop.permute.xlu0 %1015
    %v1025 = vsel %vm431, %v673, %v1002
    %v1026 = vsel %vm431, %v676, %v1004
    %v1027 = vsel %vm431, %v681, %v1006
    %v1028 = vsel %vm431, %v684, %v1008
    %v1029 = vsel %vm431, %v689, %v1010
    %v1030 = vsel %vm431, %v692, %v1012
    %v1031 = vsel %vm431, %v697, %v1014
    %v1032 = vsel %vm431, %v700, %v1016
    %v1033 = vpack.c.bf16 %v1026, %v1025
    %v1034 = vpack.c.bf16 %v1028, %v1027
    %v1035 = vpack.c.bf16 %v1030, %v1029
    %v1036 = vpack.c.bf16 %v1032, %v1031
    %v1037 = vld [vmem:[%s13] sm:$0xf]
    %v1038 = vld [vmem:[%s13 + $0x4] sm:$0xf]
    %v1039 = vld [vmem:[%s13 + $0x8] sm:$0xf]
    %v1040 = vld [vmem:[%s13 + $0xc] sm:$0xf]
    %v1041 = vld [vmem:[%s15] sm:$0x1]
    %v1043 = vlaneseq
    %v1044 = vshrl.u32 %v1043, 7
    %v1045 = vsub.s32 0, %v1044
    %v1046 = vrot.slane %v1041, %v1045
    %v1052 = vunpack.c.l.b16 %v1037
    %v1053 = vunpack.c.l.b16 %v1038
    %v1054 = vunpack.c.l.b16 %v1039
    %v1055 = vunpack.c.l.b16 %v1040
    %v1056 = vpack.c.b16 %v1053, %v1052
    %v1057 = vpack.c.b16 %v1055, %v1054
    %v1061 = vsel %vm157, %v1033, 0
    %v1064 = vsel %vm157, %v1034, 0
    %v1067 = vsel %vm157, %v1035, 0
    %v1070 = vsel %vm157, %v1036, 0
    %1072 = vmatprep.subr.bf16.mxu0 0
    %1073 = vmatpush1.bf16.msra.mxu0 0
    %1074 = vmatprep.subr.bf16.mxu0 0
    %1075 = vmatpush1.bf16.msra.mxu0 0
    %1076 = vmatprep.subr.bf16.mxu0 0
    %1077 = vmatpush1.bf16.msra.mxu0 0
    %1078 = vmatprep.subr.bf16.mxu0 0
    %1079 = vmatpush1.bf16.msra.mxu0 0
    %1080 = vmatprep.subr.bf16.mxu0 0
    %1081 = vmatpush1.bf16.msra.mxu0 0
    %1082 = vmatprep.subr.bf16.mxu0 0
    %1083 = vmatpush1.bf16.msra.mxu0 0
    %1084 = vmatprep.subr.bf16.mxu0 0
    %1085 = vmatpush1.bf16.msra.mxu0 %v1057
    %1086 = vmatprep.subr.bf16.mxu0 0
    %1087 = vmatpush1.bf16.msra.mxu0 %v1056
    %1088 = vmatprep.subr.bf16.mxu0 0
    %1089 = vmatpush2.bf16.msra.mxu0 0
    %1090 = vmatprep.subr.bf16.mxu0 0
    %1091 = vmatpush2.bf16.msra.mxu0 0
    %1092 = vmatprep.subr.bf16.mxu0 0
    %1093 = vmatpush2.bf16.msra.mxu0 0
    %1094 = vmatprep.subr.bf16.mxu0 0
    %1095 = vmatpush2.bf16.msra.mxu0 0
    %1096 = vmatprep.subr.bf16.mxu0 0
    %1097 = vmatpush2.bf16.msra.mxu0 0
    %1098 = vmatprep.subr.bf16.mxu0 0
    %1099 = vmatpush2.bf16.msra.mxu0 0
    %1100 = vmatprep.subr.bf16.mxu0 0
    %1101 = vmatpush2.bf16.msra.mxu0 0
    %1102 = vmatprep.subr.bf16.mxu0 0
    %1103 = vmatpush2.bf16.msra.mxu0 0
    %1104 = vmatprep.mubr.bf16.mxu0 0
    %1105 = vmatmul.mubr.bf16.gmra.mxu0 %v1061
    %v1106 = vpop.f32.mrf.mxu0
    %v1107 = vadd.f32 %v1046, %v1106
    %v1108 = vpop.f32.mrf.mxu0
    %v1109 = vpop.f32.mrf.mxu0
    %v1110 = vadd.f32 %v1046, %v1109
    %v1111 = vpop.f32.mrf.mxu0
    %1112 = vmatprep.mubr.bf16.mxu0 0
    %1113 = vmatmul.mubr.bf16.gmra.mxu0 %v1064
    %v1114 = vpop.f32.mrf.mxu0
    %v1115 = vadd.f32 %v1046, %v1114
    %v1116 = vpop.f32.mrf.mxu0
    %v1117 = vpop.f32.mrf.mxu0
    %v1118 = vadd.f32 %v1046, %v1117
    %v1119 = vpop.f32.mrf.mxu0
    %1120 = vmatprep.mubr.bf16.mxu0 0
    %1121 = vmatmul.mubr.bf16.gmra.mxu0 %v1067
    %v1122 = vpop.f32.mrf.mxu0
    %v1123 = vadd.f32 %v1046, %v1122
    %v1124 = vpop.f32.mrf.mxu0
    %v1125 = vpop.f32.mrf.mxu0
    %v1126 = vadd.f32 %v1046, %v1125
    %v1127 = vpop.f32.mrf.mxu0
    %1128 = vmatprep.mubr.bf16.mxu0 0
    %1129 = vmatmul.mubr.bf16.gmra.mxu0 %v1070
    %v1130 = vpop.f32.mrf.mxu0
    %v1131 = vadd.f32 %v1046, %v1130
    %v1132 = vpop.f32.mrf.mxu0
    %v1133 = vpop.f32.mrf.mxu0
    %v1134 = vadd.f32 %v1046, %v1133
    %v1135 = vpop.f32.mrf.mxu0
    %1136 = vdwg.mxu0
    %v1137 = vadd.f32 %v1107, %v283
    %v1138 = vadd.f32 %v1110, %v284
    %v1139 = vadd.f32 %v1115, %v285
    %v1140 = vadd.f32 %v1118, %v286
    %v1141 = vadd.f32 %v1123, %v287
    %v1142 = vadd.f32 %v1126, %v288
    %v1143 = vadd.f32 %v1131, %v289
    %v1144 = vadd.f32 %v1134, %v290
    %v1145 = vld [vmem:[%s17] sm:$0x1]
    %v1146 = vld [vmem:[%s19] sm:$0x1]
    %v1147 = vsel %vm157, %v1137, 0.0
    %1148 = vadd.xlane.f32.xlu0 %v1147
    %v1149 = vpop.xlane.xlu0 %1148
    %v1150 = vsel %vm157, %v1138, 0.0
    %1151 = vadd.xlane.f32.xlu0 %v1150
    %v1152 = vpop.xlane.xlu0 %1151
    %v1153 = vsel %vm157, %v1139, 0.0
    %1154 = vadd.xlane.f32.xlu0 %v1153
    %v1155 = vpop.xlane.xlu0 %1154
    %v1156 = vsel %vm157, %v1140, 0.0
    %1157 = vadd.xlane.f32.xlu0 %v1156
    %v1158 = vpop.xlane.xlu0 %1157
    %v1159 = vsel %vm157, %v1141, 0.0
    %1160 = vadd.xlane.f32.xlu0 %v1159
    %v1161 = vpop.xlane.xlu0 %1160
    %v1162 = vsel %vm157, %v1142, 0.0
    %1163 = vadd.xlane.f32.xlu0 %v1162
    %v1164 = vpop.xlane.xlu0 %1163
    %v1165 = vsel %vm157, %v1143, 0.0
    %1166 = vadd.xlane.f32.xlu0 %v1165
    %v1167 = vpop.xlane.xlu0 %1166
    %v1168 = vsel %vm157, %v1144, 0.0
    %1169 = vadd.xlane.f32.xlu0 %v1168
    %v1170 = vpop.xlane.xlu0 %1169
    %v1171 = vmul.f32 %v1149, %v182
    %v1172 = vmul.f32 %v1152, %v182
    %v1173 = vmul.f32 %v1155, %v182
    %v1174 = vmul.f32 %v1158, %v182
    %v1175 = vmul.f32 %v1161, %v182
    %v1176 = vmul.f32 %v1164, %v182
    %v1177 = vmul.f32 %v1167, %v182
    %v1178 = vmul.f32 %v1170, %v182
    %v1179 = vsub.f32 %v1137, %v1171
    %v1180 = vsub.f32 %v1138, %v1172
    %v1181 = vsub.f32 %v1139, %v1173
    %v1182 = vsub.f32 %v1140, %v1174
    %v1183 = vsub.f32 %v1141, %v1175
    %v1184 = vsub.f32 %v1142, %v1176
    %v1185 = vsub.f32 %v1143, %v1177
    %v1186 = vsub.f32 %v1144, %v1178
    %v1187 = vmul.f32 %v1179, %v1179
    %v1188 = vmul.f32 %v1180, %v1180
    %v1189 = vmul.f32 %v1181, %v1181
    %v1190 = vmul.f32 %v1182, %v1182
    %v1191 = vmul.f32 %v1183, %v1183
    %v1192 = vmul.f32 %v1184, %v1184
    %v1193 = vmul.f32 %v1185, %v1185
    %v1194 = vmul.f32 %v1186, %v1186
    %v1195 = vsel %vm157, %v1187, 0.0
    %1196 = vadd.xlane.f32.xlu0 %v1195
    %v1197 = vpop.xlane.xlu0 %1196
    %v1198 = vsel %vm157, %v1188, 0.0
    %1199 = vadd.xlane.f32.xlu0 %v1198
    %v1200 = vpop.xlane.xlu0 %1199
    %v1201 = vsel %vm157, %v1189, 0.0
    %1202 = vadd.xlane.f32.xlu0 %v1201
    %v1203 = vpop.xlane.xlu0 %1202
    %v1204 = vsel %vm157, %v1190, 0.0
    %1205 = vadd.xlane.f32.xlu0 %v1204
    %v1206 = vpop.xlane.xlu0 %1205
    %v1207 = vsel %vm157, %v1191, 0.0
    %1208 = vadd.xlane.f32.xlu0 %v1207
    %v1209 = vpop.xlane.xlu0 %1208
    %v1210 = vsel %vm157, %v1192, 0.0
    %1211 = vadd.xlane.f32.xlu0 %v1210
    %v1212 = vpop.xlane.xlu0 %1211
    %v1213 = vsel %vm157, %v1193, 0.0
    %1214 = vadd.xlane.f32.xlu0 %v1213
    %v1215 = vpop.xlane.xlu0 %1214
    %v1216 = vsel %vm157, %v1194, 0.0
    %1217 = vadd.xlane.f32.xlu0 %v1216
    %v1218 = vpop.xlane.xlu0 %1217
    %v1219 = vmul.f32 %v1197, %v182
    %v1220 = vmul.f32 %v1200, %v182
    %v1221 = vmul.f32 %v1203, %v182
    %v1222 = vmul.f32 %v1206, %v182
    %v1223 = vmul.f32 %v1209, %v182
    %v1224 = vmul.f32 %v1212, %v182
    %v1225 = vmul.f32 %v1215, %v182
    %v1226 = vmul.f32 %v1218, %v182
    %v1227 = vadd.f32 %v1219, 1e-12
    %v1228 = vadd.f32 %v1220, 1e-12
    %v1229 = vadd.f32 %v1221, 1e-12
    %v1230 = vadd.f32 %v1222, 1e-12
    %v1231 = vadd.f32 %v1223, 1e-12
    %v1232 = vadd.f32 %v1224, 1e-12
    %v1233 = vadd.f32 %v1225, 1e-12
    %v1234 = vadd.f32 %v1226, 1e-12
    %v1235 = vrsqrt.pop %v1227
    %v1236 = vrsqrt.pop %v1228
    %v1237 = vrsqrt.pop %v1229
    %v1238 = vrsqrt.pop %v1230
    %v1239 = vrsqrt.pop %v1231
    %v1240 = vrsqrt.pop %v1232
    %v1241 = vrsqrt.pop %v1233
    %v1242 = vrsqrt.pop %v1234
    %v1243 = vmul.f32 %v1179, %v1235
    %v1244 = vmul.f32 %v1180, %v1236
    %v1245 = vmul.f32 %v1181, %v1237
    %v1246 = vmul.f32 %v1182, %v1238
    %v1247 = vmul.f32 %v1183, %v1239
    %v1248 = vmul.f32 %v1184, %v1240
    %v1249 = vmul.f32 %v1185, %v1241
    %v1250 = vmul.f32 %v1186, %v1242
    %v1252 = vlaneseq
    %v1253 = vshrl.u32 %v1252, 7
    %v1254 = vsub.s32 0, %v1253
    %v1255 = vrot.slane %v1145, %v1254
    %v1257 = vmul.f32 %v1243, %v1255
    %v1258 = vmul.f32 %v1244, %v1255
    %v1259 = vmul.f32 %v1245, %v1255
    %v1260 = vmul.f32 %v1246, %v1255
    %v1261 = vmul.f32 %v1247, %v1255
    %v1262 = vmul.f32 %v1248, %v1255
    %v1263 = vmul.f32 %v1249, %v1255
    %v1264 = vmul.f32 %v1250, %v1255
    %v1266 = vlaneseq
    %v1267 = vshrl.u32 %v1266, 7
    %v1268 = vsub.s32 0, %v1267
    %v1269 = vrot.slane %v1146, %v1268
    %v1271 = vadd.f32 %v1257, %v1269
    %v1272 = vadd.f32 %v1258, %v1269
    %v1273 = vadd.f32 %v1259, %v1269
    %v1274 = vadd.f32 %v1260, %v1269
    %v1275 = vadd.f32 %v1261, %v1269
    %v1276 = vadd.f32 %v1262, %v1269
    %v1277 = vadd.f32 %v1263, %v1269
    %v1278 = vadd.f32 %v1264, %v1269
    %v1279 = vpack.c.bf16 %v1272, %v1271
    %v1280 = vpack.c.bf16 %v1274, %v1273
    %v1281 = vpack.c.bf16 %v1276, %v1275
    %v1282 = vpack.c.bf16 %v1278, %v1277
    %v1283 = vld [vmem:[%s21] sm:$0xf]
    %v1284 = vld [vmem:[%s21 + $0x4] sm:$0xf]
    %v1285 = vld [vmem:[%s21 + $0x8] sm:$0xf]
    %v1286 = vld [vmem:[%s21 + $0xc] sm:$0xf]
    %v1287 = vld [vmem:[%s23] sm:$0x1]
    %v1289 = vlaneseq
    %v1290 = vshrl.u32 %v1289, 7
    %v1291 = vsub.s32 0, %v1290
    %v1292 = vrot.slane %v1287, %v1291
    %v1298 = vunpack.c.l.b16 %v1283
    %v1299 = vunpack.c.l.b16 %v1284
    %v1300 = vunpack.c.l.b16 %v1285
    %v1301 = vunpack.c.l.b16 %v1286
    %v1302 = vpack.c.b16 %v1299, %v1298
    %v1303 = vpack.c.b16 %v1301, %v1300
    %v1307 = vsel %vm157, %v1279, 0
    %v1310 = vsel %vm157, %v1280, 0
    %v1313 = vsel %vm157, %v1281, 0
    %v1316 = vsel %vm157, %v1282, 0
    %1318 = vmatprep.subr.bf16.mxu0 0
    %1319 = vmatpush1.bf16.msra.mxu0 0
    %1320 = vmatprep.subr.bf16.mxu0 0
    %1321 = vmatpush1.bf16.msra.mxu0 0
    %1322 = vmatprep.subr.bf16.mxu0 0
    %1323 = vmatpush1.bf16.msra.mxu0 0
    %1324 = vmatprep.subr.bf16.mxu0 0
    %1325 = vmatpush1.bf16.msra.mxu0 0
    %1326 = vmatprep.subr.bf16.mxu0 0
    %1327 = vmatpush1.bf16.msra.mxu0 0
    %1328 = vmatprep.subr.bf16.mxu0 0
    %1329 = vmatpush1.bf16.msra.mxu0 0
    %1330 = vmatprep.subr.bf16.mxu0 0
    %1331 = vmatpush1.bf16.msra.mxu0 %v1303
    %1332 = vmatprep.subr.bf16.mxu0 0
    %1333 = vmatpush1.bf16.msra.mxu0 %v1302
    %1334 = vmatprep.subr.bf16.mxu0 0
    %1335 = vmatpush2.bf16.msra.mxu0 0
    %1336 = vmatprep.subr.bf16.mxu0 0
    %1337 = vmatpush2.bf16.msra.mxu0 0
    %1338 = vmatprep.subr.bf16.mxu0 0
    %1339 = vmatpush2.bf16.msra.mxu0 0
    %1340 = vmatprep.subr.bf16.mxu0 0
    %1341 = vmatpush2.bf16.msra.mxu0 0
    %1342 = vmatprep.subr.bf16.mxu0 0
    %1343 = vmatpush2.bf16.msra.mxu0 0
    %1344 = vmatprep.subr.bf16.mxu0 0
    %1345 = vmatpush2.bf16.msra.mxu0 0
    %1346 = vmatprep.subr.bf16.mxu0 0
    %1347 = vmatpush2.bf16.msra.mxu0 0
    %1348 = vmatprep.subr.bf16.mxu0 0
    %1349 = vmatpush2.bf16.msra.mxu0 0
    %1350 = vmatprep.mubr.bf16.mxu0 0
    %1351 = vmatmul.mubr.bf16.gmra.mxu0 %v1307
    %v1352 = vpop.f32.mrf.mxu0
    %v1353 = vadd.f32 %v1292, %v1352
    %v1354 = vpop.f32.mrf.mxu0
    %v1355 = vpop.f32.mrf.mxu0
    %v1356 = vadd.f32 %v1292, %v1355
    %v1357 = vpop.f32.mrf.mxu0
    %1358 = vmatprep.mubr.bf16.mxu0 0
    %1359 = vmatmul.mubr.bf16.gmra.mxu0 %v1310
    %v1360 = vpop.f32.mrf.mxu0
    %v1361 = vadd.f32 %v1292, %v1360
    %v1362 = vpop.f32.mrf.mxu0
    %v1363 = vpop.f32.mrf.mxu0
    %v1364 = vadd.f32 %v1292, %v1363
    %v1365 = vpop.f32.mrf.mxu0
    %1366 = vmatprep.mubr.bf16.mxu0 0
    %1367 = vmatmul.mubr.bf16.gmra.mxu0 %v1313
    %v1368 = vpop.f32.mrf.mxu0
    %v1369 = vadd.f32 %v1292, %v1368
    %v1370 = vpop.f32.mrf.mxu0
    %v1371 = vpop.f32.mrf.mxu0
    %v1372 = vadd.f32 %v1292, %v1371
    %v1373 = vpop.f32.mrf.mxu0
    %1374 = vmatprep.mubr.bf16.mxu0 0
    %1375 = vmatmul.mubr.bf16.gmra.mxu0 %v1316
    %v1376 = vpop.f32.mrf.mxu0
    %v1377 = vadd.f32 %v1292, %v1376
    %v1378 = vpop.f32.mrf.mxu0
    %v1379 = vpop.f32.mrf.mxu0
    %v1380 = vadd.f32 %v1292, %v1379
    %v1381 = vpop.f32.mrf.mxu0
    %1382 = vdwg.mxu0
    %v1383 = vmul.f32 %v1353, 0.5
    %v1384 = vmul.f32 %v1356, 0.5
    %v1385 = vmul.f32 %v1361, 0.5
    %v1386 = vmul.f32 %v1364, 0.5
    %v1387 = vmul.f32 %v1369, 0.5
    %v1388 = vmul.f32 %v1372, 0.5
    %v1389 = vmul.f32 %v1377, 0.5
    %v1390 = vmul.f32 %v1380, 0.5
    %v1391 = vmul.f32 %v1353, 0.044715
    %v1392 = vmul.f32 %v1356, 0.044715
    %v1393 = vmul.f32 %v1361, 0.044715
    %v1394 = vmul.f32 %v1364, 0.044715
    %v1395 = vmul.f32 %v1369, 0.044715
    %v1396 = vmul.f32 %v1372, 0.044715
    %v1397 = vmul.f32 %v1377, 0.044715
    %v1398 = vmul.f32 %v1380, 0.044715
    %v1399 = vmul.f32 %v1391, %v1353
    %v1400 = vmul.f32 %v1392, %v1356
    %v1401 = vmul.f32 %v1393, %v1361
    %v1402 = vmul.f32 %v1394, %v1364
    %v1403 = vmul.f32 %v1395, %v1369
    %v1404 = vmul.f32 %v1396, %v1372
    %v1405 = vmul.f32 %v1397, %v1377
    %v1406 = vmul.f32 %v1398, %v1380
    %v1407 = vmul.f32 %v1399, %v1353
    %v1408 = vmul.f32 %v1400, %v1356
    %v1409 = vmul.f32 %v1401, %v1361
    %v1410 = vmul.f32 %v1402, %v1364
    %v1411 = vmul.f32 %v1403, %v1369
    %v1412 = vmul.f32 %v1404, %v1372
    %v1413 = vmul.f32 %v1405, %v1377
    %v1414 = vmul.f32 %v1406, %v1380
    %v1415 = vadd.f32 %v1353, %v1407
    %v1416 = vadd.f32 %v1356, %v1408
    %v1417 = vadd.f32 %v1361, %v1409
    %v1418 = vadd.f32 %v1364, %v1410
    %v1419 = vadd.f32 %v1369, %v1411
    %v1420 = vadd.f32 %v1372, %v1412
    %v1421 = vadd.f32 %v1377, %v1413
    %v1422 = vadd.f32 %v1380, %v1414
    %v1423 = vmul.f32 %v1415, 0.7978846
    %v1424 = vmul.f32 %v1416, 0.7978846
    %v1425 = vmul.f32 %v1417, 0.7978846
    %v1426 = vmul.f32 %v1418, 0.7978846
    %v1427 = vmul.f32 %v1419, 0.7978846
    %v1428 = vmul.f32 %v1420, 0.7978846
    %v1429 = vmul.f32 %v1421, 0.7978846
    %v1430 = vmul.f32 %v1422, 0.7978846
    %v1431 = vtanh.pop %v1423
    %v1432 = vtanh.pop %v1424
    %v1433 = vtanh.pop %v1425
    %v1434 = vtanh.pop %v1426
    %v1435 = vtanh.pop %v1427
    %v1436 = vtanh.pop %v1428
    %v1437 = vtanh.pop %v1429
    %v1438 = vtanh.pop %v1430
    %v1439 = vadd.f32 %v1431, 1.0
    %v1440 = vadd.f32 %v1432, 1.0
    %v1441 = vadd.f32 %v1433, 1.0
    %v1442 = vadd.f32 %v1434, 1.0
    %v1443 = vadd.f32 %v1435, 1.0
    %v1444 = vadd.f32 %v1436, 1.0
    %v1445 = vadd.f32 %v1437, 1.0
    %v1446 = vadd.f32 %v1438, 1.0
    %v1447 = vmul.f32 %v1383, %v1439
    %v1448 = vmul.f32 %v1384, %v1440
    %v1449 = vmul.f32 %v1385, %v1441
    %v1450 = vmul.f32 %v1386, %v1442
    %v1451 = vmul.f32 %v1387, %v1443
    %v1452 = vmul.f32 %v1388, %v1444
    %v1453 = vmul.f32 %v1389, %v1445
    %v1454 = vmul.f32 %v1390, %v1446
    %v1455 = vpack.c.bf16 %v1448, %v1447
    %v1456 = vpack.c.bf16 %v1450, %v1449
    %v1457 = vpack.c.bf16 %v1452, %v1451
    %v1458 = vpack.c.bf16 %v1454, %v1453
    %v1459 = vld [vmem:[%s25] sm:$0xf]
    %v1460 = vld [vmem:[%s25 + $0x4] sm:$0xf]
    %v1461 = vld [vmem:[%s25 + $0x8] sm:$0xf]
    %v1462 = vld [vmem:[%s25 + $0xc] sm:$0xf]
    %v1463 = vld [vmem:[%s25 + $0x10] sm:$0xf]
    %v1464 = vld [vmem:[%s25 + $0x14] sm:$0xf]
    %v1465 = vld [vmem:[%s25 + $0x18] sm:$0xf]
    %v1466 = vld [vmem:[%s25 + $0x1c] sm:$0xf]
    %v1467 = vld [vmem:[%s27] sm:$0x1]
    %v1469 = vlaneseq
    %v1470 = vshrl.u32 %v1469, 7
    %v1471 = vsub.s32 0, %v1470
    %v1472 = vrot.slane %v1467, %v1471
    %v1482 = vunpack.c.l.b16 %v1459
    %v1483 = vunpack.c.l.b16 %v1460
    %v1484 = vunpack.c.l.b16 %v1461
    %v1485 = vunpack.c.l.b16 %v1462
    %v1486 = vunpack.c.l.b16 %v1463
    %v1487 = vunpack.c.l.b16 %v1464
    %v1488 = vunpack.c.l.b16 %v1465
    %v1489 = vunpack.c.l.b16 %v1466
    %v1490 = vpack.c.b16 %v1483, %v1482
    %v1491 = vpack.c.b16 %v1485, %v1484
    %v1492 = vpack.c.b16 %v1487, %v1486
    %v1493 = vpack.c.b16 %v1489, %v1488
    %v1499 = vsel %vm521, %v1455, 0
    %v1502 = vsel %vm521, %v1456, 0
    %v1505 = vsel %vm521, %v1457, 0
    %v1508 = vsel %vm521, %v1458, 0
    %1510 = vmatprep.subr.bf16.mxu0 0
    %1511 = vmatpush1.bf16.msra.mxu0 0
    %1512 = vmatprep.subr.bf16.mxu0 0
    %1513 = vmatpush1.bf16.msra.mxu0 0
    %1514 = vmatprep.subr.bf16.mxu0 0
    %1515 = vmatpush1.bf16.msra.mxu0 0
    %1516 = vmatprep.subr.bf16.mxu0 0
    %1517 = vmatpush1.bf16.msra.mxu0 0
    %1518 = vmatprep.subr.bf16.mxu0 0
    %1519 = vmatpush1.bf16.msra.mxu0 %v1493
    %1520 = vmatprep.subr.bf16.mxu0 0
    %1521 = vmatpush1.bf16.msra.mxu0 %v1492
    %1522 = vmatprep.subr.bf16.mxu0 0
    %1523 = vmatpush1.bf16.msra.mxu0 %v1491
    %1524 = vmatprep.subr.bf16.mxu0 0
    %1525 = vmatpush1.bf16.msra.mxu0 %v1490
    %1526 = vmatprep.subr.bf16.mxu0 0
    %1527 = vmatpush2.bf16.msra.mxu0 0
    %1528 = vmatprep.subr.bf16.mxu0 0
    %1529 = vmatpush2.bf16.msra.mxu0 0
    %1530 = vmatprep.subr.bf16.mxu0 0
    %1531 = vmatpush2.bf16.msra.mxu0 0
    %1532 = vmatprep.subr.bf16.mxu0 0
    %1533 = vmatpush2.bf16.msra.mxu0 0
    %1534 = vmatprep.subr.bf16.mxu0 0
    %1535 = vmatpush2.bf16.msra.mxu0 0
    %1536 = vmatprep.subr.bf16.mxu0 0
    %1537 = vmatpush2.bf16.msra.mxu0 0
    %1538 = vmatprep.subr.bf16.mxu0 0
    %1539 = vmatpush2.bf16.msra.mxu0 0
    %1540 = vmatprep.subr.bf16.mxu0 0
    %1541 = vmatpush2.bf16.msra.mxu0 0
    %1542 = vmatprep.mubr.bf16.mxu0 0
    %1543 = vmatmul.mubr.bf16.gmra.mxu0 %v1499
    %v1544 = vpop.f32.mrf.mxu0
    %v1545 = vadd.f32 %v1472, %v1544
    %v1546 = vpop.f32.mrf.mxu0
    %v1547 = vpop.f32.mrf.mxu0
    %v1548 = vadd.f32 %v1472, %v1547
    %v1549 = vpop.f32.mrf.mxu0
    %1550 = vmatprep.mubr.bf16.mxu0 0
    %1551 = vmatmul.mubr.bf16.gmra.mxu0 %v1502
    %v1552 = vpop.f32.mrf.mxu0
    %v1553 = vadd.f32 %v1472, %v1552
    %v1554 = vpop.f32.mrf.mxu0
    %v1555 = vpop.f32.mrf.mxu0
    %v1556 = vadd.f32 %v1472, %v1555
    %v1557 = vpop.f32.mrf.mxu0
    %1558 = vmatprep.mubr.bf16.mxu0 0
    %1559 = vmatmul.mubr.bf16.gmra.mxu0 %v1505
    %v1560 = vpop.f32.mrf.mxu0
    %v1561 = vadd.f32 %v1472, %v1560
    %v1562 = vpop.f32.mrf.mxu0
    %v1563 = vpop.f32.mrf.mxu0
    %v1564 = vadd.f32 %v1472, %v1563
    %v1565 = vpop.f32.mrf.mxu0
    %1566 = vmatprep.mubr.bf16.mxu0 0
    %1567 = vmatmul.mubr.bf16.gmra.mxu0 %v1508
    %v1568 = vpop.f32.mrf.mxu0
    %v1569 = vadd.f32 %v1472, %v1568
    %v1570 = vpop.f32.mrf.mxu0
    %v1571 = vpop.f32.mrf.mxu0
    %v1572 = vadd.f32 %v1472, %v1571
    %v1573 = vpop.f32.mrf.mxu0
    %1574 = vdwg.mxu0
    %v1575 = vadd.f32 %v1545, %v1271
    %v1576 = vadd.f32 %v1548, %v1272
    %v1577 = vadd.f32 %v1553, %v1273
    %v1578 = vadd.f32 %v1556, %v1274
    %v1579 = vadd.f32 %v1561, %v1275
    %v1580 = vadd.f32 %v1564, %v1276
    %v1581 = vadd.f32 %v1569, %v1277
    %v1582 = vadd.f32 %v1572, %v1278
    %v1583 = vld [vmem:[%s29] sm:$0x1]
    %v1584 = vld [vmem:[%s31] sm:$0x1]
    %v1585 = vsel %vm157, %v1575, 0.0
    %1586 = vadd.xlane.f32.xlu0 %v1585
    %v1587 = vpop.xlane.xlu0 %1586
    %v1588 = vsel %vm157, %v1576, 0.0
    %1589 = vadd.xlane.f32.xlu0 %v1588
    %v1590 = vpop.xlane.xlu0 %1589
    %v1591 = vsel %vm157, %v1577, 0.0
    %1592 = vadd.xlane.f32.xlu0 %v1591
    %v1593 = vpop.xlane.xlu0 %1592
    %v1594 = vsel %vm157, %v1578, 0.0
    %1595 = vadd.xlane.f32.xlu0 %v1594
    %v1596 = vpop.xlane.xlu0 %1595
    %v1597 = vsel %vm157, %v1579, 0.0
    %1598 = vadd.xlane.f32.xlu0 %v1597
    %v1599 = vpop.xlane.xlu0 %1598
    %v1600 = vsel %vm157, %v1580, 0.0
    %1601 = vadd.xlane.f32.xlu0 %v1600
    %v1602 = vpop.xlane.xlu0 %1601
    %v1603 = vsel %vm157, %v1581, 0.0
    %1604 = vadd.xlane.f32.xlu0 %v1603
    %v1605 = vpop.xlane.xlu0 %1604
    %v1606 = vsel %vm157, %v1582, 0.0
    %1607 = vadd.xlane.f32.xlu0 %v1606
    %v1608 = vpop.xlane.xlu0 %1607
    %v1609 = vmul.f32 %v1587, %v182
    %v1610 = vmul.f32 %v1590, %v182
    %v1611 = vmul.f32 %v1593, %v182
    %v1612 = vmul.f32 %v1596, %v182
    %v1613 = vmul.f32 %v1599, %v182
    %v1614 = vmul.f32 %v1602, %v182
    %v1615 = vmul.f32 %v1605, %v182
    %v1616 = vmul.f32 %v1608, %v182
    %v1617 = vsub.f32 %v1575, %v1609
    %v1618 = vsub.f32 %v1576, %v1610
    %v1619 = vsub.f32 %v1577, %v1611
    %v1620 = vsub.f32 %v1578, %v1612
    %v1621 = vsub.f32 %v1579, %v1613
    %v1622 = vsub.f32 %v1580, %v1614
    %v1623 = vsub.f32 %v1581, %v1615
    %v1624 = vsub.f32 %v1582, %v1616
    %v1625 = vmul.f32 %v1617, %v1617
    %v1626 = vmul.f32 %v1618, %v1618
    %v1627 = vmul.f32 %v1619, %v1619
    %v1628 = vmul.f32 %v1620, %v1620
    %v1629 = vmul.f32 %v1621, %v1621
    %v1630 = vmul.f32 %v1622, %v1622
    %v1631 = vmul.f32 %v1623, %v1623
    %v1632 = vmul.f32 %v1624, %v1624
    %v1633 = vsel %vm157, %v1625, 0.0
    %1634 = vadd.xlane.f32.xlu0 %v1633
    %v1635 = vpop.xlane.xlu0 %1634
    %v1636 = vsel %vm157, %v1626, 0.0
    %1637 = vadd.xlane.f32.xlu0 %v1636
    %v1638 = vpop.xlane.xlu0 %1637
    %v1639 = vsel %vm157, %v1627, 0.0
    %1640 = vadd.xlane.f32.xlu0 %v1639
    %v1641 = vpop.xlane.xlu0 %1640
    %v1642 = vsel %vm157, %v1628, 0.0
    %1643 = vadd.xlane.f32.xlu0 %v1642
    %v1644 = vpop.xlane.xlu0 %1643
    %v1645 = vsel %vm157, %v1629, 0.0
    %1646 = vadd.xlane.f32.xlu0 %v1645
    %v1647 = vpop.xlane.xlu0 %1646
    %v1648 = vsel %vm157, %v1630, 0.0
    %1649 = vadd.xlane.f32.xlu0 %v1648
    %v1650 = vpop.xlane.xlu0 %1649
    %v1651 = vsel %vm157, %v1631, 0.0
    %1652 = vadd.xlane.f32.xlu0 %v1651
    %v1653 = vpop.xlane.xlu0 %1652
    %v1654 = vsel %vm157, %v1632, 0.0
    %1655 = vadd.xlane.f32.xlu0 %v1654
    %v1656 = vpop.xlane.xlu0 %1655
    %v1657 = vmul.f32 %v1635, %v182
    %v1658 = vmul.f32 %v1638, %v182
    %v1659 = vmul.f32 %v1641, %v182
    %v1660 = vmul.f32 %v1644, %v182
    %v1661 = vmul.f32 %v1647, %v182
    %v1662 = vmul.f32 %v1650, %v182
    %v1663 = vmul.f32 %v1653, %v182
    %v1664 = vmul.f32 %v1656, %v182
    %v1665 = vadd.f32 %v1657, 1e-12
    %v1666 = vadd.f32 %v1658, 1e-12
    %v1667 = vadd.f32 %v1659, 1e-12
    %v1668 = vadd.f32 %v1660, 1e-12
    %v1669 = vadd.f32 %v1661, 1e-12
    %v1670 = vadd.f32 %v1662, 1e-12
    %v1671 = vadd.f32 %v1663, 1e-12
    %v1672 = vadd.f32 %v1664, 1e-12
    %v1673 = vrsqrt.pop %v1665
    %v1674 = vrsqrt.pop %v1666
    %v1675 = vrsqrt.pop %v1667
    %v1676 = vrsqrt.pop %v1668
    %v1677 = vrsqrt.pop %v1669
    %v1678 = vrsqrt.pop %v1670
    %v1679 = vrsqrt.pop %v1671
    %v1680 = vrsqrt.pop %v1672
    %v1681 = vmul.f32 %v1617, %v1673
    %v1682 = vmul.f32 %v1618, %v1674
    %v1683 = vmul.f32 %v1619, %v1675
    %v1684 = vmul.f32 %v1620, %v1676
    %v1685 = vmul.f32 %v1621, %v1677
    %v1686 = vmul.f32 %v1622, %v1678
    %v1687 = vmul.f32 %v1623, %v1679
    %v1688 = vmul.f32 %v1624, %v1680
    %v1690 = vlaneseq
    %v1691 = vshrl.u32 %v1690, 7
    %v1692 = vsub.s32 0, %v1691
    %v1693 = vrot.slane %v1583, %v1692
    %v1695 = vmul.f32 %v1681, %v1693
    %v1696 = vmul.f32 %v1682, %v1693
    %v1697 = vmul.f32 %v1683, %v1693
    %v1698 = vmul.f32 %v1684, %v1693
    %v1699 = vmul.f32 %v1685, %v1693
    %v1700 = vmul.f32 %v1686, %v1693
    %v1701 = vmul.f32 %v1687, %v1693
    %v1702 = vmul.f32 %v1688, %v1693
    %v1704 = vlaneseq
    %v1705 = vshrl.u32 %v1704, 7
    %v1706 = vsub.s32 0, %v1705
    %v1707 = vrot.slane %v1584, %v1706
    %v1709 = vadd.f32 %v1695, %v1707
    %v1710 = vadd.f32 %v1696, %v1707
    %v1711 = vadd.f32 %v1697, %v1707
    %v1712 = vadd.f32 %v1698, %v1707
    %v1713 = vadd.f32 %v1699, %v1707
    %v1714 = vadd.f32 %v1700, %v1707
    %v1715 = vadd.f32 %v1701, %v1707
    %v1716 = vadd.f32 %v1702, %v1707
    %v1717 = vpack.c.bf16 %v1710, %v1709
    %v1718 = vpack.c.bf16 %v1712, %v1711
    %v1719 = vpack.c.bf16 %v1714, %v1713
    %v1720 = vpack.c.bf16 %v1716, %v1715
    %s1721 = scalar_lea.vmem %s9, 16
    %v1722 = vld [vmem:[%s1721] sm:$0xf]
    %v1723 = vld [vmem:[%s1721 + $0x4] sm:$0xf]
    %v1724 = vld [vmem:[%s1721 + $0x8] sm:$0xf]
    %v1725 = vld [vmem:[%s1721 + $0xc] sm:$0xf]
    %s1726 = scalar_lea.vmem %s11, 1
    %v1727 = vld [vmem:[%s1726] sm:$0x1]
    %v1729 = vlaneseq
    %v1730 = vshrl.u32 %v1729, 7
    %v1731 = vsub.s32 0, %v1730
    %v1732 = vrot.slane %v1727, %v1731
    %v1738 = vunpack.c.l.b16 %v1722
    %v1739 = vunpack.c.l.b16 %v1723
    %v1740 = vunpack.c.l.b16 %v1724
    %v1741 = vunpack.c.l.b16 %v1725
    %v1742 = vpack.c.b16 %v1739, %v1738
    %v1743 = vpack.c.b16 %v1741, %v1740
    %v1747 = vsel %vm157, %v1717, 0
    %v1750 = vsel %vm157, %v1718, 0
    %v1753 = vsel %vm157, %v1719, 0
    %v1756 = vsel %vm157, %v1720, 0
    %1758 = vmatprep.subr.bf16.mxu0 0
    %1759 = vmatpush1.bf16.msra.mxu0 0
    %1760 = vmatprep.subr.bf16.mxu0 0
    %1761 = vmatpush1.bf16.msra.mxu0 0
    %1762 = vmatprep.subr.bf16.mxu0 0
    %1763 = vmatpush1.bf16.msra.mxu0 0
    %1764 = vmatprep.subr.bf16.mxu0 0
    %1765 = vmatpush1.bf16.msra.mxu0 0
    %1766 = vmatprep.subr.bf16.mxu0 0
    %1767 = vmatpush1.bf16.msra.mxu0 0
    %1768 = vmatprep.subr.bf16.mxu0 0
    %1769 = vmatpush1.bf16.msra.mxu0 0
    %1770 = vmatprep.subr.bf16.mxu0 0
    %1771 = vmatpush1.bf16.msra.mxu0 %v1743
    %1772 = vmatprep.subr.bf16.mxu0 0
    %1773 = vmatpush1.bf16.msra.mxu0 %v1742
    %1774 = vmatprep.subr.bf16.mxu0 0
    %1775 = vmatpush2.bf16.msra.mxu0 0
    %1776 = vmatprep.subr.bf16.mxu0 0
    %1777 = vmatpush2.bf16.msra.mxu0 0
    %1778 = vmatprep.subr.bf16.mxu0 0
    %1779 = vmatpush2.bf16.msra.mxu0 0
    %1780 = vmatprep.subr.bf16.mxu0 0
    %1781 = vmatpush2.bf16.msra.mxu0 0
    %1782 = vmatprep.subr.bf16.mxu0 0
    %1783 = vmatpush2.bf16.msra.mxu0 0
    %1784 = vmatprep.subr.bf16.mxu0 0
    %1785 = vmatpush2.bf16.msra.mxu0 0
    %1786 = vmatprep.subr.bf16.mxu0 0
    %1787 = vmatpush2.bf16.msra.mxu0 0
    %1788 = vmatprep.subr.bf16.mxu0 0
    %1789 = vmatpush2.bf16.msra.mxu0 0
    %1790 = vmatprep.mubr.bf16.mxu0 0
    %1791 = vmatmul.mubr.bf16.gmra.mxu0 %v1747
    %v1792 = vpop.f32.mrf.mxu0
    %v1793 = vadd.f32 %v1732, %v1792
    %v1794 = vpop.f32.mrf.mxu0
    %v1795 = vpop.f32.mrf.mxu0
    %v1796 = vadd.f32 %v1732, %v1795
    %v1797 = vpop.f32.mrf.mxu0
    %1798 = vmatprep.mubr.bf16.mxu0 0
    %1799 = vmatmul.mubr.bf16.gmra.mxu0 %v1750
    %v1800 = vpop.f32.mrf.mxu0
    %v1801 = vadd.f32 %v1732, %v1800
    %v1802 = vpop.f32.mrf.mxu0
    %v1803 = vpop.f32.mrf.mxu0
    %v1804 = vadd.f32 %v1732, %v1803
    %v1805 = vpop.f32.mrf.mxu0
    %1806 = vmatprep.mubr.bf16.mxu0 0
    %1807 = vmatmul.mubr.bf16.gmra.mxu0 %v1753
    %v1808 = vpop.f32.mrf.mxu0
    %v1809 = vadd.f32 %v1732, %v1808
    %v1810 = vpop.f32.mrf.mxu0
    %v1811 = vpop.f32.mrf.mxu0
    %v1812 = vadd.f32 %v1732, %v1811
    %v1813 = vpop.f32.mrf.mxu0
    %1814 = vmatprep.mubr.bf16.mxu0 0
    %1815 = vmatmul.mubr.bf16.gmra.mxu0 %v1756
    %v1816 = vpop.f32.mrf.mxu0
    %v1817 = vadd.f32 %v1732, %v1816
    %v1818 = vpop.f32.mrf.mxu0
    %v1819 = vpop.f32.mrf.mxu0
    %v1820 = vadd.f32 %v1732, %v1819
    %v1821 = vpop.f32.mrf.mxu0
    %1822 = vdwg.mxu0
    %v1823 = vmul.f32 %v1793, 0.25
    %v1824 = vmul.f32 %v1796, 0.25
    %v1825 = vmul.f32 %v1801, 0.25
    %v1826 = vmul.f32 %v1804, 0.25
    %v1827 = vmul.f32 %v1809, 0.25
    %v1828 = vmul.f32 %v1812, 0.25
    %v1829 = vmul.f32 %v1817, 0.25
    %v1830 = vmul.f32 %v1820, 0.25
    %v1831 = vpack.c.bf16 %v1824, %v1823
    %v1832 = vpack.c.bf16 %v1826, %v1825
    %v1833 = vpack.c.bf16 %v1828, %v1827
    %v1834 = vpack.c.bf16 %v1830, %v1829
    %v1835 = vpack.c.bf16 %v1796, %v1793
    %v1836 = vpack.c.bf16 %v1804, %v1801
    %v1837 = vpack.c.bf16 %v1812, %v1809
    %v1838 = vpack.c.bf16 %v1820, %v1817
    %1843 = vrot.lane.b32.xlu0 %v1835, 96
    %v1844 = vpop.permute.xlu0 %1843
    %1845 = vrot.lane.b32.xlu0 %v1836, 96
    %v1846 = vpop.permute.xlu0 %1845
    %1847 = vrot.lane.b32.xlu0 %v1837, 96
    %v1848 = vpop.permute.xlu0 %1847
    %1849 = vrot.lane.b32.xlu0 %v1838, 96
    %v1850 = vpop.permute.xlu0 %1849
    %v1852 = vsel %vm431, %v1831, 0
    %v1855 = vsel %vm431, %v1832, 0
    %v1858 = vsel %vm431, %v1833, 0
    %v1861 = vsel %vm431, %v1834, 0
    %v1864 = vsel %vm431, %v1844, 0
    %v1867 = vsel %vm431, %v1846, 0
    %v1870 = vsel %vm431, %v1848, 0
    %v1873 = vsel %vm431, %v1850, 0
    %1875 = vmatprep.subr.bf16.mxu0 0
    %1876 = vmatpush1.bf16.xpose.msra.mxu0 0
    %1877 = vmatprep.subr.bf16.mxu0 0
    %1878 = vmatpush1.bf16.xpose.msra.mxu0 0
    %1879 = vmatprep.subr.bf16.mxu0 0
    %1880 = vmatpush1.bf16.xpose.msra.mxu0 0
    %1881 = vmatprep.subr.bf16.mxu0 0
    %1882 = vmatpush1.bf16.xpose.msra.mxu0 0
    %1883 = vmatprep.subr.bf16.mxu0 0
    %1884 = vmatpush1.bf16.xpose.msra.mxu0 %v1873
    %1885 = vmatprep.subr.bf16.mxu0 0
    %1886 = vmatpush1.bf16.xpose.msra.mxu0 %v1870
    %1887 = vmatprep.subr.bf16.mxu0 0
    %1888 = vmatpush1.bf16.xpose.msra.mxu0 %v1867
    %1889 = vmatprep.subr.bf16.mxu0 0
    %1890 = vmatpush1.bf16.xpose.msra.mxu0 %v1864
    %1891 = vmatprep.subr.bf16.mxu0 0
    %1892 = vmatpush2.bf16.xpose.msra.mxu0 0
    %1893 = vmatprep.subr.bf16.mxu0 0
    %1894 = vmatpush2.bf16.xpose.msra.mxu0 0
    %1895 = vmatprep.subr.bf16.mxu0 0
    %1896 = vmatpush2.bf16.xpose.msra.mxu0 0
    %1897 = vmatprep.subr.bf16.mxu0 0
    %1898 = vmatpush2.bf16.xpose.msra.mxu0 0
    %1899 = vmatprep.subr.bf16.mxu0 0
    %1900 = vmatpush2.bf16.xpose.msra.mxu0 0
    %1901 = vmatprep.subr.bf16.mxu0 0
    %1902 = vmatpush2.bf16.xpose.msra.mxu0 0
    %1903 = vmatprep.subr.bf16.mxu0 0
    %1904 = vmatpush2.bf16.xpose.msra.mxu0 0
    %1905 = vmatprep.subr.bf16.mxu0 0
    %1906 = vmatpush2.bf16.xpose.msra.mxu0 0
    %1907 = vmatprep.mubr.bf16.mxu0 0
    %1908 = vmatmul.mubr.bf16.gmra.mxu0 %v1852
    %v1909 = vpop.f32.mrf.mxu0
    %v1910 = vadd.f32 %v291, %v1909
    %v1911 = vpop.f32.mrf.mxu0
    %v1912 = vpop.f32.mrf.mxu0
    %v1913 = vadd.f32 %v292, %v1912
    %v1914 = vpop.f32.mrf.mxu0
    %1915 = vmatprep.mubr.bf16.mxu0 0
    %1916 = vmatmul.mubr.bf16.gmra.mxu0 %v1855
    %v1917 = vpop.f32.mrf.mxu0
    %v1918 = vadd.f32 %v293, %v1917
    %v1919 = vpop.f32.mrf.mxu0
    %v1920 = vpop.f32.mrf.mxu0
    %v1921 = vadd.f32 %v294, %v1920
    %v1922 = vpop.f32.mrf.mxu0
    %1923 = vmatprep.mubr.bf16.mxu0 0
    %1924 = vmatmul.mubr.bf16.gmra.mxu0 %v1858
    %v1925 = vpop.f32.mrf.mxu0
    %v1926 = vadd.f32 %v295, %v1925
    %v1927 = vpop.f32.mrf.mxu0
    %v1928 = vpop.f32.mrf.mxu0
    %v1929 = vadd.f32 %v296, %v1928
    %v1930 = vpop.f32.mrf.mxu0
    %1931 = vmatprep.mubr.bf16.mxu0 0
    %1932 = vmatmul.mubr.bf16.gmra.mxu0 %v1861
    %v1933 = vpop.f32.mrf.mxu0
    %v1934 = vadd.f32 %v297, %v1933
    %v1935 = vpop.f32.mrf.mxu0
    %v1936 = vpop.f32.mrf.mxu0
    %v1937 = vadd.f32 %v298, %v1936
    %v1938 = vpop.f32.mrf.mxu0
    %1939 = vdwg.mxu0
    %v1940 = vsel %vm521, %v1910, -inf
    %1941 = vmax.xlane.f32.xlu0 %v1940
    %v1942 = vpop.xlane.xlu0 %1941
    %v1943 = vsel %vm521, %v1913, -inf
    %1944 = vmax.xlane.f32.xlu0 %v1943
    %v1945 = vpop.xlane.xlu0 %1944
    %v1946 = vsel %vm521, %v1918, -inf
    %1947 = vmax.xlane.f32.xlu0 %v1946
    %v1948 = vpop.xlane.xlu0 %1947
    %v1949 = vsel %vm521, %v1921, -inf
    %1950 = vmax.xlane.f32.xlu0 %v1949
    %v1951 = vpop.xlane.xlu0 %1950
    %v1952 = vsel %vm521, %v1926, -inf
    %1953 = vmax.xlane.f32.xlu0 %v1952
    %v1954 = vpop.xlane.xlu0 %1953
    %v1955 = vsel %vm521, %v1929, -inf
    %1956 = vmax.xlane.f32.xlu0 %v1955
    %v1957 = vpop.xlane.xlu0 %1956
    %v1958 = vsel %vm521, %v1934, -inf
    %1959 = vmax.xlane.f32.xlu0 %v1958
    %v1960 = vpop.xlane.xlu0 %1959
    %v1961 = vsel %vm521, %v1937, -inf
    %1962 = vmax.xlane.f32.xlu0 %v1961
    %v1963 = vpop.xlane.xlu0 %1962
    %v1964 = vsub.f32 %v1910, %v1942
    %v1965 = vsub.f32 %v1913, %v1945
    %v1966 = vsub.f32 %v1918, %v1948
    %v1967 = vsub.f32 %v1921, %v1951
    %v1968 = vsub.f32 %v1926, %v1954
    %v1969 = vsub.f32 %v1929, %v1957
    %v1970 = vsub.f32 %v1934, %v1960
    %v1971 = vsub.f32 %v1937, %v1963
    %v1972 = vmul.f32 %v1964, 1.442695
    %v1973 = vpow.pop %v1972
    %v1974 = vmul.f32 %v1965, 1.442695
    %v1975 = vpow.pop %v1974
    %v1976 = vmul.f32 %v1966, 1.442695
    %v1977 = vpow.pop %v1976
    %v1978 = vmul.f32 %v1967, 1.442695
    %v1979 = vpow.pop %v1978
    %v1980 = vmul.f32 %v1968, 1.442695
    %v1981 = vpow.pop %v1980
    %v1982 = vmul.f32 %v1969, 1.442695
    %v1983 = vpow.pop %v1982
    %v1984 = vmul.f32 %v1970, 1.442695
    %v1985 = vpow.pop %v1984
    %v1986 = vmul.f32 %v1971, 1.442695
    %v1987 = vpow.pop %v1986
    %v1988 = vsel %vm521, %v1973, 0.0
    %1989 = vadd.xlane.f32.xlu0 %v1988
    %v1990 = vpop.xlane.xlu0 %1989
    %v1991 = vsel %vm521, %v1975, 0.0
    %1992 = vadd.xlane.f32.xlu0 %v1991
    %v1993 = vpop.xlane.xlu0 %1992
    %v1994 = vsel %vm521, %v1977, 0.0
    %1995 = vadd.xlane.f32.xlu0 %v1994
    %v1996 = vpop.xlane.xlu0 %1995
    %v1997 = vsel %vm521, %v1979, 0.0
    %1998 = vadd.xlane.f32.xlu0 %v1997
    %v1999 = vpop.xlane.xlu0 %1998
    %v2000 = vsel %vm521, %v1981, 0.0
    %2001 = vadd.xlane.f32.xlu0 %v2000
    %v2002 = vpop.xlane.xlu0 %2001
    %v2003 = vsel %vm521, %v1983, 0.0
    %2004 = vadd.xlane.f32.xlu0 %v2003
    %v2005 = vpop.xlane.xlu0 %2004
    %v2006 = vsel %vm521, %v1985, 0.0
    %2007 = vadd.xlane.f32.xlu0 %v2006
    %v2008 = vpop.xlane.xlu0 %2007
    %v2009 = vsel %vm521, %v1987, 0.0
    %2010 = vadd.xlane.f32.xlu0 %v2009
    %v2011 = vpop.xlane.xlu0 %2010
    %v2012 = vrcp.pop %v1990
    %v2013 = vrcp.pop %v1993
    %v2014 = vrcp.pop %v1996
    %v2015 = vrcp.pop %v1999
    %v2016 = vrcp.pop %v2002
    %v2017 = vrcp.pop %v2005
    %v2018 = vrcp.pop %v2008
    %v2019 = vrcp.pop %v2011
    %v2020 = vmul.f32 %v1973, %v2012
    %v2021 = vmul.f32 %v1975, %v2013
    %v2022 = vmul.f32 %v1977, %v2014
    %v2023 = vmul.f32 %v1979, %v2015
    %v2024 = vmul.f32 %v1981, %v2016
    %v2025 = vmul.f32 %v1983, %v2017
    %v2026 = vmul.f32 %v1985, %v2018
    %v2027 = vmul.f32 %v1987, %v2019
    %v2028 = vpack.c.bf16 %v2021, %v2020
    %v2029 = vpack.c.bf16 %v2023, %v2022
    %v2030 = vpack.c.bf16 %v2025, %v2024
    %v2031 = vpack.c.bf16 %v2027, %v2026
    %2032 = vrot.lane.b32.xlu0 %v1835, 64
    %v2033 = vpop.permute.xlu0 %2032
    %2034 = vrot.lane.b32.xlu0 %v1836, 64
    %v2035 = vpop.permute.xlu0 %2034
    %2036 = vrot.lane.b32.xlu0 %v1837, 64
    %v2037 = vpop.permute.xlu0 %2036
    %2038 = vrot.lane.b32.xlu0 %v1838, 64
    %v2039 = vpop.permute.xlu0 %2038
    %v2045 = vsel %vm521, %v2028, 0
    %v2048 = vsel %vm521, %v2029, 0
    %v2051 = vsel %vm521, %v2030, 0
    %v2054 = vsel %vm521, %v2031, 0
    %2056 = vmatprep.subr.bf16.mxu0 0
    %2057 = vmatpush1.bf16.msra.mxu0 0
    %2058 = vmatprep.subr.bf16.mxu0 0
    %2059 = vmatpush1.bf16.msra.mxu0 0
    %2060 = vmatprep.subr.bf16.mxu0 0
    %2061 = vmatpush1.bf16.msra.mxu0 0
    %2062 = vmatprep.subr.bf16.mxu0 0
    %2063 = vmatpush1.bf16.msra.mxu0 0
    %2064 = vmatprep.subr.bf16.mxu0 0
    %2065 = vmatpush1.bf16.msra.mxu0 %v2039
    %2066 = vmatprep.subr.bf16.mxu0 0
    %2067 = vmatpush1.bf16.msra.mxu0 %v2037
    %2068 = vmatprep.subr.bf16.mxu0 0
    %2069 = vmatpush1.bf16.msra.mxu0 %v2035
    %2070 = vmatprep.subr.bf16.mxu0 0
    %2071 = vmatpush1.bf16.msra.mxu0 %v2033
    %2072 = vmatprep.subr.bf16.mxu0 0
    %2073 = vmatpush2.bf16.msra.mxu0 0
    %2074 = vmatprep.subr.bf16.mxu0 0
    %2075 = vmatpush2.bf16.msra.mxu0 0
    %2076 = vmatprep.subr.bf16.mxu0 0
    %2077 = vmatpush2.bf16.msra.mxu0 0
    %2078 = vmatprep.subr.bf16.mxu0 0
    %2079 = vmatpush2.bf16.msra.mxu0 0
    %2080 = vmatprep.subr.bf16.mxu0 0
    %2081 = vmatpush2.bf16.msra.mxu0 0
    %2082 = vmatprep.subr.bf16.mxu0 0
    %2083 = vmatpush2.bf16.msra.mxu0 0
    %2084 = vmatprep.subr.bf16.mxu0 0
    %2085 = vmatpush2.bf16.msra.mxu0 0
    %2086 = vmatprep.subr.bf16.mxu0 0
    %2087 = vmatpush2.bf16.msra.mxu0 0
    %2088 = vmatprep.mubr.bf16.mxu0 0
    %2089 = vmatmul.mubr.bf16.gmra.mxu0 %v2045
    %v2090 = vpop.f32.mrf.mxu0
    %v2091 = vadd.f32 0.0, %v2090
    %v2092 = vpop.f32.mrf.mxu0
    %v2093 = vpop.f32.mrf.mxu0
    %v2094 = vadd.f32 0.0, %v2093
    %v2095 = vpop.f32.mrf.mxu0
    %2096 = vmatprep.mubr.bf16.mxu0 0
    %2097 = vmatmul.mubr.bf16.gmra.mxu0 %v2048
    %v2098 = vpop.f32.mrf.mxu0
    %v2099 = vadd.f32 0.0, %v2098
    %v2100 = vpop.f32.mrf.mxu0
    %v2101 = vpop.f32.mrf.mxu0
    %v2102 = vadd.f32 0.0, %v2101
    %v2103 = vpop.f32.mrf.mxu0
    %2104 = vmatprep.mubr.bf16.mxu0 0
    %2105 = vmatmul.mubr.bf16.gmra.mxu0 %v2051
    %v2106 = vpop.f32.mrf.mxu0
    %v2107 = vadd.f32 0.0, %v2106
    %v2108 = vpop.f32.mrf.mxu0
    %v2109 = vpop.f32.mrf.mxu0
    %v2110 = vadd.f32 0.0, %v2109
    %v2111 = vpop.f32.mrf.mxu0
    %2112 = vmatprep.mubr.bf16.mxu0 0
    %2113 = vmatmul.mubr.bf16.gmra.mxu0 %v2054
    %v2114 = vpop.f32.mrf.mxu0
    %v2115 = vadd.f32 0.0, %v2114
    %v2116 = vpop.f32.mrf.mxu0
    %v2117 = vpop.f32.mrf.mxu0
    %v2118 = vadd.f32 0.0, %v2117
    %v2119 = vpop.f32.mrf.mxu0
    %2120 = vdwg.mxu0
    %2125 = vrot.lane.b32.xlu0 %v1831, 112
    %v2126 = vpop.permute.xlu0 %2125
    %2127 = vrot.lane.b32.xlu0 %v1832, 112
    %v2128 = vpop.permute.xlu0 %2127
    %2129 = vrot.lane.b32.xlu0 %v1833, 112
    %v2130 = vpop.permute.xlu0 %2129
    %2131 = vrot.lane.b32.xlu0 %v1834, 112
    %v2132 = vpop.permute.xlu0 %2131
    %2133 = vrot.lane.b32.xlu0 %v1835, 80
    %v2134 = vpop.permute.xlu0 %2133
    %2135 = vrot.lane.b32.xlu0 %v1836, 80
    %v2136 = vpop.permute.xlu0 %2135
    %2137 = vrot.lane.b32.xlu0 %v1837, 80
    %v2138 = vpop.permute.xlu0 %2137
    %2139 = vrot.lane.b32.xlu0 %v1838, 80
    %v2140 = vpop.permute.xlu0 %2139
    %v2142 = vsel %vm431, %v2126, 0
    %v2145 = vsel %vm431, %v2128, 0
    %v2148 = vsel %vm431, %v2130, 0
    %v2151 = vsel %vm431, %v2132, 0
    %v2154 = vsel %vm431, %v2134, 0
    %v2157 = vsel %vm431, %v2136, 0
    %v2160 = vsel %vm431, %v2138, 0
    %v2163 = vsel %vm431, %v2140, 0
    %2165 = vmatprep.subr.bf16.mxu0 0
    %2166 = vmatpush1.bf16.xpose.msra.mxu0 0
    %2167 = vmatprep.subr.bf16.mxu0 0
    %2168 = vmatpush1.bf16.xpose.msra.mxu0 0
    %2169 = vmatprep.subr.bf16.mxu0 0
    %2170 = vmatpush1.bf16.xpose.msra.mxu0 0
    %2171 = vmatprep.subr.bf16.mxu0 0
    %2172 = vmatpush1.bf16.xpose.msra.mxu0 0
    %2173 = vmatprep.subr.bf16.mxu0 0
    %2174 = vmatpush1.bf16.xpose.msra.mxu0 %v2163
    %2175 = vmatprep.subr.bf16.mxu0 0
    %2176 = vmatpush1.bf16.xpose.msra.mxu0 %v2160
    %2177 = vmatprep.subr.bf16.mxu0 0
    %2178 = vmatpush1.bf16.xpose.msra.mxu0 %v2157
    %2179 = vmatprep.subr.bf16.mxu0 0
    %2180 = vmatpush1.bf16.xpose.msra.mxu0 %v2154
    %2181 = vmatprep.subr.bf16.mxu0 0
    %2182 = vmatpush2.bf16.xpose.msra.mxu0 0
    %2183 = vmatprep.subr.bf16.mxu0 0
    %2184 = vmatpush2.bf16.xpose.msra.mxu0 0
    %2185 = vmatprep.subr.bf16.mxu0 0
    %2186 = vmatpush2.bf16.xpose.msra.mxu0 0
    %2187 = vmatprep.subr.bf16.mxu0 0
    %2188 = vmatpush2.bf16.xpose.msra.mxu0 0
    %2189 = vmatprep.subr.bf16.mxu0 0
    %2190 = vmatpush2.bf16.xpose.msra.mxu0 0
    %2191 = vmatprep.subr.bf16.mxu0 0
    %2192 = vmatpush2.bf16.xpose.msra.mxu0 0
    %2193 = vmatprep.subr.bf16.mxu0 0
    %2194 = vmatpush2.bf16.xpose.msra.mxu0 0
    %2195 = vmatprep.subr.bf16.mxu0 0
    %2196 = vmatpush2.bf16.xpose.msra.mxu0 0
    %2197 = vmatprep.mubr.bf16.mxu0 0
    %2198 = vmatmul.mubr.bf16.gmra.mxu0 %v2142
    %v2199 = vpop.f32.mrf.mxu0
    %v2200 = vadd.f32 %v291, %v2199
    %v2201 = vpop.f32.mrf.mxu0
    %v2202 = vpop.f32.mrf.mxu0
    %v2203 = vadd.f32 %v292, %v2202
    %v2204 = vpop.f32.mrf.mxu0
    %2205 = vmatprep.mubr.bf16.mxu0 0
    %2206 = vmatmul.mubr.bf16.gmra.mxu0 %v2145
    %v2207 = vpop.f32.mrf.mxu0
    %v2208 = vadd.f32 %v293, %v2207
    %v2209 = vpop.f32.mrf.mxu0
    %v2210 = vpop.f32.mrf.mxu0
    %v2211 = vadd.f32 %v294, %v2210
    %v2212 = vpop.f32.mrf.mxu0
    %2213 = vmatprep.mubr.bf16.mxu0 0
    %2214 = vmatmul.mubr.bf16.gmra.mxu0 %v2148
    %v2215 = vpop.f32.mrf.mxu0
    %v2216 = vadd.f32 %v295, %v2215
    %v2217 = vpop.f32.mrf.mxu0
    %v2218 = vpop.f32.mrf.mxu0
    %v2219 = vadd.f32 %v296, %v2218
    %v2220 = vpop.f32.mrf.mxu0
    %2221 = vmatprep.mubr.bf16.mxu0 0
    %2222 = vmatmul.mubr.bf16.gmra.mxu0 %v2151
    %v2223 = vpop.f32.mrf.mxu0
    %v2224 = vadd.f32 %v297, %v2223
    %v2225 = vpop.f32.mrf.mxu0
    %v2226 = vpop.f32.mrf.mxu0
    %v2227 = vadd.f32 %v298, %v2226
    %v2228 = vpop.f32.mrf.mxu0
    %2229 = vdwg.mxu0
    %v2230 = vsel %vm521, %v2200, -inf
    %2231 = vmax.xlane.f32.xlu0 %v2230
    %v2232 = vpop.xlane.xlu0 %2231
    %v2233 = vsel %vm521, %v2203, -inf
    %2234 = vmax.xlane.f32.xlu0 %v2233
    %v2235 = vpop.xlane.xlu0 %2234
    %v2236 = vsel %vm521, %v2208, -inf
    %2237 = vmax.xlane.f32.xlu0 %v2236
    %v2238 = vpop.xlane.xlu0 %2237
    %v2239 = vsel %vm521, %v2211, -inf
    %2240 = vmax.xlane.f32.xlu0 %v2239
    %v2241 = vpop.xlane.xlu0 %2240
    %v2242 = vsel %vm521, %v2216, -inf
    %2243 = vmax.xlane.f32.xlu0 %v2242
    %v2244 = vpop.xlane.xlu0 %2243
    %v2245 = vsel %vm521, %v2219, -inf
    %2246 = vmax.xlane.f32.xlu0 %v2245
    %v2247 = vpop.xlane.xlu0 %2246
    %v2248 = vsel %vm521, %v2224, -inf
    %2249 = vmax.xlane.f32.xlu0 %v2248
    %v2250 = vpop.xlane.xlu0 %2249
    %v2251 = vsel %vm521, %v2227, -inf
    %2252 = vmax.xlane.f32.xlu0 %v2251
    %v2253 = vpop.xlane.xlu0 %2252
    %v2254 = vsub.f32 %v2200, %v2232
    %v2255 = vsub.f32 %v2203, %v2235
    %v2256 = vsub.f32 %v2208, %v2238
    %v2257 = vsub.f32 %v2211, %v2241
    %v2258 = vsub.f32 %v2216, %v2244
    %v2259 = vsub.f32 %v2219, %v2247
    %v2260 = vsub.f32 %v2224, %v2250
    %v2261 = vsub.f32 %v2227, %v2253
    %v2262 = vmul.f32 %v2254, 1.442695
    %v2263 = vpow.pop %v2262
    %v2264 = vmul.f32 %v2255, 1.442695
    %v2265 = vpow.pop %v2264
    %v2266 = vmul.f32 %v2256, 1.442695
    %v2267 = vpow.pop %v2266
    %v2268 = vmul.f32 %v2257, 1.442695
    %v2269 = vpow.pop %v2268
    %v2270 = vmul.f32 %v2258, 1.442695
    %v2271 = vpow.pop %v2270
    %v2272 = vmul.f32 %v2259, 1.442695
    %v2273 = vpow.pop %v2272
    %v2274 = vmul.f32 %v2260, 1.442695
    %v2275 = vpow.pop %v2274
    %v2276 = vmul.f32 %v2261, 1.442695
    %v2277 = vpow.pop %v2276
    %v2278 = vsel %vm521, %v2263, 0.0
    %2279 = vadd.xlane.f32.xlu0 %v2278
    %v2280 = vpop.xlane.xlu0 %2279
    %v2281 = vsel %vm521, %v2265, 0.0
    %2282 = vadd.xlane.f32.xlu0 %v2281
    %v2283 = vpop.xlane.xlu0 %2282
    %v2284 = vsel %vm521, %v2267, 0.0
    %2285 = vadd.xlane.f32.xlu0 %v2284
    %v2286 = vpop.xlane.xlu0 %2285
    %v2287 = vsel %vm521, %v2269, 0.0
    %2288 = vadd.xlane.f32.xlu0 %v2287
    %v2289 = vpop.xlane.xlu0 %2288
    %v2290 = vsel %vm521, %v2271, 0.0
    %2291 = vadd.xlane.f32.xlu0 %v2290
    %v2292 = vpop.xlane.xlu0 %2291
    %v2293 = vsel %vm521, %v2273, 0.0
    %2294 = vadd.xlane.f32.xlu0 %v2293
    %v2295 = vpop.xlane.xlu0 %2294
    %v2296 = vsel %vm521, %v2275, 0.0
    %2297 = vadd.xlane.f32.xlu0 %v2296
    %v2298 = vpop.xlane.xlu0 %2297
    %v2299 = vsel %vm521, %v2277, 0.0
    %2300 = vadd.xlane.f32.xlu0 %v2299
    %v2301 = vpop.xlane.xlu0 %2300
    %v2302 = vrcp.pop %v2280
    %v2303 = vrcp.pop %v2283
    %v2304 = vrcp.pop %v2286
    %v2305 = vrcp.pop %v2289
    %v2306 = vrcp.pop %v2292
    %v2307 = vrcp.pop %v2295
    %v2308 = vrcp.pop %v2298
    %v2309 = vrcp.pop %v2301
    %v2310 = vmul.f32 %v2263, %v2302
    %v2311 = vmul.f32 %v2265, %v2303
    %v2312 = vmul.f32 %v2267, %v2304
    %v2313 = vmul.f32 %v2269, %v2305
    %v2314 = vmul.f32 %v2271, %v2306
    %v2315 = vmul.f32 %v2273, %v2307
    %v2316 = vmul.f32 %v2275, %v2308
    %v2317 = vmul.f32 %v2277, %v2309
    %v2318 = vpack.c.bf16 %v2311, %v2310
    %v2319 = vpack.c.bf16 %v2313, %v2312
    %v2320 = vpack.c.bf16 %v2315, %v2314
    %v2321 = vpack.c.bf16 %v2317, %v2316
    %2322 = vrot.lane.b32.xlu0 %v1835, 48
    %v2323 = vpop.permute.xlu0 %2322
    %2324 = vrot.lane.b32.xlu0 %v1836, 48
    %v2325 = vpop.permute.xlu0 %2324
    %2326 = vrot.lane.b32.xlu0 %v1837, 48
    %v2327 = vpop.permute.xlu0 %2326
    %2328 = vrot.lane.b32.xlu0 %v1838, 48
    %v2329 = vpop.permute.xlu0 %2328
    %v2335 = vsel %vm521, %v2318, 0
    %v2338 = vsel %vm521, %v2319, 0
    %v2341 = vsel %vm521, %v2320, 0
    %v2344 = vsel %vm521, %v2321, 0
    %2346 = vmatprep.subr.bf16.mxu0 0
    %2347 = vmatpush1.bf16.msra.mxu0 0
    %2348 = vmatprep.subr.bf16.mxu0 0
    %2349 = vmatpush1.bf16.msra.mxu0 0
    %2350 = vmatprep.subr.bf16.mxu0 0
    %2351 = vmatpush1.bf16.msra.mxu0 0
    %2352 = vmatprep.subr.bf16.mxu0 0
    %2353 = vmatpush1.bf16.msra.mxu0 0
    %2354 = vmatprep.subr.bf16.mxu0 0
    %2355 = vmatpush1.bf16.msra.mxu0 %v2329
    %2356 = vmatprep.subr.bf16.mxu0 0
    %2357 = vmatpush1.bf16.msra.mxu0 %v2327
    %2358 = vmatprep.subr.bf16.mxu0 0
    %2359 = vmatpush1.bf16.msra.mxu0 %v2325
    %2360 = vmatprep.subr.bf16.mxu0 0
    %2361 = vmatpush1.bf16.msra.mxu0 %v2323
    %2362 = vmatprep.subr.bf16.mxu0 0
    %2363 = vmatpush2.bf16.msra.mxu0 0
    %2364 = vmatprep.subr.bf16.mxu0 0
    %2365 = vmatpush2.bf16.msra.mxu0 0
    %2366 = vmatprep.subr.bf16.mxu0 0
    %2367 = vmatpush2.bf16.msra.mxu0 0
    %2368 = vmatprep.subr.bf16.mxu0 0
    %2369 = vmatpush2.bf16.msra.mxu0 0
    %2370 = vmatprep.subr.bf16.mxu0 0
    %2371 = vmatpush2.bf16.msra.mxu0 0
    %2372 = vmatprep.subr.bf16.mxu0 0
    %2373 = vmatpush2.bf16.msra.mxu0 0
    %2374 = vmatprep.subr.bf16.mxu0 0
    %2375 = vmatpush2.bf16.msra.mxu0 0
    %2376 = vmatprep.subr.bf16.mxu0 0
    %2377 = vmatpush2.bf16.msra.mxu0 0
    %2378 = vmatprep.mubr.bf16.mxu0 0
    %2379 = vmatmul.mubr.bf16.gmra.mxu0 %v2335
    %v2380 = vpop.f32.mrf.mxu0
    %v2381 = vadd.f32 0.0, %v2380
    %v2382 = vpop.f32.mrf.mxu0
    %v2383 = vpop.f32.mrf.mxu0
    %v2384 = vadd.f32 0.0, %v2383
    %v2385 = vpop.f32.mrf.mxu0
    %2386 = vmatprep.mubr.bf16.mxu0 0
    %2387 = vmatmul.mubr.bf16.gmra.mxu0 %v2338
    %v2388 = vpop.f32.mrf.mxu0
    %v2389 = vadd.f32 0.0, %v2388
    %v2390 = vpop.f32.mrf.mxu0
    %v2391 = vpop.f32.mrf.mxu0
    %v2392 = vadd.f32 0.0, %v2391
    %v2393 = vpop.f32.mrf.mxu0
    %2394 = vmatprep.mubr.bf16.mxu0 0
    %2395 = vmatmul.mubr.bf16.gmra.mxu0 %v2341
    %v2396 = vpop.f32.mrf.mxu0
    %v2397 = vadd.f32 0.0, %v2396
    %v2398 = vpop.f32.mrf.mxu0
    %v2399 = vpop.f32.mrf.mxu0
    %v2400 = vadd.f32 0.0, %v2399
    %v2401 = vpop.f32.mrf.mxu0
    %2402 = vmatprep.mubr.bf16.mxu0 0
    %2403 = vmatmul.mubr.bf16.gmra.mxu0 %v2344
    %v2404 = vpop.f32.mrf.mxu0
    %v2405 = vadd.f32 0.0, %v2404
    %v2406 = vpop.f32.mrf.mxu0
    %v2407 = vpop.f32.mrf.mxu0
    %v2408 = vadd.f32 0.0, %v2407
    %v2409 = vpop.f32.mrf.mxu0
    %2410 = vdwg.mxu0
    %2419 = vrot.lane.b32.xlu0 %v2381, 16
    %v2420 = vpop.permute.xlu0 %2419
    %2421 = vrot.lane.b32.xlu0 %v2384, 16
    %v2422 = vpop.permute.xlu0 %2421
    %2423 = vrot.lane.b32.xlu0 %v2389, 16
    %v2424 = vpop.permute.xlu0 %2423
    %2425 = vrot.lane.b32.xlu0 %v2392, 16
    %v2426 = vpop.permute.xlu0 %2425
    %2427 = vrot.lane.b32.xlu0 %v2397, 16
    %v2428 = vpop.permute.xlu0 %2427
    %2429 = vrot.lane.b32.xlu0 %v2400, 16
    %v2430 = vpop.permute.xlu0 %2429
    %2431 = vrot.lane.b32.xlu0 %v2405, 16
    %v2432 = vpop.permute.xlu0 %2431
    %2433 = vrot.lane.b32.xlu0 %v2408, 16
    %v2434 = vpop.permute.xlu0 %2433
    %v2443 = vsel %vm431, %v2091, %v2420
    %v2444 = vsel %vm431, %v2094, %v2422
    %v2445 = vsel %vm431, %v2099, %v2424
    %v2446 = vsel %vm431, %v2102, %v2426
    %v2447 = vsel %vm431, %v2107, %v2428
    %v2448 = vsel %vm431, %v2110, %v2430
    %v2449 = vsel %vm431, %v2115, %v2432
    %v2450 = vsel %vm431, %v2118, %v2434
    %v2451 = vpack.c.bf16 %v2444, %v2443
    %v2452 = vpack.c.bf16 %v2446, %v2445
    %v2453 = vpack.c.bf16 %v2448, %v2447
    %v2454 = vpack.c.bf16 %v2450, %v2449
    %s2455 = scalar_lea.vmem %s13, 16
    %v2456 = vld [vmem:[%s2455] sm:$0xf]
    %v2457 = vld [vmem:[%s2455 + $0x4] sm:$0xf]
    %v2458 = vld [vmem:[%s2455 + $0x8] sm:$0xf]
    %v2459 = vld [vmem:[%s2455 + $0xc] sm:$0xf]
    %s2460 = scalar_lea.vmem %s15, 1
    %v2461 = vld [vmem:[%s2460] sm:$0x1]
    %v2463 = vlaneseq
    %v2464 = vshrl.u32 %v2463, 7
    %v2465 = vsub.s32 0, %v2464
    %v2466 = vrot.slane %v2461, %v2465
    %v2472 = vunpack.c.l.b16 %v2456
    %v2473 = vunpack.c.l.b16 %v2457
    %v2474 = vunpack.c.l.b16 %v2458
    %v2475 = vunpack.c.l.b16 %v2459
    %v2476 = vpack.c.b16 %v2473, %v2472
    %v2477 = vpack.c.b16 %v2475, %v2474
    %v2481 = vsel %vm157, %v2451, 0
    %v2484 = vsel %vm157, %v2452, 0
    %v2487 = vsel %vm157, %v2453, 0
    %v2490 = vsel %vm157, %v2454, 0
    %2492 = vmatprep.subr.bf16.mxu0 0
    %2493 = vmatpush1.bf16.msra.mxu0 0
    %2494 = vmatprep.subr.bf16.mxu0 0
    %2495 = vmatpush1.bf16.msra.mxu0 0
    %2496 = vmatprep.subr.bf16.mxu0 0
    %2497 = vmatpush1.bf16.msra.mxu0 0
    %2498 = vmatprep.subr.bf16.mxu0 0
    %2499 = vmatpush1.bf16.msra.mxu0 0
    %2500 = vmatprep.subr.bf16.mxu0 0
    %2501 = vmatpush1.bf16.msra.mxu0 0
    %2502 = vmatprep.subr.bf16.mxu0 0
    %2503 = vmatpush1.bf16.msra.mxu0 0
    %2504 = vmatprep.subr.bf16.mxu0 0
    %2505 = vmatpush1.bf16.msra.mxu0 %v2477
    %2506 = vmatprep.subr.bf16.mxu0 0
    %2507 = vmatpush1.bf16.msra.mxu0 %v2476
    %2508 = vmatprep.subr.bf16.mxu0 0
    %2509 = vmatpush2.bf16.msra.mxu0 0
    %2510 = vmatprep.subr.bf16.mxu0 0
    %2511 = vmatpush2.bf16.msra.mxu0 0
    %2512 = vmatprep.subr.bf16.mxu0 0
    %2513 = vmatpush2.bf16.msra.mxu0 0
    %2514 = vmatprep.subr.bf16.mxu0 0
    %2515 = vmatpush2.bf16.msra.mxu0 0
    %2516 = vmatprep.subr.bf16.mxu0 0
    %2517 = vmatpush2.bf16.msra.mxu0 0
    %2518 = vmatprep.subr.bf16.mxu0 0
    %2519 = vmatpush2.bf16.msra.mxu0 0
    %2520 = vmatprep.subr.bf16.mxu0 0
    %2521 = vmatpush2.bf16.msra.mxu0 0
    %2522 = vmatprep.subr.bf16.mxu0 0
    %2523 = vmatpush2.bf16.msra.mxu0 0
    %2524 = vmatprep.mubr.bf16.mxu0 0
    %2525 = vmatmul.mubr.bf16.gmra.mxu0 %v2481
    %v2526 = vpop.f32.mrf.mxu0
    %v2527 = vadd.f32 %v2466, %v2526
    %v2528 = vpop.f32.mrf.mxu0
    %v2529 = vpop.f32.mrf.mxu0
    %v2530 = vadd.f32 %v2466, %v2529
    %v2531 = vpop.f32.mrf.mxu0
    %2532 = vmatprep.mubr.bf16.mxu0 0
    %2533 = vmatmul.mubr.bf16.gmra.mxu0 %v2484
    %v2534 = vpop.f32.mrf.mxu0
    %v2535 = vadd.f32 %v2466, %v2534
    %v2536 = vpop.f32.mrf.mxu0
    %v2537 = vpop.f32.mrf.mxu0
    %v2538 = vadd.f32 %v2466, %v2537
    %v2539 = vpop.f32.mrf.mxu0
    %2540 = vmatprep.mubr.bf16.mxu0 0
    %2541 = vmatmul.mubr.bf16.gmra.mxu0 %v2487
    %v2542 = vpop.f32.mrf.mxu0
    %v2543 = vadd.f32 %v2466, %v2542
    %v2544 = vpop.f32.mrf.mxu0
    %v2545 = vpop.f32.mrf.mxu0
    %v2546 = vadd.f32 %v2466, %v2545
    %v2547 = vpop.f32.mrf.mxu0
    %2548 = vmatprep.mubr.bf16.mxu0 0
    %2549 = vmatmul.mubr.bf16.gmra.mxu0 %v2490
    %v2550 = vpop.f32.mrf.mxu0
    %v2551 = vadd.f32 %v2466, %v2550
    %v2552 = vpop.f32.mrf.mxu0
    %v2553 = vpop.f32.mrf.mxu0
    %v2554 = vadd.f32 %v2466, %v2553
    %v2555 = vpop.f32.mrf.mxu0
    %2556 = vdwg.mxu0
    %v2557 = vadd.f32 %v2527, %v1709
    %v2558 = vadd.f32 %v2530, %v1710
    %v2559 = vadd.f32 %v2535, %v1711
    %v2560 = vadd.f32 %v2538, %v1712
    %v2561 = vadd.f32 %v2543, %v1713
    %v2562 = vadd.f32 %v2546, %v1714
    %v2563 = vadd.f32 %v2551, %v1715
    %v2564 = vadd.f32 %v2554, %v1716
    %s2565 = scalar_lea.vmem %s17, 1
    %v2566 = vld [vmem:[%s2565] sm:$0x1]
    %s2567 = scalar_lea.vmem %s19, 1
    %v2568 = vld [vmem:[%s2567] sm:$0x1]
    %v2569 = vsel %vm157, %v2557, 0.0
    %2570 = vadd.xlane.f32.xlu0 %v2569
    %v2571 = vpop.xlane.xlu0 %2570
    %v2572 = vsel %vm157, %v2558, 0.0
    %2573 = vadd.xlane.f32.xlu0 %v2572
    %v2574 = vpop.xlane.xlu0 %2573
    %v2575 = vsel %vm157, %v2559, 0.0
    %2576 = vadd.xlane.f32.xlu0 %v2575
    %v2577 = vpop.xlane.xlu0 %2576
    %v2578 = vsel %vm157, %v2560, 0.0
    %2579 = vadd.xlane.f32.xlu0 %v2578
    %v2580 = vpop.xlane.xlu0 %2579
    %v2581 = vsel %vm157, %v2561, 0.0
    %2582 = vadd.xlane.f32.xlu0 %v2581
    %v2583 = vpop.xlane.xlu0 %2582
    %v2584 = vsel %vm157, %v2562, 0.0
    %2585 = vadd.xlane.f32.xlu0 %v2584
    %v2586 = vpop.xlane.xlu0 %2585
    %v2587 = vsel %vm157, %v2563, 0.0
    %2588 = vadd.xlane.f32.xlu0 %v2587
    %v2589 = vpop.xlane.xlu0 %2588
    %v2590 = vsel %vm157, %v2564, 0.0
    %2591 = vadd.xlane.f32.xlu0 %v2590
    %v2592 = vpop.xlane.xlu0 %2591
    %v2593 = vmul.f32 %v2571, %v182
    %v2594 = vmul.f32 %v2574, %v182
    %v2595 = vmul.f32 %v2577, %v182
    %v2596 = vmul.f32 %v2580, %v182
    %v2597 = vmul.f32 %v2583, %v182
    %v2598 = vmul.f32 %v2586, %v182
    %v2599 = vmul.f32 %v2589, %v182
    %v2600 = vmul.f32 %v2592, %v182
    %v2601 = vsub.f32 %v2557, %v2593
    %v2602 = vsub.f32 %v2558, %v2594
    %v2603 = vsub.f32 %v2559, %v2595
    %v2604 = vsub.f32 %v2560, %v2596
    %v2605 = vsub.f32 %v2561, %v2597
    %v2606 = vsub.f32 %v2562, %v2598
    %v2607 = vsub.f32 %v2563, %v2599
    %v2608 = vsub.f32 %v2564, %v2600
    %v2609 = vmul.f32 %v2601, %v2601
    %v2610 = vmul.f32 %v2602, %v2602
    %v2611 = vmul.f32 %v2603, %v2603
    %v2612 = vmul.f32 %v2604, %v2604
    %v2613 = vmul.f32 %v2605, %v2605
    %v2614 = vmul.f32 %v2606, %v2606
    %v2615 = vmul.f32 %v2607, %v2607
    %v2616 = vmul.f32 %v2608, %v2608
    %v2617 = vsel %vm157, %v2609, 0.0
    %2618 = vadd.xlane.f32.xlu0 %v2617
    %v2619 = vpop.xlane.xlu0 %2618
    %v2620 = vsel %vm157, %v2610, 0.0
    %2621 = vadd.xlane.f32.xlu0 %v2620
    %v2622 = vpop.xlane.xlu0 %2621
    %v2623 = vsel %vm157, %v2611, 0.0
    %2624 = vadd.xlane.f32.xlu0 %v2623
    %v2625 = vpop.xlane.xlu0 %2624
    %v2626 = vsel %vm157, %v2612, 0.0
    %2627 = vadd.xlane.f32.xlu0 %v2626
    %v2628 = vpop.xlane.xlu0 %2627
    %v2629 = vsel %vm157, %v2613, 0.0
    %2630 = vadd.xlane.f32.xlu0 %v2629
    %v2631 = vpop.xlane.xlu0 %2630
    %v2632 = vsel %vm157, %v2614, 0.0
    %2633 = vadd.xlane.f32.xlu0 %v2632
    %v2634 = vpop.xlane.xlu0 %2633
    %v2635 = vsel %vm157, %v2615, 0.0
    %2636 = vadd.xlane.f32.xlu0 %v2635
    %v2637 = vpop.xlane.xlu0 %2636
    %v2638 = vsel %vm157, %v2616, 0.0
    %2639 = vadd.xlane.f32.xlu0 %v2638
    %v2640 = vpop.xlane.xlu0 %2639
    %v2641 = vmul.f32 %v2619, %v182
    %v2642 = vmul.f32 %v2622, %v182
    %v2643 = vmul.f32 %v2625, %v182
    %v2644 = vmul.f32 %v2628, %v182
    %v2645 = vmul.f32 %v2631, %v182
    %v2646 = vmul.f32 %v2634, %v182
    %v2647 = vmul.f32 %v2637, %v182
    %v2648 = vmul.f32 %v2640, %v182
    %v2649 = vadd.f32 %v2641, 1e-12
    %v2650 = vadd.f32 %v2642, 1e-12
    %v2651 = vadd.f32 %v2643, 1e-12
    %v2652 = vadd.f32 %v2644, 1e-12
    %v2653 = vadd.f32 %v2645, 1e-12
    %v2654 = vadd.f32 %v2646, 1e-12
    %v2655 = vadd.f32 %v2647, 1e-12
    %v2656 = vadd.f32 %v2648, 1e-12
    %v2657 = vrsqrt.pop %v2649
    %v2658 = vrsqrt.pop %v2650
    %v2659 = vrsqrt.pop %v2651
    %v2660 = vrsqrt.pop %v2652
    %v2661 = vrsqrt.pop %v2653
    %v2662 = vrsqrt.pop %v2654
    %v2663 = vrsqrt.pop %v2655
    %v2664 = vrsqrt.pop %v2656
    %v2665 = vmul.f32 %v2601, %v2657
    %v2666 = vmul.f32 %v2602, %v2658
    %v2667 = vmul.f32 %v2603, %v2659
    %v2668 = vmul.f32 %v2604, %v2660
    %v2669 = vmul.f32 %v2605, %v2661
    %v2670 = vmul.f32 %v2606, %v2662
    %v2671 = vmul.f32 %v2607, %v2663
    %v2672 = vmul.f32 %v2608, %v2664
    %v2674 = vlaneseq
    %v2675 = vshrl.u32 %v2674, 7
    %v2676 = vsub.s32 0, %v2675
    %v2677 = vrot.slane %v2566, %v2676
    %v2679 = vmul.f32 %v2665, %v2677
    %v2680 = vmul.f32 %v2666, %v2677
    %v2681 = vmul.f32 %v2667, %v2677
    %v2682 = vmul.f32 %v2668, %v2677
    %v2683 = vmul.f32 %v2669, %v2677
    %v2684 = vmul.f32 %v2670, %v2677
    %v2685 = vmul.f32 %v2671, %v2677
    %v2686 = vmul.f32 %v2672, %v2677
    %v2688 = vlaneseq
    %v2689 = vshrl.u32 %v2688, 7
    %v2690 = vsub.s32 0, %v2689
    %v2691 = vrot.slane %v2568, %v2690
    %v2693 = vadd.f32 %v2679, %v2691
    %v2694 = vadd.f32 %v2680, %v2691
    %v2695 = vadd.f32 %v2681, %v2691
    %v2696 = vadd.f32 %v2682, %v2691
    %v2697 = vadd.f32 %v2683, %v2691
    %v2698 = vadd.f32 %v2684, %v2691
    %v2699 = vadd.f32 %v2685, %v2691
    %v2700 = vadd.f32 %v2686, %v2691
    %v2701 = vpack.c.bf16 %v2694, %v2693
    %v2702 = vpack.c.bf16 %v2696, %v2695
    %v2703 = vpack.c.bf16 %v2698, %v2697
    %v2704 = vpack.c.bf16 %v2700, %v2699
    %s2705 = scalar_lea.vmem %s21, 16
    %v2706 = vld [vmem:[%s2705] sm:$0xf]
    %v2707 = vld [vmem:[%s2705 + $0x4] sm:$0xf]
    %v2708 = vld [vmem:[%s2705 + $0x8] sm:$0xf]
    %v2709 = vld [vmem:[%s2705 + $0xc] sm:$0xf]
    %s2710 = scalar_lea.vmem %s23, 1
    %v2711 = vld [vmem:[%s2710] sm:$0x1]
    %v2713 = vlaneseq
    %v2714 = vshrl.u32 %v2713, 7
    %v2715 = vsub.s32 0, %v2714
    %v2716 = vrot.slane %v2711, %v2715
    %v2722 = vunpack.c.l.b16 %v2706
    %v2723 = vunpack.c.l.b16 %v2707
    %v2724 = vunpack.c.l.b16 %v2708
    %v2725 = vunpack.c.l.b16 %v2709
    %v2726 = vpack.c.b16 %v2723, %v2722
    %v2727 = vpack.c.b16 %v2725, %v2724
    %v2731 = vsel %vm157, %v2701, 0
    %v2734 = vsel %vm157, %v2702, 0
    %v2737 = vsel %vm157, %v2703, 0
    %v2740 = vsel %vm157, %v2704, 0
    %2742 = vmatprep.subr.bf16.mxu0 0
    %2743 = vmatpush1.bf16.msra.mxu0 0
    %2744 = vmatprep.subr.bf16.mxu0 0
    %2745 = vmatpush1.bf16.msra.mxu0 0
    %2746 = vmatprep.subr.bf16.mxu0 0
    %2747 = vmatpush1.bf16.msra.mxu0 0
    %2748 = vmatprep.subr.bf16.mxu0 0
    %2749 = vmatpush1.bf16.msra.mxu0 0
    %2750 = vmatprep.subr.bf16.mxu0 0
    %2751 = vmatpush1.bf16.msra.mxu0 0
    %2752 = vmatprep.subr.bf16.mxu0 0
    %2753 = vmatpush1.bf16.msra.mxu0 0
    %2754 = vmatprep.subr.bf16.mxu0 0
    %2755 = vmatpush1.bf16.msra.mxu0 %v2727
    %2756 = vmatprep.subr.bf16.mxu0 0
    %2757 = vmatpush1.bf16.msra.mxu0 %v2726
    %2758 = vmatprep.subr.bf16.mxu0 0
    %2759 = vmatpush2.bf16.msra.mxu0 0
    %2760 = vmatprep.subr.bf16.mxu0 0
    %2761 = vmatpush2.bf16.msra.mxu0 0
    %2762 = vmatprep.subr.bf16.mxu0 0
    %2763 = vmatpush2.bf16.msra.mxu0 0
    %2764 = vmatprep.subr.bf16.mxu0 0
    %2765 = vmatpush2.bf16.msra.mxu0 0
    %2766 = vmatprep.subr.bf16.mxu0 0
    %2767 = vmatpush2.bf16.msra.mxu0 0
    %2768 = vmatprep.subr.bf16.mxu0 0
    %2769 = vmatpush2.bf16.msra.mxu0 0
    %2770 = vmatprep.subr.bf16.mxu0 0
    %2771 = vmatpush2.bf16.msra.mxu0 0
    %2772 = vmatprep.subr.bf16.mxu0 0
    %2773 = vmatpush2.bf16.msra.mxu0 0
    %2774 = vmatprep.mubr.bf16.mxu0 0
    %2775 = vmatmul.mubr.bf16.gmra.mxu0 %v2731
    %v2776 = vpop.f32.mrf.mxu0
    %v2777 = vadd.f32 %v2716, %v2776
    %v2778 = vpop.f32.mrf.mxu0
    %v2779 = vpop.f32.mrf.mxu0
    %v2780 = vadd.f32 %v2716, %v2779
    %v2781 = vpop.f32.mrf.mxu0
    %2782 = vmatprep.mubr.bf16.mxu0 0
    %2783 = vmatmul.mubr.bf16.gmra.mxu0 %v2734
    %v2784 = vpop.f32.mrf.mxu0
    %v2785 = vadd.f32 %v2716, %v2784
    %v2786 = vpop.f32.mrf.mxu0
    %v2787 = vpop.f32.mrf.mxu0
    %v2788 = vadd.f32 %v2716, %v2787
    %v2789 = vpop.f32.mrf.mxu0
    %2790 = vmatprep.mubr.bf16.mxu0 0
    %2791 = vmatmul.mubr.bf16.gmra.mxu0 %v2737
    %v2792 = vpop.f32.mrf.mxu0
    %v2793 = vadd.f32 %v2716, %v2792
    %v2794 = vpop.f32.mrf.mxu0
    %v2795 = vpop.f32.mrf.mxu0
    %v2796 = vadd.f32 %v2716, %v2795
    %v2797 = vpop.f32.mrf.mxu0
    %2798 = vmatprep.mubr.bf16.mxu0 0
    %2799 = vmatmul.mubr.bf16.gmra.mxu0 %v2740
    %v2800 = vpop.f32.mrf.mxu0
    %v2801 = vadd.f32 %v2716, %v2800
    %v2802 = vpop.f32.mrf.mxu0
    %v2803 = vpop.f32.mrf.mxu0
    %v2804 = vadd.f32 %v2716, %v2803
    %v2805 = vpop.f32.mrf.mxu0
    %2806 = vdwg.mxu0
    %v2807 = vmul.f32 %v2777, 0.5
    %v2808 = vmul.f32 %v2780, 0.5
    %v2809 = vmul.f32 %v2785, 0.5
    %v2810 = vmul.f32 %v2788, 0.5
    %v2811 = vmul.f32 %v2793, 0.5
    %v2812 = vmul.f32 %v2796, 0.5
    %v2813 = vmul.f32 %v2801, 0.5
    %v2814 = vmul.f32 %v2804, 0.5
    %v2815 = vmul.f32 %v2777, 0.044715
    %v2816 = vmul.f32 %v2780, 0.044715
    %v2817 = vmul.f32 %v2785, 0.044715
    %v2818 = vmul.f32 %v2788, 0.044715
    %v2819 = vmul.f32 %v2793, 0.044715
    %v2820 = vmul.f32 %v2796, 0.044715
    %v2821 = vmul.f32 %v2801, 0.044715
    %v2822 = vmul.f32 %v2804, 0.044715
    %v2823 = vmul.f32 %v2815, %v2777
    %v2824 = vmul.f32 %v2816, %v2780
    %v2825 = vmul.f32 %v2817, %v2785
    %v2826 = vmul.f32 %v2818, %v2788
    %v2827 = vmul.f32 %v2819, %v2793
    %v2828 = vmul.f32 %v2820, %v2796
    %v2829 = vmul.f32 %v2821, %v2801
    %v2830 = vmul.f32 %v2822, %v2804
    %v2831 = vmul.f32 %v2823, %v2777
    %v2832 = vmul.f32 %v2824, %v2780
    %v2833 = vmul.f32 %v2825, %v2785
    %v2834 = vmul.f32 %v2826, %v2788
    %v2835 = vmul.f32 %v2827, %v2793
    %v2836 = vmul.f32 %v2828, %v2796
    %v2837 = vmul.f32 %v2829, %v2801
    %v2838 = vmul.f32 %v2830, %v2804
    %v2839 = vadd.f32 %v2777, %v2831
    %v2840 = vadd.f32 %v2780, %v2832
    %v2841 = vadd.f32 %v2785, %v2833
    %v2842 = vadd.f32 %v2788, %v2834
    %v2843 = vadd.f32 %v2793, %v2835
    %v2844 = vadd.f32 %v2796, %v2836
    %v2845 = vadd.f32 %v2801, %v2837
    %v2846 = vadd.f32 %v2804, %v2838
    %v2847 = vmul.f32 %v2839, 0.7978846
    %v2848 = vmul.f32 %v2840, 0.7978846
    %v2849 = vmul.f32 %v2841, 0.7978846
    %v2850 = vmul.f32 %v2842, 0.7978846
    %v2851 = vmul.f32 %v2843, 0.7978846
    %v2852 = vmul.f32 %v2844, 0.7978846
    %v2853 = vmul.f32 %v2845, 0.7978846
    %v2854 = vmul.f32 %v2846, 0.7978846
    %v2855 = vtanh.pop %v2847
    %v2856 = vtanh.pop %v2848
    %v2857 = vtanh.pop %v2849
    %v2858 = vtanh.pop %v2850
    %v2859 = vtanh.pop %v2851
    %v2860 = vtanh.pop %v2852
    %v2861 = vtanh.pop %v2853
    %v2862 = vtanh.pop %v2854
    %v2863 = vadd.f32 %v2855, 1.0
    %v2864 = vadd.f32 %v2856, 1.0
    %v2865 = vadd.f32 %v2857, 1.0
    %v2866 = vadd.f32 %v2858, 1.0
    %v2867 = vadd.f32 %v2859, 1.0
    %v2868 = vadd.f32 %v2860, 1.0
    %v2869 = vadd.f32 %v2861, 1.0
    %v2870 = vadd.f32 %v2862, 1.0
    %v2871 = vmul.f32 %v2807, %v2863
    %v2872 = vmul.f32 %v2808, %v2864
    %v2873 = vmul.f32 %v2809, %v2865
    %v2874 = vmul.f32 %v2810, %v2866
    %v2875 = vmul.f32 %v2811, %v2867
    %v2876 = vmul.f32 %v2812, %v2868
    %v2877 = vmul.f32 %v2813, %v2869
    %v2878 = vmul.f32 %v2814, %v2870
    %v2879 = vpack.c.bf16 %v2872, %v2871
    %v2880 = vpack.c.bf16 %v2874, %v2873
    %v2881 = vpack.c.bf16 %v2876, %v2875
    %v2882 = vpack.c.bf16 %v2878, %v2877
    %s2883 = scalar_lea.vmem %s25, 32
    %v2884 = vld [vmem:[%s2883] sm:$0xf]
    %v2885 = vld [vmem:[%s2883 + $0x4] sm:$0xf]
    %v2886 = vld [vmem:[%s2883 + $0x8] sm:$0xf]
    %v2887 = vld [vmem:[%s2883 + $0xc] sm:$0xf]
    %v2888 = vld [vmem:[%s2883 + $0x10] sm:$0xf]
    %v2889 = vld [vmem:[%s2883 + $0x14] sm:$0xf]
    %v2890 = vld [vmem:[%s2883 + $0x18] sm:$0xf]
    %v2891 = vld [vmem:[%s2883 + $0x1c] sm:$0xf]
    %s2892 = scalar_lea.vmem %s27, 1
    %v2893 = vld [vmem:[%s2892] sm:$0x1]
    %v2895 = vlaneseq
    %v2896 = vshrl.u32 %v2895, 7
    %v2897 = vsub.s32 0, %v2896
    %v2898 = vrot.slane %v2893, %v2897
    %v2908 = vunpack.c.l.b16 %v2884
    %v2909 = vunpack.c.l.b16 %v2885
    %v2910 = vunpack.c.l.b16 %v2886
    %v2911 = vunpack.c.l.b16 %v2887
    %v2912 = vunpack.c.l.b16 %v2888
    %v2913 = vunpack.c.l.b16 %v2889
    %v2914 = vunpack.c.l.b16 %v2890
    %v2915 = vunpack.c.l.b16 %v2891
    %v2916 = vpack.c.b16 %v2909, %v2908
    %v2917 = vpack.c.b16 %v2911, %v2910
    %v2918 = vpack.c.b16 %v2913, %v2912
    %v2919 = vpack.c.b16 %v2915, %v2914
    %v2925 = vsel %vm521, %v2879, 0
    %v2928 = vsel %vm521, %v2880, 0
    %v2931 = vsel %vm521, %v2881, 0
    %v2934 = vsel %vm521, %v2882, 0
    %2936 = vmatprep.subr.bf16.mxu0 0
    %2937 = vmatpush1.bf16.msra.mxu0 0
    %2938 = vmatprep.subr.bf16.mxu0 0
    %2939 = vmatpush1.bf16.msra.mxu0 0
    %2940 = vmatprep.subr.bf16.mxu0 0
    %2941 = vmatpush1.bf16.msra.mxu0 0
    %2942 = vmatprep.subr.bf16.mxu0 0
    %2943 = vmatpush1.bf16.msra.mxu0 0
    %2944 = vmatprep.subr.bf16.mxu0 0
    %2945 = vmatpush1.bf16.msra.mxu0 %v2919
    %2946 = vmatprep.subr.bf16.mxu0 0
    %2947 = vmatpush1.bf16.msra.mxu0 %v2918
    %2948 = vmatprep.subr.bf16.mxu0 0
    %2949 = vmatpush1.bf16.msra.mxu0 %v2917
    %2950 = vmatprep.subr.bf16.mxu0 0
    %2951 = vmatpush1.bf16.msra.mxu0 %v2916
    %2952 = vmatprep.subr.bf16.mxu0 0
    %2953 = vmatpush2.bf16.msra.mxu0 0
    %2954 = vmatprep.subr.bf16.mxu0 0
    %2955 = vmatpush2.bf16.msra.mxu0 0
    %2956 = vmatprep.subr.bf16.mxu0 0
    %2957 = vmatpush2.bf16.msra.mxu0 0
    %2958 = vmatprep.subr.bf16.mxu0 0
    %2959 = vmatpush2.bf16.msra.mxu0 0
    %2960 = vmatprep.subr.bf16.mxu0 0
    %2961 = vmatpush2.bf16.msra.mxu0 0
    %2962 = vmatprep.subr.bf16.mxu0 0
    %2963 = vmatpush2.bf16.msra.mxu0 0
    %2964 = vmatprep.subr.bf16.mxu0 0
    %2965 = vmatpush2.bf16.msra.mxu0 0
    %2966 = vmatprep.subr.bf16.mxu0 0
    %2967 = vmatpush2.bf16.msra.mxu0 0
    %2968 = vmatprep.mubr.bf16.mxu0 0
    %2969 = vmatmul.mubr.bf16.gmra.mxu0 %v2925
    %v2970 = vpop.f32.mrf.mxu0
    %v2971 = vadd.f32 %v2898, %v2970
    %v2972 = vpop.f32.mrf.mxu0
    %v2973 = vpop.f32.mrf.mxu0
    %v2974 = vadd.f32 %v2898, %v2973
    %v2975 = vpop.f32.mrf.mxu0
    %2976 = vmatprep.mubr.bf16.mxu0 0
    %2977 = vmatmul.mubr.bf16.gmra.mxu0 %v2928
    %v2978 = vpop.f32.mrf.mxu0
    %v2979 = vadd.f32 %v2898, %v2978
    %v2980 = vpop.f32.mrf.mxu0
    %v2981 = vpop.f32.mrf.mxu0
    %v2982 = vadd.f32 %v2898, %v2981
    %v2983 = vpop.f32.mrf.mxu0
    %2984 = vmatprep.mubr.bf16.mxu0 0
    %2985 = vmatmul.mubr.bf16.gmra.mxu0 %v2931
    %v2986 = vpop.f32.mrf.mxu0
    %v2987 = vadd.f32 %v2898, %v2986
    %v2988 = vpop.f32.mrf.mxu0
    %v2989 = vpop.f32.mrf.mxu0
    %v2990 = vadd.f32 %v2898, %v2989
    %v2991 = vpop.f32.mrf.mxu0
    %2992 = vmatprep.mubr.bf16.mxu0 0
    %2993 = vmatmul.mubr.bf16.gmra.mxu0 %v2934
    %v2994 = vpop.f32.mrf.mxu0
    %v2995 = vadd.f32 %v2898, %v2994
    %v2996 = vpop.f32.mrf.mxu0
    %v2997 = vpop.f32.mrf.mxu0
    %v2998 = vadd.f32 %v2898, %v2997
    %v2999 = vpop.f32.mrf.mxu0
    %3000 = vdwg.mxu0
    %v3001 = vadd.f32 %v2971, %v2693
    %v3002 = vadd.f32 %v2974, %v2694
    %v3003 = vadd.f32 %v2979, %v2695
    %v3004 = vadd.f32 %v2982, %v2696
    %v3005 = vadd.f32 %v2987, %v2697
    %v3006 = vadd.f32 %v2990, %v2698
    %v3007 = vadd.f32 %v2995, %v2699
    %v3008 = vadd.f32 %v2998, %v2700
    %s3009 = scalar_lea.vmem %s29, 1
    %v3010 = vld [vmem:[%s3009] sm:$0x1]
    %s3011 = scalar_lea.vmem %s31, 1
    %v3012 = vld [vmem:[%s3011] sm:$0x1]
    %v3013 = vsel %vm157, %v3001, 0.0
    %3014 = vadd.xlane.f32.xlu0 %v3013
    %v3015 = vpop.xlane.xlu0 %3014
    %v3016 = vsel %vm157, %v3002, 0.0
    %3017 = vadd.xlane.f32.xlu0 %v3016
    %v3018 = vpop.xlane.xlu0 %3017
    %v3019 = vsel %vm157, %v3003, 0.0
    %3020 = vadd.xlane.f32.xlu0 %v3019
    %v3021 = vpop.xlane.xlu0 %3020
    %v3022 = vsel %vm157, %v3004, 0.0
    %3023 = vadd.xlane.f32.xlu0 %v3022
    %v3024 = vpop.xlane.xlu0 %3023
    %v3025 = vsel %vm157, %v3005, 0.0
    %3026 = vadd.xlane.f32.xlu0 %v3025
    %v3027 = vpop.xlane.xlu0 %3026
    %v3028 = vsel %vm157, %v3006, 0.0
    %3029 = vadd.xlane.f32.xlu0 %v3028
    %v3030 = vpop.xlane.xlu0 %3029
    %v3031 = vsel %vm157, %v3007, 0.0
    %3032 = vadd.xlane.f32.xlu0 %v3031
    %v3033 = vpop.xlane.xlu0 %3032
    %v3034 = vsel %vm157, %v3008, 0.0
    %3035 = vadd.xlane.f32.xlu0 %v3034
    %v3036 = vpop.xlane.xlu0 %3035
    %v3037 = vmul.f32 %v3015, %v182
    %v3038 = vmul.f32 %v3018, %v182
    %v3039 = vmul.f32 %v3021, %v182
    %v3040 = vmul.f32 %v3024, %v182
    %v3041 = vmul.f32 %v3027, %v182
    %v3042 = vmul.f32 %v3030, %v182
    %v3043 = vmul.f32 %v3033, %v182
    %v3044 = vmul.f32 %v3036, %v182
    %v3045 = vsub.f32 %v3001, %v3037
    %v3046 = vsub.f32 %v3002, %v3038
    %v3047 = vsub.f32 %v3003, %v3039
    %v3048 = vsub.f32 %v3004, %v3040
    %v3049 = vsub.f32 %v3005, %v3041
    %v3050 = vsub.f32 %v3006, %v3042
    %v3051 = vsub.f32 %v3007, %v3043
    %v3052 = vsub.f32 %v3008, %v3044
    %v3053 = vmul.f32 %v3045, %v3045
    %v3054 = vmul.f32 %v3046, %v3046
    %v3055 = vmul.f32 %v3047, %v3047
    %v3056 = vmul.f32 %v3048, %v3048
    %v3057 = vmul.f32 %v3049, %v3049
    %v3058 = vmul.f32 %v3050, %v3050
    %v3059 = vmul.f32 %v3051, %v3051
    %v3060 = vmul.f32 %v3052, %v3052
    %v3061 = vsel %vm157, %v3053, 0.0
    %3062 = vadd.xlane.f32.xlu0 %v3061
    %v3063 = vpop.xlane.xlu0 %3062
    %v3064 = vsel %vm157, %v3054, 0.0
    %3065 = vadd.xlane.f32.xlu0 %v3064
    %v3066 = vpop.xlane.xlu0 %3065
    %v3067 = vsel %vm157, %v3055, 0.0
    %3068 = vadd.xlane.f32.xlu0 %v3067
    %v3069 = vpop.xlane.xlu0 %3068
    %v3070 = vsel %vm157, %v3056, 0.0
    %3071 = vadd.xlane.f32.xlu0 %v3070
    %v3072 = vpop.xlane.xlu0 %3071
    %v3073 = vsel %vm157, %v3057, 0.0
    %3074 = vadd.xlane.f32.xlu0 %v3073
    %v3075 = vpop.xlane.xlu0 %3074
    %v3076 = vsel %vm157, %v3058, 0.0
    %3077 = vadd.xlane.f32.xlu0 %v3076
    %v3078 = vpop.xlane.xlu0 %3077
    %v3079 = vsel %vm157, %v3059, 0.0
    %3080 = vadd.xlane.f32.xlu0 %v3079
    %v3081 = vpop.xlane.xlu0 %3080
    %v3082 = vsel %vm157, %v3060, 0.0
    %3083 = vadd.xlane.f32.xlu0 %v3082
    %v3084 = vpop.xlane.xlu0 %3083
    %v3085 = vmul.f32 %v3063, %v182
    %v3086 = vmul.f32 %v3066, %v182
    %v3087 = vmul.f32 %v3069, %v182
    %v3088 = vmul.f32 %v3072, %v182
    %v3089 = vmul.f32 %v3075, %v182
    %v3090 = vmul.f32 %v3078, %v182
    %v3091 = vmul.f32 %v3081, %v182
    %v3092 = vmul.f32 %v3084, %v182
    %v3093 = vadd.f32 %v3085, 1e-12
    %v3094 = vadd.f32 %v3086, 1e-12
    %v3095 = vadd.f32 %v3087, 1e-12
    %v3096 = vadd.f32 %v3088, 1e-12
    %v3097 = vadd.f32 %v3089, 1e-12
    %v3098 = vadd.f32 %v3090, 1e-12
    %v3099 = vadd.f32 %v3091, 1e-12
    %v3100 = vadd.f32 %v3092, 1e-12
    %v3101 = vrsqrt.pop %v3093
    %v3102 = vrsqrt.pop %v3094
    %v3103 = vrsqrt.pop %v3095
    %v3104 = vrsqrt.pop %v3096
    %v3105 = vrsqrt.pop %v3097
    %v3106 = vrsqrt.pop %v3098
    %v3107 = vrsqrt.pop %v3099
    %v3108 = vrsqrt.pop %v3100
    %v3109 = vmul.f32 %v3045, %v3101
    %v3110 = vmul.f32 %v3046, %v3102
    %v3111 = vmul.f32 %v3047, %v3103
    %v3112 = vmul.f32 %v3048, %v3104
    %v3113 = vmul.f32 %v3049, %v3105
    %v3114 = vmul.f32 %v3050, %v3106
    %v3115 = vmul.f32 %v3051, %v3107
    %v3116 = vmul.f32 %v3052, %v3108
    %v3118 = vlaneseq
    %v3119 = vshrl.u32 %v3118, 7
    %v3120 = vsub.s32 0, %v3119
    %v3121 = vrot.slane %v3010, %v3120
    %v3123 = vmul.f32 %v3109, %v3121
    %v3124 = vmul.f32 %v3110, %v3121
    %v3125 = vmul.f32 %v3111, %v3121
    %v3126 = vmul.f32 %v3112, %v3121
    %v3127 = vmul.f32 %v3113, %v3121
    %v3128 = vmul.f32 %v3114, %v3121
    %v3129 = vmul.f32 %v3115, %v3121
    %v3130 = vmul.f32 %v3116, %v3121
    %v3132 = vlaneseq
    %v3133 = vshrl.u32 %v3132, 7
    %v3134 = vsub.s32 0, %v3133
    %v3135 = vrot.slane %v3012, %v3134
    %v3137 = vadd.f32 %v3123, %v3135
    %v3138 = vadd.f32 %v3124, %v3135
    %v3139 = vadd.f32 %v3125, %v3135
    %v3140 = vadd.f32 %v3126, %v3135
    %v3141 = vadd.f32 %v3127, %v3135
    %v3142 = vadd.f32 %v3128, %v3135
    %v3143 = vadd.f32 %v3129, %v3135
    %v3144 = vadd.f32 %v3130, %v3135
    %v3145 = vld [vmem:[%s33] sm:$0xff]
    %v3147 = vsel %vm521, %v3145, 0
    %3149 = vmatprep.subr.mxu0 0.0
    %3150 = vmatpush1.msra.mxu0 0.0
    %3151 = vmatprep.subr.mxu0 0.0
    %3152 = vmatpush1.msra.mxu0 0.0
    %3153 = vmatprep.subr.mxu0 0.0
    %3154 = vmatpush1.msra.mxu0 0.0
    %3155 = vmatprep.subr.mxu0 0.0
    %3156 = vmatpush1.msra.mxu0 0.0
    %3157 = vmatprep.subr.mxu0 0.0
    %3158 = vmatpush1.msra.mxu0 0.0
    %3159 = vmatprep.subr.mxu0 0.0
    %3160 = vmatpush1.msra.mxu0 0.0
    %3161 = vmatprep.subr.mxu0 0.0
    %3162 = vmatpush1.msra.mxu0 0.0
    %3163 = vmatprep.subr.mxu0 0.0
    %3164 = vmatpush1.msra.mxu0 0.0
    %3165 = vmatprep.subr.mxu0 0.0
    %3166 = vmatpush1.msra.mxu0 %v3144
    %3167 = vmatprep.subr.mxu0 0.0
    %3168 = vmatpush1.msra.mxu0 %v3143
    %3169 = vmatprep.subr.mxu0 0.0
    %3170 = vmatpush1.msra.mxu0 %v3142
    %3171 = vmatprep.subr.mxu0 0.0
    %3172 = vmatpush1.msra.mxu0 %v3141
    %3173 = vmatprep.subr.mxu0 0.0
    %3174 = vmatpush1.msra.mxu0 %v3140
    %3175 = vmatprep.subr.mxu0 0.0
    %3176 = vmatpush1.msra.mxu0 %v3139
    %3177 = vmatprep.subr.mxu0 0.0
    %3178 = vmatpush1.msra.mxu0 %v3138
    %3179 = vmatprep.subr.mxu0 0.0
    %3180 = vmatpush1.msra.mxu0 %v3137
    %3181 = vmatprep.subr.mxu0 0.0
    %3182 = vmatpush2.msra.mxu0 0.0
    %3183 = vmatprep.subr.mxu0 0.0
    %3184 = vmatpush2.msra.mxu0 0.0
    %3185 = vmatprep.subr.mxu0 0.0
    %3186 = vmatpush2.msra.mxu0 0.0
    %3187 = vmatprep.subr.mxu0 0.0
    %3188 = vmatpush2.msra.mxu0 0.0
    %3189 = vmatprep.subr.mxu0 0.0
    %3190 = vmatpush2.msra.mxu0 0.0
    %3191 = vmatprep.subr.mxu0 0.0
    %3192 = vmatpush2.msra.mxu0 0.0
    %3193 = vmatprep.subr.mxu0 0.0
    %3194 = vmatpush2.msra.mxu0 0.0
    %3195 = vmatprep.subr.mxu0 0.0
    %3196 = vmatpush2.msra.mxu0 0.0
    %3197 = vmatprep.subr.mxu0 0.0
    %3198 = vmatpush2.msra.mxu0 0.0
    %3199 = vmatprep.subr.mxu0 0.0
    %3200 = vmatpush2.msra.mxu0 0.0
    %3201 = vmatprep.subr.mxu0 0.0
    %3202 = vmatpush2.msra.mxu0 0.0
    %3203 = vmatprep.subr.mxu0 0.0
    %3204 = vmatpush2.msra.mxu0 0.0
    %3205 = vmatprep.subr.mxu0 0.0
    %3206 = vmatpush2.msra.mxu0 0.0
    %3207 = vmatprep.subr.mxu0 0.0
    %3208 = vmatpush2.msra.mxu0 0.0
    %3209 = vmatprep.subr.mxu0 0.0
    %3210 = vmatpush2.msra.mxu0 0.0
    %3211 = vmatprep.subr.mxu0 0.0
    %3212 = vmatpush2.msra.mxu0 0.0
    %3213 = vmatprep.mubr.f32.mxu0 0.0
    %3214 = vmatmul.mubr.f32.gmra.mxu0 %v3147
    %v3215 = vpop.f32.mrf.mxu0
    %v3216 = vadd.f32 0.0, %v3215
    %v3217 = vpop.f32.mrf.mxu0
    %3218 = vdwg.mxu0
    %v3219 = vpack.c.bf16 %v3216, %v3216
    %v3220 = vld [vmem:[%s35] sm:$0xf]
    %v3221 = vld [vmem:[%s35 + $0x4] sm:$0xf]
    %v3222 = vld [vmem:[%s35 + $0x8] sm:$0xf]
    %v3223 = vld [vmem:[%s35 + $0xc] sm:$0xf]
    %v3224 = vld [vmem:[%s37] sm:$0x1]
    %v3226 = vlaneseq
    %v3227 = vshrl.u32 %v3226, 7
    %v3228 = vsub.s32 0, %v3227
    %v3229 = vrot.slane %v3224, %v3228
    %v3235 = vunpack.c.l.b16 %v3220
    %v3236 = vunpack.c.l.b16 %v3221
    %v3237 = vunpack.c.l.b16 %v3222
    %v3238 = vunpack.c.l.b16 %v3223
    %v3239 = vpack.c.b16 %v3236, %v3235
    %v3240 = vpack.c.b16 %v3238, %v3237
    %v3244 = vsel %vm157, %v3219, 0
    %3246 = vmatprep.subr.bf16.mxu0 0
    %3247 = vmatpush1.bf16.msra.mxu0 0
    %3248 = vmatprep.subr.bf16.mxu0 0
    %3249 = vmatpush1.bf16.msra.mxu0 0
    %3250 = vmatprep.subr.bf16.mxu0 0
    %3251 = vmatpush1.bf16.msra.mxu0 0
    %3252 = vmatprep.subr.bf16.mxu0 0
    %3253 = vmatpush1.bf16.msra.mxu0 0
    %3254 = vmatprep.subr.bf16.mxu0 0
    %3255 = vmatpush1.bf16.msra.mxu0 0
    %3256 = vmatprep.subr.bf16.mxu0 0
    %3257 = vmatpush1.bf16.msra.mxu0 0
    %3258 = vmatprep.subr.bf16.mxu0 0
    %3259 = vmatpush1.bf16.msra.mxu0 %v3240
    %3260 = vmatprep.subr.bf16.mxu0 0
    %3261 = vmatpush1.bf16.msra.mxu0 %v3239
    %3262 = vmatprep.subr.bf16.mxu0 0
    %3263 = vmatpush2.bf16.msra.mxu0 0
    %3264 = vmatprep.subr.bf16.mxu0 0
    %3265 = vmatpush2.bf16.msra.mxu0 0
    %3266 = vmatprep.subr.bf16.mxu0 0
    %3267 = vmatpush2.bf16.msra.mxu0 0
    %3268 = vmatprep.subr.bf16.mxu0 0
    %3269 = vmatpush2.bf16.msra.mxu0 0
    %3270 = vmatprep.subr.bf16.mxu0 0
    %3271 = vmatpush2.bf16.msra.mxu0 0
    %3272 = vmatprep.subr.bf16.mxu0 0
    %3273 = vmatpush2.bf16.msra.mxu0 0
    %3274 = vmatprep.subr.bf16.mxu0 0
    %3275 = vmatpush2.bf16.msra.mxu0 0
    %3276 = vmatprep.subr.bf16.mxu0 0
    %3277 = vmatpush2.bf16.msra.mxu0 0
    %3278 = vmatprep.mubr.bf16.mxu0 0
    %3279 = vmatmul.mubr.bf16.gmra.mxu0 %v3244
    %v3280 = vpop.f32.mrf.mxu0
    %v3281 = vadd.f32 %v3229, %v3280
    %v3282 = vpop.f32.mrf.mxu0
    %v3283 = vpop.f32.mrf.mxu0
    %v3284 = vpop.f32.mrf.mxu0
    %3285 = vdwg.mxu0
    %v3286 = vtanh.pop %v3281
    %v3287 = vld [vmem:[#allocation2] sm:$0xff]
    %v3288 = vpack.c.bf16 %v3286, %v3286
    %v3289 = vld [vmem:[%s41] sm:$0xf]
    %v3290 = vld [vmem:[%s41 + $0x4] sm:$0xf]
    %v3291 = vld [vmem:[%s41 + $0x8] sm:$0xf]
    %v3292 = vld [vmem:[%s41 + $0xc] sm:$0xf]
    %v3297 = vunpack.c.l.b16 %v3289
    %v3298 = vunpack.c.l.b16 %v3290
    %v3299 = vunpack.c.l.b16 %v3291
    %v3300 = vunpack.c.l.b16 %v3292
    %v3301 = vpack.c.b16 %v3298, %v3297
    %v3302 = vpack.c.b16 %v3300, %v3299
    %v3306 = vsel %vm157, %v3288, 0
    %3308 = vmatprep.subr.bf16.mxu0 0
    %3309 = vmatpush1.bf16.msra.mxu0 0
    %3310 = vmatprep.subr.bf16.mxu0 0
    %3311 = vmatpush1.bf16.msra.mxu0 0
    %3312 = vmatprep.subr.bf16.mxu0 0
    %3313 = vmatpush1.bf16.msra.mxu0 0
    %3314 = vmatprep.subr.bf16.mxu0 0
    %3315 = vmatpush1.bf16.msra.mxu0 0
    %3316 = vmatprep.subr.bf16.mxu0 0
    %3317 = vmatpush1.bf16.msra.mxu0 0
    %3318 = vmatprep.subr.bf16.mxu0 0
    %3319 = vmatpush1.bf16.msra.mxu0 0
    %3320 = vmatprep.subr.bf16.mxu0 0
    %3321 = vmatpush1.bf16.msra.mxu0 %v3302
    %3322 = vmatprep.subr.bf16.mxu0 0
    %3323 = vmatpush1.bf16.msra.mxu0 %v3301
    %3324 = vmatprep.subr.bf16.mxu0 0
    %3325 = vmatpush2.bf16.msra.mxu0 0
    %3326 = vmatprep.subr.bf16.mxu0 0
    %3327 = vmatpush2.bf16.msra.mxu0 0
    %3328 = vmatprep.subr.bf16.mxu0 0
    %3329 = vmatpush2.bf16.msra.mxu0 0
    %3330 = vmatprep.subr.bf16.mxu0 0
    %3331 = vmatpush2.bf16.msra.mxu0 0
    %3332 = vmatprep.subr.bf16.mxu0 0
    %3333 = vmatpush2.bf16.msra.mxu0 0
    %3334 = vmatprep.subr.bf16.mxu0 0
    %3335 = vmatpush2.bf16.msra.mxu0 0
    %3336 = vmatprep.subr.bf16.mxu0 0
    %3337 = vmatpush2.bf16.msra.mxu0 0
    %3338 = vmatprep.subr.bf16.mxu0 0
    %3339 = vmatpush2.bf16.msra.mxu0 0
    %3340 = vmatprep.mubr.bf16.mxu0 0
    %3341 = vmatmul.mubr.bf16.gmra.mxu0 %v3306
    %v3342 = vpop.f32.mrf.mxu0
    %v3343 = vadd.f32 0.0, %v3342
    %v3344 = vpop.f32.mrf.mxu0
    %v3345 = vpop.f32.mrf.mxu0
    %v3346 = vpop.f32.mrf.mxu0
    %3347 = vdwg.mxu0
    %vm3348 = vcmask 64512
    %v3350 = vsel %vm3348, %v3287, 0
    %3352 = vmatprep.subr.mxu0 0.0
    %3353 = vmatpush1.msra.mxu0 0.0
    %3354 = vmatprep.subr.mxu0 0.0
    %3355 = vmatpush1.msra.mxu0 0.0
    %3356 = vmatprep.subr.mxu0 0.0
    %3357 = vmatpush1.msra.mxu0 0.0
    %3358 = vmatprep.subr.mxu0 0.0
    %3359 = vmatpush1.msra.mxu0 0.0
    %3360 = vmatprep.subr.mxu0 0.0
    %3361 = vmatpush1.msra.mxu0 0.0
    %3362 = vmatprep.subr.mxu0 0.0
    %3363 = vmatpush1.msra.mxu0 0.0
    %3364 = vmatprep.subr.mxu0 0.0
    %3365 = vmatpush1.msra.mxu0 0.0
    %3366 = vmatprep.subr.mxu0 0.0
    %3367 = vmatpush1.msra.mxu0 0.0
    %3368 = vmatprep.subr.mxu0 0.0
    %3369 = vmatpush1.msra.mxu0 0.0
    %3370 = vmatprep.subr.mxu0 0.0
    %3371 = vmatpush1.msra.mxu0 0.0
    %3372 = vmatprep.subr.mxu0 0.0
    %3373 = vmatpush1.msra.mxu0 0.0
    %3374 = vmatprep.subr.mxu0 0.0
    %3375 = vmatpush1.msra.mxu0 0.0
    %3376 = vmatprep.subr.mxu0 0.0
    %3377 = vmatpush1.msra.mxu0 0.0
    %3378 = vmatprep.subr.mxu0 0.0
    %3379 = vmatpush1.msra.mxu0 0.0
    %3380 = vmatprep.subr.mxu0 0.0
    %3381 = vmatpush1.msra.mxu0 0.0
    %3382 = vmatprep.subr.mxu0 0.0
    %3383 = vmatpush1.msra.mxu0 %v3343
    %3384 = vmatprep.subr.mxu0 0.0
    %3385 = vmatpush2.msra.mxu0 0.0
    %3386 = vmatprep.subr.mxu0 0.0
    %3387 = vmatpush2.msra.mxu0 0.0
    %3388 = vmatprep.subr.mxu0 0.0
    %3389 = vmatpush2.msra.mxu0 0.0
    %3390 = vmatprep.subr.mxu0 0.0
    %3391 = vmatpush2.msra.mxu0 0.0
    %3392 = vmatprep.subr.mxu0 0.0
    %3393 = vmatpush2.msra.mxu0 0.0
    %3394 = vmatprep.subr.mxu0 0.0
    %3395 = vmatpush2.msra.mxu0 0.0
    %3396 = vmatprep.subr.mxu0 0.0
    %3397 = vmatpush2.msra.mxu0 0.0
    %3398 = vmatprep.subr.mxu0 0.0
    %3399 = vmatpush2.msra.mxu0 0.0
    %3400 = vmatprep.subr.mxu0 0.0
    %3401 = vmatpush2.msra.mxu0 0.0
    %3402 = vmatprep.subr.mxu0 0.0
    %3403 = vmatpush2.msra.mxu0 0.0
    %3404 = vmatprep.subr.mxu0 0.0
    %3405 = vmatpush2.msra.mxu0 0.0
    %3406 = vmatprep.subr.mxu0 0.0
    %3407 = vmatpush2.msra.mxu0 0.0
    %3408 = vmatprep.subr.mxu0 0.0
    %3409 = vmatpush2.msra.mxu0 0.0
    %3410 = vmatprep.subr.mxu0 0.0
    %3411 = vmatpush2.msra.mxu0 0.0
    %3412 = vmatprep.subr.mxu0 0.0
    %3413 = vmatpush2.msra.mxu0 0.0
    %3414 = vmatprep.subr.mxu0 0.0
    %3415 = vmatpush2.msra.mxu0 0.0
    %3416 = vmatprep.mubr.f32.mxu0 0.0
    %3417 = vmatmul.mubr.f32.gmra.mxu0 %v3350
    %v3418 = vpop.f32.mrf.mxu0
    %v3419 = vadd.f32 0.0, %v3418
    %v3420 = vpop.f32.mrf.mxu0
    %3421 = vdwg.mxu0
    %v3422 = vld [vmem:[%s43] sm:$0x1]
    %v3424 = vlaneseq
    %v3425 = vshrl.u32 %v3424, 7
    %v3426 = vsub.s32 0, %v3425
    %v3427 = vrot.slane %v3422, %v3426
    %v3429 = vmul.f32 %v3419, %v3427
    %v3430 = vld [vmem:[%s45] sm:$0x1]
    %v3432 = vlaneseq
    %v3433 = vshrl.u32 %v3432, 7
    %v3434 = vsub.s32 0, %v3433
    %v3435 = vrot.slane %v3430, %v3434
    %v3437 = vadd.f32 %v3429, %v3435
    %v3438 = vmul.f32 %v3437, 0.5
    %v3439 = vmul.f32 %v3437, 0.044715
    %v3440 = vmul.f32 %v3439, %v3437
    %v3441 = vmul.f32 %v3440, %v3437
    %v3442 = vadd.f32 %v3437, %v3441
    %v3443 = vmul.f32 %v3442, 0.7978846
    %v3444 = vtanh.pop %v3443
    %v3445 = vadd.f32 %v3444, 1.0
    %v3446 = vmul.f32 %v3438, %v3445
    %v3447 = vpack.c.bf16 %v3446, %v3446
    %v3448 = vld [vmem:[%s47] sm:$0xf]
    %v3449 = vld [vmem:[%s47 + $0x4] sm:$0xf]
    %v3450 = vld [vmem:[%s47 + $0x8] sm:$0xf]
    %v3451 = vld [vmem:[%s47 + $0xc] sm:$0xf]
    %v3452 = vld [vmem:[%s47 + $0x10] sm:$0xf]
    %v3453 = vld [vmem:[%s47 + $0x14] sm:$0xf]
    %v3454 = vld [vmem:[%s47 + $0x18] sm:$0xf]
    %v3455 = vld [vmem:[%s47 + $0x1c] sm:$0xf]
    %v3456 = vld [vmem:[%s47 + $0x20] sm:$0xf]
    %v3457 = vld [vmem:[%s47 + $0x24] sm:$0xf]
    %v3458 = vld [vmem:[%s47 + $0x28] sm:$0xf]
    %v3459 = vld [vmem:[%s47 + $0x2c] sm:$0xf]
    %v3460 = vld [vmem:[%s47 + $0x30] sm:$0xf]
    %v3461 = vld [vmem:[%s47 + $0x34] sm:$0xf]
    %v3462 = vld [vmem:[%s47 + $0x38] sm:$0xf]
    %v3463 = vld [vmem:[%s47 + $0x3c] sm:$0xf]
    %v3480 = vunpack.c.l.b16 %v3448
    %v3481 = vunpack.c.l.b16 %v3449
    %v3482 = vunpack.c.l.b16 %v3450
    %v3483 = vunpack.c.l.b16 %v3451
    %v3484 = vunpack.c.l.b16 %v3452
    %v3485 = vunpack.c.l.b16 %v3453
    %v3486 = vunpack.c.l.b16 %v3454
    %v3487 = vunpack.c.l.b16 %v3455
    %v3488 = vunpack.c.l.b16 %v3456
    %v3489 = vunpack.c.l.b16 %v3457
    %v3490 = vunpack.c.l.b16 %v3458
    %v3491 = vunpack.c.l.b16 %v3459
    %v3492 = vunpack.c.l.b16 %v3460
    %v3493 = vunpack.c.l.b16 %v3461
    %v3494 = vunpack.c.l.b16 %v3462
    %v3495 = vunpack.c.l.b16 %v3463
    %v3496 = vpack.c.b16 %v3481, %v3480
    %v3497 = vpack.c.b16 %v3483, %v3482
    %v3498 = vpack.c.b16 %v3485, %v3484
    %v3499 = vpack.c.b16 %v3487, %v3486
    %v3500 = vpack.c.b16 %v3489, %v3488
    %v3501 = vpack.c.b16 %v3491, %v3490
    %v3502 = vpack.c.b16 %v3493, %v3492
    %v3503 = vpack.c.b16 %v3495, %v3494
    %3512 = vmatprep.subr.bf16.mxu0 0
    %3513 = vmatpush1.bf16.msra.mxu0 %v3503
    %3514 = vmatprep.subr.bf16.mxu0 0
    %3515 = vmatpush1.bf16.msra.mxu0 %v3502
    %3516 = vmatprep.subr.bf16.mxu0 0
    %3517 = vmatpush1.bf16.msra.mxu0 %v3501
    %3518 = vmatprep.subr.bf16.mxu0 0
    %3519 = vmatpush1.bf16.msra.mxu0 %v3500
    %3520 = vmatprep.subr.bf16.mxu0 0
    %3521 = vmatpush1.bf16.msra.mxu0 %v3499
    %3522 = vmatprep.subr.bf16.mxu0 0
    %3523 = vmatpush1.bf16.msra.mxu0 %v3498
    %3524 = vmatprep.subr.bf16.mxu0 0
    %3525 = vmatpush1.bf16.msra.mxu0 %v3497
    %3526 = vmatprep.subr.bf16.mxu0 0
    %3527 = vmatpush1.bf16.msra.mxu0 %v3496
    %3528 = vmatprep.subr.bf16.mxu0 0
    %3529 = vmatpush2.bf16.msra.mxu0 0
    %3530 = vmatprep.subr.bf16.mxu0 0
    %3531 = vmatpush2.bf16.msra.mxu0 0
    %3532 = vmatprep.subr.bf16.mxu0 0
    %3533 = vmatpush2.bf16.msra.mxu0 0
    %3534 = vmatprep.subr.bf16.mxu0 0
    %3535 = vmatpush2.bf16.msra.mxu0 0
    %3536 = vmatprep.subr.bf16.mxu0 0
    %3537 = vmatpush2.bf16.msra.mxu0 0
    %3538 = vmatprep.subr.bf16.mxu0 0
    %3539 = vmatpush2.bf16.msra.mxu0 0
    %3540 = vmatprep.subr.bf16.mxu0 0
    %3541 = vmatpush2.bf16.msra.mxu0 0
    %3542 = vmatprep.subr.bf16.mxu0 0
    %3543 = vmatpush2.bf16.msra.mxu0 0
    %3544 = vmatprep.mubr.bf16.mxu0 0
    %3545 = vmatmul.mubr.bf16.gmra.mxu0 %v3447
    %v3546 = vpop.f32.mrf.mxu0
    %v3547 = vadd.f32 0.0, %v3546
    %v3548 = vpop.f32.mrf.mxu0
    %v3549 = vpop.f32.mrf.mxu0
    %v3550 = vpop.f32.mrf.mxu0
    %3551 = vdwg.mxu0
    %3552 = vmatprep.subr.mxu0 0.0
    %3553 = vmatpush1.msra.mxu0 0.0
    %3554 = vmatprep.subr.mxu0 0.0
    %3555 = vmatpush1.msra.mxu0 0.0
    %3556 = vmatprep.subr.mxu0 0.0
    %3557 = vmatpush1.msra.mxu0 0.0
    %3558 = vmatprep.subr.mxu0 0.0
    %3559 = vmatpush1.msra.mxu0 0.0
    %3560 = vmatprep.subr.mxu0 0.0
    %3561 = vmatpush1.msra.mxu0 0.0
    %3562 = vmatprep.subr.mxu0 0.0
    %3563 = vmatpush1.msra.mxu0 0.0
    %3564 = vmatprep.subr.mxu0 0.0
    %3565 = vmatpush1.msra.mxu0 0.0
    %3566 = vmatprep.subr.mxu0 0.0
    %3567 = vmatpush1.msra.mxu0 0.0
    %3568 = vmatprep.subr.mxu0 0.0
    %3569 = vmatpush1.msra.mxu0 0.0
    %3570 = vmatprep.subr.mxu0 0.0
    %3571 = vmatpush1.msra.mxu0 0.0
    %3572 = vmatprep.subr.mxu0 0.0
    %3573 = vmatpush1.msra.mxu0 0.0
    %3574 = vmatprep.subr.mxu0 0.0
    %3575 = vmatpush1.msra.mxu0 0.0
    %3576 = vmatprep.subr.mxu0 0.0
    %3577 = vmatpush1.msra.mxu0 0.0
    %3578 = vmatprep.subr.mxu0 0.0
    %3579 = vmatpush1.msra.mxu0 0.0
    %3580 = vmatprep.subr.mxu0 0.0
    %3581 = vmatpush1.msra.mxu0 0.0
    %3582 = vmatprep.subr.mxu0 0.0
    %3583 = vmatpush1.msra.mxu0 %v3547
    %3584 = vmatprep.subr.mxu0 0.0
    %3585 = vmatpush2.msra.mxu0 0.0
    %3586 = vmatprep.subr.mxu0 0.0
    %3587 = vmatpush2.msra.mxu0 0.0
    %3588 = vmatprep.subr.mxu0 0.0
    %3589 = vmatpush2.msra.mxu0 0.0
    %3590 = vmatprep.subr.mxu0 0.0
    %3591 = vmatpush2.msra.mxu0 0.0
    %3592 = vmatprep.subr.mxu0 0.0
    %3593 = vmatpush2.msra.mxu0 0.0
    %3594 = vmatprep.subr.mxu0 0.0
    %3595 = vmatpush2.msra.mxu0 0.0
    %3596 = vmatprep.subr.mxu0 0.0
    %3597 = vmatpush2.msra.mxu0 0.0
    %3598 = vmatprep.subr.mxu0 0.0
    %3599 = vmatpush2.msra.mxu0 0.0
    %3600 = vmatprep.subr.mxu0 0.0
    %3601 = vmatpush2.msra.mxu0 0.0
    %3602 = vmatprep.subr.mxu0 0.0
    %3603 = vmatpush2.msra.mxu0 0.0
    %3604 = vmatprep.subr.mxu0 0.0
    %3605 = vmatpush2.msra.mxu0 0.0
    %3606 = vmatprep.subr.mxu0 0.0
    %3607 = vmatpush2.msra.mxu0 0.0
    %3608 = vmatprep.subr.mxu0 0.0
    %3609 = vmatpush2.msra.mxu0 0.0
    %3610 = vmatprep.subr.mxu0 0.0
    %3611 = vmatpush2.msra.mxu0 0.0
    %3612 = vmatprep.subr.mxu0 0.0
    %3613 = vmatpush2.msra.mxu0 0.0
    %3614 = vmatprep.subr.mxu0 0.0
    %3615 = vmatpush2.msra.mxu0 0.0
    %3616 = vmatprep.mubr.f32.mxu0 0.0
    %3617 = vmatmul.mubr.f32.gmra.mxu0 %v3350
    %v3618 = vpop.f32.mrf.mxu0
    %v3619 = vadd.f32 0.0, %v3618
    %v3620 = vpop.f32.mrf.mxu0
    %3621 = vdwg.mxu0
    %v3622 = vld [vmem:[%s49] sm:$0x1]
    %v3624 = vlaneseq
    %v3625 = vshrl.u32 %v3624, 7
    %v3626 = vsub.s32 0, %v3625
    %v3627 = vrot.slane %v3622, %v3626
    %v3629 = vmul.f32 %v3619, %v3627
    %v3630 = vld [vmem:[%s51] sm:$0x1]
    %v3632 = vlaneseq
    %v3633 = vshrl.u32 %v3632, 7
    %v3634 = vsub.s32 0, %v3633
    %v3635 = vrot.slane %v3630, %v3634
    %v3637 = vadd.f32 %v3629, %v3635
    %v3638 = vmul.f32 %v3637, 0.5
    %v3639 = vmul.f32 %v3637, 0.044715
    %v3640 = vmul.f32 %v3639, %v3637
    %v3641 = vmul.f32 %v3640, %v3637
    %v3642 = vadd.f32 %v3637, %v3641
    %v3643 = vmul.f32 %v3642, 0.7978846
    %v3644 = vtanh.pop %v3643
    %v3645 = vadd.f32 %v3644, 1.0
    %v3646 = vmul.f32 %v3638, %v3645
    %v3647 = vld [vmem:[%s53] sm:$0xff]
    %v3648 = vld [vmem:[%s53 + $0x8] sm:$0xf]
    %v3650 = vsel %vm3348, %v3647, 0
    %v3653 = vsel %vm3348, %v3648, 0
    %3655 = vmatprep.subr.mxu0 0.0
    %3656 = vmatpush1.msra.mxu0 0.0
    %3657 = vmatprep.subr.mxu0 0.0
    %3658 = vmatpush1.msra.mxu0 0.0
    %3659 = vmatprep.subr.mxu0 0.0
    %3660 = vmatpush1.msra.mxu0 0.0
    %3661 = vmatprep.subr.mxu0 0.0
    %3662 = vmatpush1.msra.mxu0 0.0
    %3663 = vmatprep.subr.mxu0 0.0
    %3664 = vmatpush1.msra.mxu0 0.0
    %3665 = vmatprep.subr.mxu0 0.0
    %3666 = vmatpush1.msra.mxu0 0.0
    %3667 = vmatprep.subr.mxu0 0.0
    %3668 = vmatpush1.msra.mxu0 0.0
    %3669 = vmatprep.subr.mxu0 0.0
    %3670 = vmatpush1.msra.mxu0 0.0
    %3671 = vmatprep.subr.mxu0 0.0
    %3672 = vmatpush1.msra.mxu0 0.0
    %3673 = vmatprep.subr.mxu0 0.0
    %3674 = vmatpush1.msra.mxu0 0.0
    %3675 = vmatprep.subr.mxu0 0.0
    %3676 = vmatpush1.msra.mxu0 0.0
    %3677 = vmatprep.subr.mxu0 0.0
    %3678 = vmatpush1.msra.mxu0 0.0
    %3679 = vmatprep.subr.mxu0 0.0
    %3680 = vmatpush1.msra.mxu0 0.0
    %3681 = vmatprep.subr.mxu0 0.0
    %3682 = vmatpush1.msra.mxu0 0.0
    %3683 = vmatprep.subr.mxu0 0.0
    %3684 = vmatpush1.msra.mxu0 0.0
    %3685 = vmatprep.subr.mxu0 0.0
    %3686 = vmatpush1.msra.mxu0 %v3646
    %3687 = vmatprep.subr.mxu0 0.0
    %3688 = vmatpush2.msra.mxu0 0.0
    %3689 = vmatprep.subr.mxu0 0.0
    %3690 = vmatpush2.msra.mxu0 0.0
    %3691 = vmatprep.subr.mxu0 0.0
    %3692 = vmatpush2.msra.mxu0 0.0
    %3693 = vmatprep.subr.mxu0 0.0
    %3694 = vmatpush2.msra.mxu0 0.0
    %3695 = vmatprep.subr.mxu0 0.0
    %3696 = vmatpush2.msra.mxu0 0.0
    %3697 = vmatprep.subr.mxu0 0.0
    %3698 = vmatpush2.msra.mxu0 0.0
    %3699 = vmatprep.subr.mxu0 0.0
    %3700 = vmatpush2.msra.mxu0 0.0
    %3701 = vmatprep.subr.mxu0 0.0
    %3702 = vmatpush2.msra.mxu0 0.0
    %3703 = vmatprep.subr.mxu0 0.0
    %3704 = vmatpush2.msra.mxu0 0.0
    %3705 = vmatprep.subr.mxu0 0.0
    %3706 = vmatpush2.msra.mxu0 0.0
    %3707 = vmatprep.subr.mxu0 0.0
    %3708 = vmatpush2.msra.mxu0 0.0
    %3709 = vmatprep.subr.mxu0 0.0
    %3710 = vmatpush2.msra.mxu0 0.0
    %3711 = vmatprep.subr.mxu0 0.0
    %3712 = vmatpush2.msra.mxu0 0.0
    %3713 = vmatprep.subr.mxu0 0.0
    %3714 = vmatpush2.msra.mxu0 0.0
    %3715 = vmatprep.subr.mxu0 0.0
    %3716 = vmatpush2.msra.mxu0 0.0
    %3717 = vmatprep.subr.mxu0 0.0
    %3718 = vmatpush2.msra.mxu0 0.0
    %3719 = vmatprep.mubr.f32.mxu0 0.0
    %3720 = vmatmul.mubr.f32.gmra.mxu0 %v3650
    %v3721 = vpop.f32.mrf.mxu0
    %v3722 = vadd.f32 0.0, %v3721
    %v3723 = vpop.f32.mrf.mxu0
    %3724 = vmatprep.mubr.f32.mxu0 0.0
    %3725 = vmatmul.mubr.f32.gmra.mxu0 %v3653
    %v3726 = vpop.f32.mrf.mxu0
    %v3727 = vadd.f32 0.0, %v3726
    %v3728 = vpop.f32.mrf.mxu0
    %3729 = vdwg.mxu0
    %v3730 = vld [vmem:[%s55] sm:$0xff]
    %v3731 = vld [vmem:[%s55 + $0x8] sm:$0xf]
    %v3733 = vsel %vm3348, %v3730, 0
    %v3736 = vsel %vm3348, %v3731, 0
    %3738 = vmatprep.subr.mxu0 0.0
    %3739 = vmatpush1.msra.mxu0 0.0
    %3740 = vmatprep.subr.mxu0 0.0
    %3741 = vmatpush1.msra.mxu0 0.0
    %3742 = vmatprep.subr.mxu0 0.0
    %3743 = vmatpush1.msra.mxu0 0.0
    %3744 = vmatprep.subr.mxu0 0.0
    %3745 = vmatpush1.msra.mxu0 0.0
    %3746 = vmatprep.subr.mxu0 0.0
    %3747 = vmatpush1.msra.mxu0 0.0
    %3748 = vmatprep.subr.mxu0 0.0
    %3749 = vmatpush1.msra.mxu0 0.0
    %3750 = vmatprep.subr.mxu0 0.0
    %3751 = vmatpush1.msra.mxu0 0.0
    %3752 = vmatprep.subr.mxu0 0.0
    %3753 = vmatpush1.msra.mxu0 0.0
    %3754 = vmatprep.subr.mxu0 0.0
    %3755 = vmatpush1.msra.mxu0 0.0
    %3756 = vmatprep.subr.mxu0 0.0
    %3757 = vmatpush1.msra.mxu0 0.0
    %3758 = vmatprep.subr.mxu0 0.0
    %3759 = vmatpush1.msra.mxu0 0.0
    %3760 = vmatprep.subr.mxu0 0.0
    %3761 = vmatpush1.msra.mxu0 0.0
    %3762 = vmatprep.subr.mxu0 0.0
    %3763 = vmatpush1.msra.mxu0 0.0
    %3764 = vmatprep.subr.mxu0 0.0
    %3765 = vmatpush1.msra.mxu0 0.0
    %3766 = vmatprep.subr.mxu0 0.0
    %3767 = vmatpush1.msra.mxu0 0.0
    %3768 = vmatprep.subr.mxu0 0.0
    %3769 = vmatpush1.msra.mxu0 %v3646
    %3770 = vmatprep.subr.mxu0 0.0
    %3771 = vmatpush2.msra.mxu0 0.0
    %3772 = vmatprep.subr.mxu0 0.0
    %3773 = vmatpush2.msra.mxu0 0.0
    %3774 = vmatprep.subr.mxu0 0.0
    %3775 = vmatpush2.msra.mxu0 0.0
    %3776 = vmatprep.subr.mxu0 0.0
    %3777 = vmatpush2.msra.mxu0 0.0
    %3778 = vmatprep.subr.mxu0 0.0
    %3779 = vmatpush2.msra.mxu0 0.0
    %3780 = vmatprep.subr.mxu0 0.0
    %3781 = vmatpush2.msra.mxu0 0.0
    %3782 = vmatprep.subr.mxu0 0.0
    %3783 = vmatpush2.msra.mxu0 0.0
    %3784 = vmatprep.subr.mxu0 0.0
    %3785 = vmatpush2.msra.mxu0 0.0
    %3786 = vmatprep.subr.mxu0 0.0
    %3787 = vmatpush2.msra.mxu0 0.0
    %3788 = vmatprep.subr.mxu0 0.0
    %3789 = vmatpush2.msra.mxu0 0.0
    %3790 = vmatprep.subr.mxu0 0.0
    %3791 = vmatpush2.msra.mxu0 0.0
    %3792 = vmatprep.subr.mxu0 0.0
    %3793 = vmatpush2.msra.mxu0 0.0
    %3794 = vmatprep.subr.mxu0 0.0
    %3795 = vmatpush2.msra.mxu0 0.0
    %3796 = vmatprep.subr.mxu0 0.0
    %3797 = vmatpush2.msra.mxu0 0.0
    %3798 = vmatprep.subr.mxu0 0.0
    %3799 = vmatpush2.msra.mxu0 0.0
    %3800 = vmatprep.subr.mxu0 0.0
    %3801 = vmatpush2.msra.mxu0 0.0
    %3802 = vmatprep.mubr.f32.mxu0 0.0
    %3803 = vmatmul.mubr.f32.gmra.mxu0 %v3733
    %v3804 = vpop.f32.mrf.mxu0
    %v3805 = vadd.f32 0.0, %v3804
    %v3806 = vpop.f32.mrf.mxu0
    %3807 = vmatprep.mubr.f32.mxu0 0.0
    %3808 = vmatmul.mubr.f32.gmra.mxu0 %v3736
    %v3809 = vpop.f32.mrf.mxu0
    %v3810 = vadd.f32 0.0, %v3809
    %v3811 = vpop.f32.mrf.mxu0
    %3812 = vdwg.mxu0
    %3815 = vrot.lane.b32.xlu0 %v3805, 64
    %v3816 = vpop.permute.xlu0 %3815
    %3817 = vrot.lane.b32.xlu0 %v3810, 64
    %v3818 = vpop.permute.xlu0 %3817
    %v3821 = vsel %vm521, %v3722, %v3816
    %v3822 = vsel %vm521, %v3727, %v3818
    %v3823 = vpack.c.bf16 %v3822, %v3821
    %v3824 = vld [vmem:[%s57] sm:$0xf]
    %v3825 = vld [vmem:[%s57 + $0x4] sm:$0xf]
    %v3826 = vld [vmem:[%s57 + $0x8] sm:$0xf]
    %v3827 = vld [vmem:[%s57 + $0xc] sm:$0xf]
    %v3828 = vld [vmem:[%s57 + $0x10] sm:$0xf]
    %v3829 = vld [vmem:[%s57 + $0x14] sm:$0xf]
    %v3830 = vld [vmem:[%s57 + $0x18] sm:$0xf]
    %v3831 = vld [vmem:[%s57 + $0x1c] sm:$0xf]
    %v3832 = vld [vmem:[%s57 + $0x20] sm:$0xf]
    %v3833 = vld [vmem:[%s57 + $0x24] sm:$0xf]
    %v3834 = vld [vmem:[%s57 + $0x28] sm:$0xf]
    %v3835 = vld [vmem:[%s57 + $0x2c] sm:$0xf]
    %v3836 = vld [vmem:[%s57 + $0x30] sm:$0xf]
    %v3837 = vld [vmem:[%s57 + $0x34] sm:$0xf]
    %v3838 = vld [vmem:[%s57 + $0x38] sm:$0xf]
    %v3839 = vld [vmem:[%s57 + $0x3c] sm:$0xf]
    %v3840 = vld [vmem:[%s59] sm:$0x1]
    %v3842 = vlaneseq
    %v3843 = vshrl.u32 %v3842, 7
    %v3844 = vsub.s32 0, %v3843
    %v3845 = vrot.slane %v3840, %v3844
    %v3863 = vunpack.c.l.b16 %v3824
    %v3864 = vunpack.c.l.b16 %v3825
    %v3865 = vunpack.c.l.b16 %v3826
    %v3866 = vunpack.c.l.b16 %v3827
    %v3867 = vunpack.c.l.b16 %v3828
    %v3868 = vunpack.c.l.b16 %v3829
    %v3869 = vunpack.c.l.b16 %v3830
    %v3870 = vunpack.c.l.b16 %v3831
    %v3871 = vunpack.c.l.b16 %v3832
    %v3872 = vunpack.c.l.b16 %v3833
    %v3873 = vunpack.c.l.b16 %v3834
    %v3874 = vunpack.c.l.b16 %v3835
    %v3875 = vunpack.c.l.b16 %v3836
    %v3876 = vunpack.c.l.b16 %v3837
    %v3877 = vunpack.c.l.b16 %v3838
    %v3878 = vunpack.c.l.b16 %v3839
    %v3879 = vpack.c.b16 %v3864, %v3863
    %v3880 = vpack.c.b16 %v3866, %v3865
    %v3881 = vpack.c.b16 %v3868, %v3867
    %v3882 = vpack.c.b16 %v3870, %v3869
    %v3883 = vpack.c.b16 %v3872, %v3871
    %v3884 = vpack.c.b16 %v3874, %v3873
    %v3885 = vpack.c.b16 %v3876, %v3875
    %v3886 = vpack.c.b16 %v3878, %v3877
    %3895 = vmatprep.subr.bf16.mxu0 0
    %3896 = vmatpush1.bf16.msra.mxu0 %v3886
    %3897 = vmatprep.subr.bf16.mxu0 0
    %3898 = vmatpush1.bf16.msra.mxu0 %v3885
    %3899 = vmatprep.subr.bf16.mxu0 0
    %3900 = vmatpush1.bf16.msra.mxu0 %v3884
    %3901 = vmatprep.subr.bf16.mxu0 0
    %3902 = vmatpush1.bf16.msra.mxu0 %v3883
    %3903 = vmatprep.subr.bf16.mxu0 0
    %3904 = vmatpush1.bf16.msra.mxu0 %v3882
    %3905 = vmatprep.subr.bf16.mxu0 0
    %3906 = vmatpush1.bf16.msra.mxu0 %v3881
    %3907 = vmatprep.subr.bf16.mxu0 0
    %3908 = vmatpush1.bf16.msra.mxu0 %v3880
    %3909 = vmatprep.subr.bf16.mxu0 0
    %3910 = vmatpush1.bf16.msra.mxu0 %v3879
    %3911 = vmatprep.subr.bf16.mxu0 0
    %3912 = vmatpush2.bf16.msra.mxu0 0
    %3913 = vmatprep.subr.bf16.mxu0 0
    %3914 = vmatpush2.bf16.msra.mxu0 0
    %3915 = vmatprep.subr.bf16.mxu0 0
    %3916 = vmatpush2.bf16.msra.mxu0 0
    %3917 = vmatprep.subr.bf16.mxu0 0
    %3918 = vmatpush2.bf16.msra.mxu0 0
    %3919 = vmatprep.subr.bf16.mxu0 0
    %3920 = vmatpush2.bf16.msra.mxu0 0
    %3921 = vmatprep.subr.bf16.mxu0 0
    %3922 = vmatpush2.bf16.msra.mxu0 0
    %3923 = vmatprep.subr.bf16.mxu0 0
    %3924 = vmatpush2.bf16.msra.mxu0 0
    %3925 = vmatprep.subr.bf16.mxu0 0
    %3926 = vmatpush2.bf16.msra.mxu0 0
    %3927 = vmatprep.mubr.bf16.mxu0 0
    %3928 = vmatmul.mubr.bf16.gmra.mxu0 %v3823
    %v3929 = vpop.f32.mrf.mxu0
    %v3930 = vadd.f32 %v3845, %v3929
    %v3931 = vpop.f32.mrf.mxu0
    %v3932 = vpop.f32.mrf.mxu0
    %v3933 = vadd.f32 %v3845, %v3932
    %v3934 = vpop.f32.mrf.mxu0
    %3935 = vdwg.mxu0
    %v3936 = vlaneseq
    %v3937 = vand.u32 %v3936, 127
    %vm3938 = vcmask 15360
    %v3939 = vsel %vm3938, %v3930, -inf
    %3940 = vmax.xlane.f32.xlu0 %v3939
    %v3941 = vpop.xlane.xlu0 %3940
    %vm3942 = vcmask 11264
    %v3943 = vsel %vm3942, %v3933, -inf
    %3944 = vmax.xlane.f32.xlu0 %v3943
    %v3945 = vpop.xlane.xlu0 %3944
    %vm3946 = vcmp.ge.f32.partialorder %v3930, %v3941
    %vm3947 = vcmp.ge.f32.partialorder %v3933, %v3945
    %v3948 = vsel %vm3946, %v3937, 2
    %v3949 = vsel %vm3947, %v3937, 2
    %v3950 = vsel %vm3938, %v3948, 2147483647
    %v3951 = vand.u32 %v3950, 65535
    %v3952 = vshra.s32 %v3950, 16
    %v3953 = vcvt.s32.f32 %v3951
    %v3954 = vcvt.s32.f32 %v3952
    %3955 = vmin.xlane.f32.xlu0 %v3954
    %v3956 = vpop.xlane.xlu0 %3955
    %vm3957 = vcmp.eq.f32.partialorder %v3954, %v3956
    %v3958 = vsel %vm3957, %v3953, inf
    %3959 = vmin.xlane.f32.xlu0 %v3958
    %v3960 = vpop.xlane.xlu0 %3959
    %v3961 = vcvt.f32.s32 %v3960
    %v3962 = vcvt.f32.s32 %v3956
    %v3963 = vshll.u32 %v3962, 16
    %v3964 = vadd.s32 %v3963, %v3961
    %v3965 = vsel %vm3942, %v3949, 2147483647
    %v3966 = vand.u32 %v3965, 65535
    %v3967 = vshra.s32 %v3965, 16
    %v3968 = vcvt.s32.f32 %v3966
    %v3969 = vcvt.s32.f32 %v3967
    %3970 = vmin.xlane.f32.xlu0 %v3969
    %v3971 = vpop.xlane.xlu0 %3970
    %vm3972 = vcmp.eq.f32.partialorder %v3969, %v3971
    %v3973 = vsel %vm3972, %v3968, inf
    %3974 = vmin.xlane.f32.xlu0 %v3973
    %v3975 = vpop.xlane.xlu0 %3974
    %v3976 = vcvt.f32.s32 %v3975
    %v3977 = vcvt.f32.s32 %v3971
    %v3978 = vshll.u32 %v3977, 16
    %v3979 = vadd.s32 %v3978, %v3976
    %vm3980 = vcmask 7168
    %3981 = vst.msk [vmem:[%s65] sm:$0xff] %vm3980, %v3964
    %vm3982 = vcmask 3072
    %3983 = vst.msk [vmem:[%s65 + $0x8] sm:$0xf] %vm3982, %v3979
    %v3984 = vsub.f32 %v3930, %v3941
    %v3985 = vsub.f32 %v3933, %v3945
    %v3986 = vmul.f32 %v3984, 1.442695
    %v3987 = vpow.pop %v3986
    %v3988 = vmul.f32 %v3985, 1.442695
    %v3989 = vpow.pop %v3988
    %v3990 = vsel %vm3938, %v3987, 0.0
    %3991 = vadd.xlane.f32.xlu0 %v3990
    %v3992 = vpop.xlane.xlu0 %3991
    %v3993 = vsel %vm3942, %v3989, 0.0
    %3994 = vadd.xlane.f32.xlu0 %v3993
    %v3995 = vpop.xlane.xlu0 %3994
    %v3996 = vlog2.pop %v3992
    %v3997 = vmul.f32 %v3996, 0.6931472
    %v3998 = vlog2.pop %v3995
    %v3999 = vmul.f32 %v3998, 0.6931472
    %v4000 = vadd.f32 %v3997, %v3941
    %v4001 = vadd.f32 %v3999, %v3945
    %v4002 = vld [vmem:[%s61] sm:$0xff]
    %v4003 = vld [vmem:[%s61 + $0x8] sm:$0xf]
    %v4004 = vmul.f32 %v3930, %v4002
    %v4005 = vmul.f32 %v3933, %v4003
    %v4006 = vsel %vm3938, %v4004, 0.0
    %4007 = vadd.xlane.f32.xlu0 %v4006
    %v4008 = vpop.xlane.xlu0 %4007
    %v4009 = vsel %vm3942, %v4005, 0.0
    %4010 = vadd.xlane.f32.xlu0 %v4009
    %v4011 = vpop.xlane.xlu0 %4010
    %v4012 = vsub.f32 %v4000, %v4008
    %v4013 = vsub.f32 %v4001, %v4011
    %v4014 = vsel %vm3980, %v4012, 0.0
    %v4015 = vsel %vm3982, %v4013, 0.0
    %v4016 = vadd.f32 %v4014, %v4015
    %4017 = vadd.xlane.f32.xlu0 %v4016
    %v4018 = vpop.xlane.xlu0 %4017
    %v4019 = vrot.slane %v4018, 4
    %v4020 = vadd.f32 %v4018, %v4019
    %v4021 = vrot.slane %v4020, 2
    %v4022 = vadd.f32 %v4020, %v4021
    %v4023 = vrot.slane %v4022, 1
    %v4024 = vadd.f32 %v4022, %v4023
    %s4025 = vtos %v4024
    %s4026 = smul.f32 %s4025, 0.083333336
    %v4027 = vstv %s4026
    %vm4028 = vcmask 0
    %4029 = vst.msk [vmem:[#allocation5] sm:$0x1] %vm4028, %v4027
    // Predicated region
    $region130: #{forward.1} parent=1 // pred_check
      _
    $region131: #{forward.1} parent=1 // pred_check_branch
      %4031 = sbr.rel (0) target = $region133
    $region132: #{forward.1} parent=1 // pred_region
      %s4033 = ssub.s32 16, 16
      %4034 = vsyncadd [#allocation4], %s4033
      %s4036 = sshll.u32 [#allocation5], 4
      %s4037 = int_to_ptr.vmem [resolvable:$true] %s4036
      %4039 = dma.vmem_to_hbm [thread:$0]  %s4037, 16, %s63, [#allocation4]
    $region133: #{forward.1} parent=1 // pred_fallthru
      _
    // Predicated region
    $region134: #{forward.1} parent=1 // pred_check
      _
    $region135: #{forward.1} parent=1 // pred_check_branch
      %4041 = sbr.rel (0) target = $region137
    $region136: #{forward.1} parent=1 // pred_region
      _
    $region137: #{forward.1} parent=1 // pred_fallthru
      _
    // Predicated region
    $region138: #{forward.1} parent=1 // pred_check
      _
    $region139: #{forward.1} parent=1 // pred_check_branch
      %4043 = sbr.rel (0) target = $region141
    $region140: #{forward.1} parent=1 // pred_region
      %4044 = dma.done [#allocation4], 16
    $region141: #{forward.1} parent=1 // pred_fallthru
      _
    // Predicated region
    $region142: #{forward.1} parent=1 // pred_check
      _
    $region143: #{forward.1} parent=1 // pred_check_branch
      %4046 = sbr.rel (0) target = $region145
    $region144: #{forward.1} parent=1 // pred_region
      _
    $region145: #{forward.1} parent=1 // pred_fallthru
      _
    %4047 = vsyncpa [#allocation3], 1
    %4048 = vsyncpa [#allocation4], 1

</llo_original>
